<compile_context>
chip_gen: v5e
topology: v5e:2x2
jax: 0.10.0
libtpu: 0.0.40
codegen_flags: <defaults>
</compile_context>

<pallas_src>
import functools
import math

import jax
import jax.numpy as jnp
from jax import lax
from jax.experimental import pallas as pl
from jax.experimental.pallas import tpu as pltpu

EPS = 1e-5
_INV_SQRT2 = 0.7071067811865476


def _cdiv(a, b):
    return (a + b - 1) // b


def _round_up(a, b):
    return _cdiv(a, b) * b


def _layernorm(v):
    # Single-pass LayerNorm with weight=1, bias=0 (as set by _init_weights).
    mu = jnp.mean(v, axis=-1, keepdims=True)
    mu2 = jnp.mean(v * v, axis=-1, keepdims=True)
    var = jnp.maximum(mu2 - mu * mu, 0.0)
    return (v - mu) * lax.rsqrt(var + EPS)


def _gelu(v, approximate):
    if approximate:
        # tanh approximation -> EUP slot (frees the 4-wide VALU on v5e).
        # Documented numerics deviation from PyTorch's exact nn.GELU().
        return jax.nn.gelu(v, approximate=True)
    # Exact erf form (PyTorch default), with precomputed 1/sqrt(2) multiply.
    return 0.5 * v * (1.0 + lax.erf(v * jnp.float32(_INV_SQRT2)))


def ffn_kernel(x_ref, w1_ref, b1_ref, w2_ref, b2_ref, w3_ref, b3_ref,
               gate_ref, o_ref, *, approx_gelu=False):
    gate = gate_ref[0]                       # hoisted scalar read (SMEM)

    x = x_ref[...].astype(jnp.float32)
    y = _layernorm(x)                        # norm1 (f32 stats)
    identity = y

    # Matmuls run in bf16 on the MXU with f32 accumulation; LN/GELU in f32.
    h = jnp.dot(y.astype(jnp.bfloat16), w1_ref[...],
                preferred_element_type=jnp.float32) + b1_ref[...]
    h = _gelu(_layernorm(h), approx_gelu)

    h = jnp.dot(h.astype(jnp.bfloat16), w2_ref[...],
                preferred_element_type=jnp.float32) + b2_ref[...]
    h = _gelu(_layernorm(h), approx_gelu)

    out = jnp.dot(h.astype(jnp.bfloat16), w3_ref[...],
                  preferred_element_type=jnp.float32) + b3_ref[...]

    # Partial last row tile (ragged M): out-of-bounds rows compute garbage
    # that the masked output store discards; no cross-row ops exist.
    o_ref[...] = (identity + gate * out).astype(o_ref.dtype)


def _vmem_capacity_bytes(default=128 << 20):
    """Per-TensorCore VMEM capacity; 128 MiB (v5e/v6e) or 64 MiB (v7x)."""
    try:
        info = pltpu.get_tpu_info()
    except (RuntimeError, ValueError, NotImplementedError):
        return default
    return int(getattr(info, "vmem_capacity_bytes", default))


def _choose_tm(M, tm_req, per_tile_bytes, tile_budget):
    tm = max(8, min(_round_up(tm_req, 8), _round_up(M, 8)))
    # Shrink until the activation working set fits the VMEM budget.
    while tm > 8 and per_tile_bytes(tm) > tile_budget:
        tm = max(8, _round_up(tm // 2, 8))
    # Prefer >=2 (ideally even) grid steps so both of v7x's TensorCores get
    # work under dimension_semantics=("parallel",); harmless on 1-TC chips.
    if M > 8:
        steps = _cdiv(M, tm)
        if steps == 1:
            tm = _round_up(_cdiv(M, 2), 8)
        elif steps % 2 == 1:
            tm_even = _round_up(_cdiv(M, steps + 1), 8)
            if _cdiv(M, tm_even) % 2 == 0:
                tm = tm_even
    return tm


def ffn_forward(x, params, *, tm=512, approx_gelu=False):
    """x: (B, N, D_in) float32. Returns (B, N, D_in)."""
    w1, b1, w2, b2, w3, b3, gate = params
    B, N, D_in = x.shape
    H = w1.shape[1]
    D_out = w3.shape[1]
    assert D_out == D_in, "out_features defaults to in_features"

    M = B * N
    x2d = x.reshape(M, D_in)

    weight_bytes = sum(int(a.size) * a.dtype.itemsize
                       for a in (w1, b1, w2, b2, w3, b3))

    # Generation-aware VMEM budget with headroom for compiler scratch/sems.
    vmem_cap = _vmem_capacity_bytes()
    headroom = max(12 << 20, vmem_cap // 8)
    budget_cap = max(32 << 20, vmem_cap - headroom)

    if 2 * weight_bytes + (4 << 20) > budget_cap:
        # TODO(synk): K/N-tiled variant (grid axis over H + VMEM accumulator,
        #             pl.when init/finalize, "arbitrary" semantics) for
        #             weights that exceed the per-generation VMEM budget.
        raise NotImplementedError(
            f"weights ({weight_bytes / 2**20:.1f} MiB) do not fit the "
            f"{budget_cap / 2**20:.0f} MiB VMEM budget; hidden-dim tiling "
            "is not implemented")

    def per_tile_bytes(t):
        io = 2 * 2 * t * D_in * x.dtype.itemsize   # double-buffered x/out tiles
        work = 8 * t * max(H, D_in) * 4            # f32 intermediates headroom
        return io + work

    tile_budget = budget_cap - 2 * weight_bytes - (4 << 20)
    tm = _choose_tm(M, tm, per_tile_bytes, tile_budget)
    grid = (_cdiv(M, tm),)

    vmem_need = 2 * weight_bytes + per_tile_bytes(tm) + (8 << 20)
    vmem_limit = int(min(max(vmem_need, 32 << 20), budget_cap))

    kernel = functools.partial(ffn_kernel, approx_gelu=approx_gelu)

    def build(weight_pipeline_mode):
        def wspec(shape):
            idx = lambda i: (0,) * len(shape)            # constant block index
            if weight_pipeline_mode is None:
                return pl.BlockSpec(shape, idx)
            return pl.BlockSpec(shape, idx, pipeline_mode=weight_pipeline_mode)

        return pl.pallas_call(
            kernel,
            out_shape=jax.ShapeDtypeStruct((M, D_in), x.dtype),
            grid=grid,
            in_specs=[
                pl.BlockSpec((tm, D_in), lambda i: (i, 0)),         # x rows
                wspec((D_in, H)),                                   # W1 (bf16)
                wspec((1, H)),                                      # b1
                wspec((H, H)),                                      # W2 (bf16)
                wspec((1, H)),                                      # b2
                wspec((H, D_out)),                                  # W3 (bf16)
                wspec((1, D_out)),                                  # b3
                pl.BlockSpec(memory_space=pltpu.MemorySpace.SMEM),  # gate
            ],
            out_specs=pl.BlockSpec((tm, D_in), lambda i: (i, 0)),
            compiler_params=pltpu.CompilerParams(
                dimension_semantics=("parallel",),
                vmem_limit_bytes=vmem_limit),
        )

    args = (x2d, w1, b1, w2, b2, w3, b3, gate)
    try:
        # Weights never change block index: request single buffering (saves a
        # full weight copy of VMEM; matters most on v7x's 64 MiB/TC).
        out2d = build(pl.Buffered(1))(*args)
    except (TypeError, ValueError, NotImplementedError,
            pltpu.LoweringException):
        # Narrow fallback only for "Buffered(1) unsupported"-style errors;
        # genuine VMEM OOM / runtime failures still surface to the caller.
        out2d = build(None)(*args)

    return out2d.reshape(B, N, D_in)


def init_params(key, in_features, hidden_features, out_features):
    """Deterministic synthetic init matching the module's shapes.
    Linear weights ~ kaiming_normal(fan_out, relu): std = sqrt(2/out_features),
    stored transposed (in, out) and cast to bf16 for the MXU. Biases zero,
    LayerNorm weight=1/bias=0 (folded into the kernel), gate=1."""
    k1, k2, k3 = jax.random.split(key, 3)
    w1 = (jax.random.normal(k1, (in_features, hidden_features), jnp.float32)
          * math.sqrt(2.0 / hidden_features)).astype(jnp.bfloat16)
    w2 = (jax.random.normal(k2, (hidden_features, hidden_features), jnp.float32)
          * math.sqrt(2.0 / hidden_features)).astype(jnp.bfloat16)
    w3 = (jax.random.normal(k3, (hidden_features, out_features), jnp.float32)
          * math.sqrt(2.0 / out_features)).astype(jnp.bfloat16)
    b1 = jnp.zeros((1, hidden_features), jnp.float32)
    b2 = jnp.zeros((1, hidden_features), jnp.float32)
    b3 = jnp.zeros((1, out_features), jnp.float32)
    gate = jnp.ones((1,), jnp.float32)
    return (w1, b1, w2, b2, w3, b3, gate)


def ffn_reference(x, params, *, approx_gelu=False):
    """Plain-JAX reference (eval-mode dropout = identity), mirroring the
    kernel's bf16-matmul / f32-accumulate numerics."""
    w1, b1, w2, b2, w3, b3, gate = params
    y = _layernorm(x.astype(jnp.float32))
    identity = y
    h = jnp.dot(y.astype(jnp.bfloat16), w1,
                preferred_element_type=jnp.float32) + b1
    h = _gelu(_layernorm(h), approx_gelu)
    h = jnp.dot(h.astype(jnp.bfloat16), w2,
                preferred_element_type=jnp.float32) + b2
    h = _gelu(_layernorm(h), approx_gelu)
    out = jnp.dot(h.astype(jnp.bfloat16), w3,
                  preferred_element_type=jnp.float32) + b3
    return identity + gate[0] * out


if __name__ == "__main__":
    key = jax.random.PRNGKey(0)
    kx, kp, kx2 = jax.random.split(key, 3)

    # Small, module-consistent shapes: seq divisible by 4 (torch split),
    # lane-dense feature dims, hidden_features = module default (256).
    D_in, H = 128, 256          # in_features, hidden_features
    B, N = 2, 64                # batch, seq
    x = jax.random.normal(kx, (B, N, D_in), jnp.float32)
    params = init_params(kp, D_in, H, D_in)

    out = jax.block_until_ready(ffn_forward(x, params))
    ref = ffn_reference(x, params)
    assert out.shape == x.shape
    assert jnp.allclose(out, ref, atol=2e-3, rtol=2e-3), "mismatch vs reference"

    # Ragged row count (exercises the masked partial last row tile).
    x2 = jax.random.normal(kx2, (2, 12, D_in), jnp.float32)
    out2 = jax.block_until_ready(ffn_forward(x2, params))
    ref2 = ffn_reference(x2, params)
    assert out2.shape == x2.shape
    assert jnp.allclose(out2, ref2, atol=2e-3, rtol=2e-3), "mismatch (ragged)"

    print("KERNEL_OK")
</pallas_src>

<mosaic_0001>
module attributes {stable_mosaic.version = 11 : i64} {
  func.func @ffn_kernel(%arg0: i32, %arg1: memref<64x128xf32, #tpu.memory_space<vmem>>, %arg2: memref<128x256xbf16, #tpu.memory_space<vmem>>, %arg3: memref<1x256xf32, #tpu.memory_space<vmem>>, %arg4: memref<256x256xbf16, #tpu.memory_space<vmem>>, %arg5: memref<1x256xf32, #tpu.memory_space<vmem>>, %arg6: memref<256x128xbf16, #tpu.memory_space<vmem>>, %arg7: memref<1x128xf32, #tpu.memory_space<vmem>>, %arg8: memref<1xf32, #tpu.memory_space<smem>>, %arg9: memref<64x128xf32, #tpu.memory_space<vmem>>) attributes {dimension_semantics = [#tpu.dimension_semantics<parallel>], iteration_bounds = array<i64: 2>, scalar_prefetch = 0 : i64, scratch_operands = 0 : i64, tpu.core_type = #tpu.core_type<tc>, window_params = [{transform_indices = @transform_0, window_bounds = array<i64: 64, 128>}, {pipeline_mode = #tpu.pipeline_mode<synchronous>, transform_indices = @transform_1, window_bounds = array<i64: 128, 256>}, {pipeline_mode = #tpu.pipeline_mode<synchronous>, transform_indices = @transform_2, window_bounds = array<i64: 1, 256>}, {pipeline_mode = #tpu.pipeline_mode<synchronous>, transform_indices = @transform_3, window_bounds = array<i64: 256, 256>}, {pipeline_mode = #tpu.pipeline_mode<synchronous>, transform_indices = @transform_4, window_bounds = array<i64: 1, 256>}, {pipeline_mode = #tpu.pipeline_mode<synchronous>, transform_indices = @transform_5, window_bounds = array<i64: 256, 128>}, {pipeline_mode = #tpu.pipeline_mode<synchronous>, transform_indices = @transform_6, window_bounds = array<i64: 1, 128>}, {transform_indices = @transform_7, window_bounds = array<i64: 1>}, {transform_indices = @transform_8, window_bounds = array<i64: 64, 128>}]} {
    %c0 = arith.constant 0 : index
    %0 = memref.load %arg8[%c0] : memref<1xf32, #tpu.memory_space<smem>>
    %c0_0 = arith.constant 0 : index
    %c0_1 = arith.constant 0 : index
    %1 = vector.load %arg1[%c0_0, %c0_1] : memref<64x128xf32, #tpu.memory_space<vmem>>, vector<64x128xf32>
    %cst = arith.constant dense<0.000000e+00> : vector<64xf32>
    %2 = vector.multi_reduction <add>, %1, %cst [1] : vector<64x128xf32> to vector<64xf32>
    %3 = vector.shape_cast %2 : vector<64xf32> to vector<64x1xf32>
    %cst_2 = arith.constant 1.280000e+02 : f32
    %4 = vector.broadcast %cst_2 : f32 to vector<64x1xf32>
    %5 = arith.divf %3, %4 : vector<64x1xf32>
    %6 = arith.mulf %1, %1 : vector<64x128xf32>
    %cst_3 = arith.constant dense<0.000000e+00> : vector<64xf32>
    %7 = vector.multi_reduction <add>, %6, %cst_3 [1] : vector<64x128xf32> to vector<64xf32>
    %8 = vector.shape_cast %7 : vector<64xf32> to vector<64x1xf32>
    %cst_4 = arith.constant 1.280000e+02 : f32
    %9 = vector.broadcast %cst_4 : f32 to vector<64x1xf32>
    %10 = arith.divf %8, %9 : vector<64x1xf32>
    %11 = arith.mulf %5, %5 : vector<64x1xf32>
    %12 = arith.subf %10, %11 : vector<64x1xf32>
    %cst_5 = arith.constant 0.000000e+00 : f32
    %13 = vector.broadcast %cst_5 : f32 to vector<64x1xf32>
    %14 = arith.maximumf %12, %13 : vector<64x1xf32>
    %15 = vector.broadcast %5 : vector<64x1xf32> to vector<64x128xf32>
    %16 = arith.subf %1, %15 : vector<64x128xf32>
    %cst_6 = arith.constant 9.99999974E-6 : f32
    %17 = vector.broadcast %cst_6 : f32 to vector<64x1xf32>
    %18 = arith.addf %14, %17 : vector<64x1xf32>
    %19 = math.rsqrt %18 : vector<64x1xf32>
    %20 = vector.broadcast %19 : vector<64x1xf32> to vector<64x128xf32>
    %21 = arith.mulf %16, %20 : vector<64x128xf32>
    %22 = arith.truncf %21 : vector<64x128xf32> to vector<64x128xbf16>
    %c0_7 = arith.constant 0 : index
    %c0_8 = arith.constant 0 : index
    %23 = vector.load %arg2[%c0_7, %c0_8] : memref<128x256xbf16, #tpu.memory_space<vmem>>, vector<128x256xbf16>
    %cst_9 = arith.constant dense<0.000000e+00> : vector<64x256xf32>
    %24 = tpu.matmul %22, %23, %cst_9 {dimension_numbers = #tpu.dot_dimension_numbers<[1], [0], [0], [1], [0, 0, 1, 1], [], []>} : vector<64x128xbf16>, vector<128x256xbf16>, vector<64x256xf32> -> vector<64x256xf32>
    %c0_10 = arith.constant 0 : index
    %c0_11 = arith.constant 0 : index
    %25 = vector.load %arg3[%c0_10, %c0_11] : memref<1x256xf32, #tpu.memory_space<vmem>>, vector<1x256xf32>
    %26 = vector.broadcast %25 : vector<1x256xf32> to vector<64x256xf32>
    %27 = arith.addf %24, %26 : vector<64x256xf32>
    %cst_12 = arith.constant dense<0.000000e+00> : vector<64xf32>
    %28 = vector.multi_reduction <add>, %27, %cst_12 [1] : vector<64x256xf32> to vector<64xf32>
    %29 = vector.shape_cast %28 : vector<64xf32> to vector<64x1xf32>
    %cst_13 = arith.constant 2.560000e+02 : f32
    %30 = vector.broadcast %cst_13 : f32 to vector<64x1xf32>
    %31 = arith.divf %29, %30 : vector<64x1xf32>
    %32 = arith.mulf %27, %27 : vector<64x256xf32>
    %cst_14 = arith.constant dense<0.000000e+00> : vector<64xf32>
    %33 = vector.multi_reduction <add>, %32, %cst_14 [1] : vector<64x256xf32> to vector<64xf32>
    %34 = vector.shape_cast %33 : vector<64xf32> to vector<64x1xf32>
    %cst_15 = arith.constant 2.560000e+02 : f32
    %35 = vector.broadcast %cst_15 : f32 to vector<64x1xf32>
    %36 = arith.divf %34, %35 : vector<64x1xf32>
    %37 = arith.mulf %31, %31 : vector<64x1xf32>
    %38 = arith.subf %36, %37 : vector<64x1xf32>
    %cst_16 = arith.constant 0.000000e+00 : f32
    %39 = vector.broadcast %cst_16 : f32 to vector<64x1xf32>
    %40 = arith.maximumf %38, %39 : vector<64x1xf32>
    %41 = vector.broadcast %31 : vector<64x1xf32> to vector<64x256xf32>
    %42 = arith.subf %27, %41 : vector<64x256xf32>
    %cst_17 = arith.constant 9.99999974E-6 : f32
    %43 = vector.broadcast %cst_17 : f32 to vector<64x1xf32>
    %44 = arith.addf %40, %43 : vector<64x1xf32>
    %45 = math.rsqrt %44 : vector<64x1xf32>
    %46 = vector.broadcast %45 : vector<64x1xf32> to vector<64x256xf32>
    %47 = arith.mulf %42, %46 : vector<64x256xf32>
    %cst_18 = arith.constant 5.000000e-01 : f32
    %48 = vector.broadcast %cst_18 : f32 to vector<64x256xf32>
    %49 = arith.mulf %48, %47 : vector<64x256xf32>
    %cst_19 = arith.constant 0.707106769 : f32
    %50 = vector.broadcast %cst_19 : f32 to vector<64x256xf32>
    %51 = arith.mulf %47, %50 : vector<64x256xf32>
    %52 = math.erf %51 : vector<64x256xf32>
    %cst_20 = arith.constant 1.000000e+00 : f32
    %53 = vector.broadcast %cst_20 : f32 to vector<64x256xf32>
    %54 = arith.addf %53, %52 : vector<64x256xf32>
    %55 = arith.mulf %49, %54 : vector<64x256xf32>
    %56 = arith.truncf %55 : vector<64x256xf32> to vector<64x256xbf16>
    %c0_21 = arith.constant 0 : index
    %c0_22 = arith.constant 0 : index
    %57 = vector.load %arg4[%c0_21, %c0_22] : memref<256x256xbf16, #tpu.memory_space<vmem>>, vector<256x256xbf16>
    %cst_23 = arith.constant dense<0.000000e+00> : vector<64x256xf32>
    %58 = tpu.matmul %56, %57, %cst_23 {dimension_numbers = #tpu.dot_dimension_numbers<[1], [0], [0], [1], [0, 0, 1, 1], [], []>} : vector<64x256xbf16>, vector<256x256xbf16>, vector<64x256xf32> -> vector<64x256xf32>
    %c0_24 = arith.constant 0 : index
    %c0_25 = arith.constant 0 : index
    %59 = vector.load %arg5[%c0_24, %c0_25] : memref<1x256xf32, #tpu.memory_space<vmem>>, vector<1x256xf32>
    %60 = vector.broadcast %59 : vector<1x256xf32> to vector<64x256xf32>
    %61 = arith.addf %58, %60 : vector<64x256xf32>
    %cst_26 = arith.constant dense<0.000000e+00> : vector<64xf32>
    %62 = vector.multi_reduction <add>, %61, %cst_26 [1] : vector<64x256xf32> to vector<64xf32>
    %63 = vector.shape_cast %62 : vector<64xf32> to vector<64x1xf32>
    %cst_27 = arith.constant 2.560000e+02 : f32
    %64 = vector.broadcast %cst_27 : f32 to vector<64x1xf32>
    %65 = arith.divf %63, %64 : vector<64x1xf32>
    %66 = arith.mulf %61, %61 : vector<64x256xf32>
    %cst_28 = arith.constant dense<0.000000e+00> : vector<64xf32>
    %67 = vector.multi_reduction <add>, %66, %cst_28 [1] : vector<64x256xf32> to vector<64xf32>
    %68 = vector.shape_cast %67 : vector<64xf32> to vector<64x1xf32>
    %cst_29 = arith.constant 2.560000e+02 : f32
    %69 = vector.broadcast %cst_29 : f32 to vector<64x1xf32>
    %70 = arith.divf %68, %69 : vector<64x1xf32>
    %71 = arith.mulf %65, %65 : vector<64x1xf32>
    %72 = arith.subf %70, %71 : vector<64x1xf32>
    %cst_30 = arith.constant 0.000000e+00 : f32
    %73 = vector.broadcast %cst_30 : f32 to vector<64x1xf32>
    %74 = arith.maximumf %72, %73 : vector<64x1xf32>
    %75 = vector.broadcast %65 : vector<64x1xf32> to vector<64x256xf32>
    %76 = arith.subf %61, %75 : vector<64x256xf32>
    %cst_31 = arith.constant 9.99999974E-6 : f32
    %77 = vector.broadcast %cst_31 : f32 to vector<64x1xf32>
    %78 = arith.addf %74, %77 : vector<64x1xf32>
    %79 = math.rsqrt %78 : vector<64x1xf32>
    %80 = vector.broadcast %79 : vector<64x1xf32> to vector<64x256xf32>
    %81 = arith.mulf %76, %80 : vector<64x256xf32>
    %cst_32 = arith.constant 5.000000e-01 : f32
    %82 = vector.broadcast %cst_32 : f32 to vector<64x256xf32>
    %83 = arith.mulf %82, %81 : vector<64x256xf32>
    %cst_33 = arith.constant 0.707106769 : f32
    %84 = vector.broadcast %cst_33 : f32 to vector<64x256xf32>
    %85 = arith.mulf %81, %84 : vector<64x256xf32>
    %86 = math.erf %85 : vector<64x256xf32>
    %cst_34 = arith.constant 1.000000e+00 : f32
    %87 = vector.broadcast %cst_34 : f32 to vector<64x256xf32>
    %88 = arith.addf %87, %86 : vector<64x256xf32>
    %89 = arith.mulf %83, %88 : vector<64x256xf32>
    %90 = arith.truncf %89 : vector<64x256xf32> to vector<64x256xbf16>
    %c0_35 = arith.constant 0 : index
    %c0_36 = arith.constant 0 : index
    %91 = vector.load %arg6[%c0_35, %c0_36] : memref<256x128xbf16, #tpu.memory_space<vmem>>, vector<256x128xbf16>
    %cst_37 = arith.constant dense<0.000000e+00> : vector<64x128xf32>
    %92 = tpu.matmul %90, %91, %cst_37 {dimension_numbers = #tpu.dot_dimension_numbers<[1], [0], [0], [1], [0, 0, 1, 1], [], []>} : vector<64x256xbf16>, vector<256x128xbf16>, vector<64x128xf32> -> vector<64x128xf32>
    %c0_38 = arith.constant 0 : index
    %c0_39 = arith.constant 0 : index
    %93 = vector.load %arg7[%c0_38, %c0_39] : memref<1x128xf32, #tpu.memory_space<vmem>>, vector<1x128xf32>
    %94 = vector.broadcast %93 : vector<1x128xf32> to vector<64x128xf32>
    %95 = arith.addf %92, %94 : vector<64x128xf32>
    %96 = vector.broadcast %0 : f32 to vector<64x128xf32>
    %97 = arith.mulf %96, %95 : vector<64x128xf32>
    %98 = arith.addf %21, %97 : vector<64x128xf32>
    %c0_40 = arith.constant 0 : index
    %c0_41 = arith.constant 0 : index
    %99 = vector.load %arg9[%c0_40, %c0_41] : memref<64x128xf32, #tpu.memory_space<vmem>>, vector<64x128xf32>
    tpu.vector_store %arg9[%c0_40, %c0_41], %98 {strides = array<i32>} : memref<64x128xf32, #tpu.memory_space<vmem>>, vector<64x128xf32>,
    return
  }
  func.func @transform_0(%arg0: i32) -> (i32, i32) {
    %c0_i32 = arith.constant 0 : i32
    %c0_i32_0 = arith.constant 0 : i32
    return %arg0, %c0_i32 : i32, i32
  }
  func.func @transform_1(%arg0: i32) -> (i32, i32) {
    %c0_i32 = arith.constant 0 : i32
    %c0_i32_0 = arith.constant 0 : i32
    %c0_i32_1 = arith.constant 0 : i32
    return %c0_i32, %c0_i32_0 : i32, i32
  }
  func.func @transform_2(%arg0: i32) -> (i32, i32) {
    %c0_i32 = arith.constant 0 : i32
    %c0_i32_0 = arith.constant 0 : i32
    %c0_i32_1 = arith.constant 0 : i32
    return %c0_i32, %c0_i32_0 : i32, i32
  }
  func.func @transform_3(%arg0: i32) -> (i32, i32) {
    %c0_i32 = arith.constant 0 : i32
    %c0_i32_0 = arith.constant 0 : i32
    %c0_i32_1 = arith.constant 0 : i32
    return %c0_i32, %c0_i32_0 : i32, i32
  }
  func.func @transform_4(%arg0: i32) -> (i32, i32) {
    %c0_i32 = arith.constant 0 : i32
    %c0_i32_0 = arith.constant 0 : i32
    %c0_i32_1 = arith.constant 0 : i32
    return %c0_i32, %c0_i32_0 : i32, i32
  }
  func.func @transform_5(%arg0: i32) -> (i32, i32) {
    %c0_i32 = arith.constant 0 : i32
    %c0_i32_0 = arith.constant 0 : i32
    %c0_i32_1 = arith.constant 0 : i32
    return %c0_i32, %c0_i32_0 : i32, i32
  }
  func.func @transform_6(%arg0: i32) -> (i32, i32) {
    %c0_i32 = arith.constant 0 : i32
    %c0_i32_0 = arith.constant 0 : i32
    %c0_i32_1 = arith.constant 0 : i32
    return %c0_i32, %c0_i32_0 : i32, i32
  }
  func.func @transform_7(%arg0: i32) -> i32 {
    %c0_i32 = arith.constant 0 : i32
    %c0_i32_0 = arith.constant 0 : i32
    return %c0_i32 : i32
  }
  func.func @transform_8(%arg0: i32) -> (i32, i32) {
    %c0_i32 = arith.constant 0 : i32
    %c0_i32_0 = arith.constant 0 : i32
    return %arg0, %c0_i32 : i32, i32
  }
}

</mosaic_0001>

<llo_original>
// kernel: tpu_custom_call.1
$region0: #{tpu_custom_call.1}
  #allocation0 [shape = 'u32[]', space=smem, size = 0x4, offset = 0x4, fixed_abs, tag = 'smem constant byte address 0x4 - core index']
  #allocation1 [shape = 'u32[72,128]{1,0:T(1,128)}', space=vmem, size = 0x9000, scoped, tag = 'internal scratch']
  #allocation2 [shape = 'f32[1]{0:T(128)S(6)}', space=smem, size = 0x200, scoped, tag = 'scoped memory for tpu_custom_call.1']
  %s0 = inlined_call_operand.hbm [shape: f32[128,128], index: 0, kind: input, shape index: {}]
  %s1 = inlined_call_operand.hbm [shape: bf16[128,256], index: 1, kind: input, shape index: {}]
  %s2 = inlined_call_operand.vmem [shape: f32[1,256], index: 2, kind: input, shape index: {}]
  %s3 = inlined_call_operand.hbm [shape: bf16[256,256], index: 3, kind: input, shape index: {}]
  %s4 = inlined_call_operand.vmem [shape: f32[1,256], index: 4, kind: input, shape index: {}]
  %s5 = inlined_call_operand.hbm [shape: bf16[256,128], index: 5, kind: input, shape index: {}]
  %s6 = inlined_call_operand.vmem [shape: f32[1,128], index: 6, kind: input, shape index: {}]
  %s7 = inlined_call_operand.<no memory space> [shape: f32[1], index: 7, kind: input, shape index: {}]
  %s8 = inlined_call_operand.hbm [shape: f32[128,128], index: 8, kind: output, shape index: {}]
  %s9 = sld [smem:[#allocation0]]
  $region81: #{tpu_custom_call.1} parent=0
    _
  %s11 = ssub.s32 1, %s9
  %s12 = scalar_select 0, %s11, %s9
  %13 = sst [smem:[#allocation2]] %s7
  $region1: #{tpu_custom_call.1} parent=0
    #allocation3 [shape = 'u8[65536]{0}', space=vmem, size = 0x10000, scoped, tag = 'input window, operand 0']
    #allocation4 [shape = 's32[2]{0}', space=sflag, size = 0x8, scoped, tag = 'scoped memory for tpu_custom_call.1']
    #allocation5 [shape = 's32[2]{0}', space=sflag, size = 0x8, scoped, tag = 'scoped memory for tpu_custom_call.1']
    #allocation6 [shape = 'u8[65536]{0}', space=vmem, size = 0x10000, scoped, tag = 'input window, operand 1, single buffered']
    #allocation7 [shape = 's32[1]{0}', space=sflag, size = 0x4, scoped, tag = 'scoped memory for tpu_custom_call.1']
    #allocation8 [shape = 'u8[131072]{0}', space=vmem, size = 0x20000, scoped, tag = 'input window, operand 3, single buffered']
    #allocation9 [shape = 'u8[65536]{0}', space=vmem, size = 0x10000, scoped, tag = 'input window, operand 5, single buffered']
    #allocation10 [shape = 's32[1]{0}', space=sflag, size = 0x4, scoped, tag = 'scoped memory for tpu_custom_call.1']
    #allocation11 [shape = 'u8[65536]{0}', space=vmem, size = 0x10000, scoped, tag = 'output window, operand 0']
    %14 = vsyncpa [#allocation4], 0
    %s15 = scalar_lea.sflag [#allocation4], 1
    %16 = vsyncpa %s15, 0
    %17 = vsyncpa [#allocation7], 0
    %18 = vsyncpa [#allocation10], 0
    %19 = vsyncpa [#allocation5], 0
    %s20 = scalar_lea.sflag [#allocation5], 1
    %21 = vsyncpa %s20, 0
    loop: start=0, step=1, limit=4
    $region2: #{tpu_custom_call.1} parent=1 // loop_pre_header
      _
    $region3: #{tpu_custom_call.1} parent=1 // loop_header
      %s23 = sphi 0, %s27
      %p24 = scmp.ge.s32.totalorder %s23, 4
      %s33 = sphi 0, %s35
      %s36 = sphi 0, %s33
      %s37 = sphi 0, %s36
      %s53 = sphi 0, %s37
      %s57 = sphi 0, %s57
      %s59 = sphi 0, %s57
      %s60 = sphi 0, %s59
      %s74 = sphi 0, %s60
      %s78 = sphi 0, %s78
      %s80 = sphi 0, %s78
      %s81 = sphi 0, %s80
      %s95 = sphi 0, %s81
      %s99 = sphi 0, %s99
      %s101 = sphi 0, %s99
      %s102 = sphi 0, %s101
      %s116 = sphi 0, %s102
      %s120 = sphi 0, %s120
      %s122 = sphi 0, %s120
      %s123 = sphi 0, %s122
      %s137 = sphi 0, %s123
      %s141 = sphi 0, %s141
      %s143 = sphi 0, %s141
      %s144 = sphi 0, %s143
      %s158 = sphi 0, %s144
      %s162 = sphi 0, %s162
      %s164 = sphi 0, %s162
      %s165 = sphi 0, %s164
      %s179 = sphi 0, %s165
      %s183 = sphi 0, %s183
      %s185 = sphi 0, %s183
      %s186 = sphi 0, %s185
      %s200 = sphi 0, %s186
      %s206 = sphi 0, %s208
      %s209 = sphi 0, %s206
      %s210 = sphi 0, %s209
      %s226 = sphi 0, %s210
    $region4: #{tpu_custom_call.1} parent=1 // loop_header_branch
      %26 = sbr.rel (%p24) target = $region8
    $region5: #{tpu_custom_call.1} parent=1 // loop_body
      %s28 = ssub.s32 %s23, 1
      %s29 = ssub.s32 %s23, 2
      %s30 = sadd.s32 %s23, 1
      %s31 = ssub.s32 %s23, %s30
      %p32 = scmp.eq.s32.totalorder %s31, 0
      %s34 = sadd.s32 %s33, 1
      %s35 = scalar_select %p32, %s33, %s34
      %p38 = pneg %p32
      %p39 = scmp.eq.s32.totalorder %s23, 1
      %p40 = por %p38, %p39
      %p41 = scmp.ne.s32.totalorder %s33, %s36
      %p42 = scmp.eq.s32.totalorder %s23, 0
      %p43 = por %p41, %p42
      %p44 = scmp.ne.s32.totalorder %s33, %s36
      %p45 = scmp.eq.s32.totalorder %s28, 1
      %p46 = por %p44, %p45
      %p47 = scmp.ne.s32.totalorder %s36, %s37
      %p48 = scmp.eq.s32.totalorder %s28, 0
      %p49 = por %p47, %p48
      %p50 = scmp.ne.s32.totalorder %s36, %s37
      %p51 = scmp.eq.s32.totalorder %s29, 1
      %p52 = por %p50, %p51
      %p54 = scmp.ne.s32.totalorder %s37, %s53
      %p55 = scmp.eq.s32.totalorder %s29, 0
      %p56 = por %p54, %p55
      %s58 = sadd.s32 %s57, 1
      %p61 = scmp.eq.s32.totalorder %s23, 1
      %p62 = scmp.ne.s32.totalorder %s57, %s59
      %p63 = scmp.eq.s32.totalorder %s23, 0
      %p64 = por %p62, %p63
      %p65 = scmp.ne.s32.totalorder %s57, %s59
      %p66 = scmp.eq.s32.totalorder %s28, 1
      %p67 = por %p65, %p66
      %p68 = scmp.ne.s32.totalorder %s59, %s60
      %p69 = scmp.eq.s32.totalorder %s28, 0
      %p70 = por %p68, %p69
      %p71 = scmp.ne.s32.totalorder %s59, %s60
      %p72 = scmp.eq.s32.totalorder %s29, 1
      %p73 = por %p71, %p72
      %p75 = scmp.ne.s32.totalorder %s60, %s74
      %p76 = scmp.eq.s32.totalorder %s29, 0
      %p77 = por %p75, %p76
      %s79 = sadd.s32 %s78, 1
      %p82 = scmp.eq.s32.totalorder %s23, 1
      %p83 = scmp.ne.s32.totalorder %s78, %s80
      %p84 = scmp.eq.s32.totalorder %s23, 0
      %p85 = por %p83, %p84
      %p86 = scmp.ne.s32.totalorder %s78, %s80
      %p87 = scmp.eq.s32.totalorder %s28, 1
      %p88 = por %p86, %p87
      %p89 = scmp.ne.s32.totalorder %s80, %s81
      %p90 = scmp.eq.s32.totalorder %s28, 0
      %p91 = por %p89, %p90
      %p92 = scmp.ne.s32.totalorder %s80, %s81
      %p93 = scmp.eq.s32.totalorder %s29, 1
      %p94 = por %p92, %p93
      %p96 = scmp.ne.s32.totalorder %s81, %s95
      %p97 = scmp.eq.s32.totalorder %s29, 0
      %p98 = por %p96, %p97
      %s100 = sadd.s32 %s99, 1
      %p103 = scmp.eq.s32.totalorder %s23, 1
      %p104 = scmp.ne.s32.totalorder %s99, %s101
      %p105 = scmp.eq.s32.totalorder %s23, 0
      %p106 = por %p104, %p105
      %p107 = scmp.ne.s32.totalorder %s99, %s101
      %p108 = scmp.eq.s32.totalorder %s28, 1
      %p109 = por %p107, %p108
      %p110 = scmp.ne.s32.totalorder %s101, %s102
      %p111 = scmp.eq.s32.totalorder %s28, 0
      %p112 = por %p110, %p111
      %p113 = scmp.ne.s32.totalorder %s101, %s102
      %p114 = scmp.eq.s32.totalorder %s29, 1
      %p115 = por %p113, %p114
      %p117 = scmp.ne.s32.totalorder %s102, %s116
      %p118 = scmp.eq.s32.totalorder %s29, 0
      %p119 = por %p117, %p118
      %s121 = sadd.s32 %s120, 1
      %p124 = scmp.eq.s32.totalorder %s23, 1
      %p125 = scmp.ne.s32.totalorder %s120, %s122
      %p126 = scmp.eq.s32.totalorder %s23, 0
      %p127 = por %p125, %p126
      %p128 = scmp.ne.s32.totalorder %s120, %s122
      %p129 = scmp.eq.s32.totalorder %s28, 1
      %p130 = por %p128, %p129
      %p131 = scmp.ne.s32.totalorder %s122, %s123
      %p132 = scmp.eq.s32.totalorder %s28, 0
      %p133 = por %p131, %p132
      %p134 = scmp.ne.s32.totalorder %s122, %s123
      %p135 = scmp.eq.s32.totalorder %s29, 1
      %p136 = por %p134, %p135
      %p138 = scmp.ne.s32.totalorder %s123, %s137
      %p139 = scmp.eq.s32.totalorder %s29, 0
      %p140 = por %p138, %p139
      %s142 = sadd.s32 %s141, 1
      %p145 = scmp.eq.s32.totalorder %s23, 1
      %p146 = scmp.ne.s32.totalorder %s141, %s143
      %p147 = scmp.eq.s32.totalorder %s23, 0
      %p148 = por %p146, %p147
      %p149 = scmp.ne.s32.totalorder %s141, %s143
      %p150 = scmp.eq.s32.totalorder %s28, 1
      %p151 = por %p149, %p150
      %p152 = scmp.ne.s32.totalorder %s143, %s144
      %p153 = scmp.eq.s32.totalorder %s28, 0
      %p154 = por %p152, %p153
      %p155 = scmp.ne.s32.totalorder %s143, %s144
      %p156 = scmp.eq.s32.totalorder %s29, 1
      %p157 = por %p155, %p156
      %p159 = scmp.ne.s32.totalorder %s144, %s158
      %p160 = scmp.eq.s32.totalorder %s29, 0
      %p161 = por %p159, %p160
      %s163 = sadd.s32 %s162, 1
      %p166 = scmp.eq.s32.totalorder %s23, 1
      %p167 = scmp.ne.s32.totalorder %s162, %s164
      %p168 = scmp.eq.s32.totalorder %s23, 0
      %p169 = por %p167, %p168
      %p170 = scmp.ne.s32.totalorder %s162, %s164
      %p171 = scmp.eq.s32.totalorder %s28, 1
      %p172 = por %p170, %p171
      %p173 = scmp.ne.s32.totalorder %s164, %s165
      %p174 = scmp.eq.s32.totalorder %s28, 0
      %p175 = por %p173, %p174
      %p176 = scmp.ne.s32.totalorder %s164, %s165
      %p177 = scmp.eq.s32.totalorder %s29, 1
      %p178 = por %p176, %p177
      %p180 = scmp.ne.s32.totalorder %s165, %s179
      %p181 = scmp.eq.s32.totalorder %s29, 0
      %p182 = por %p180, %p181
      %s184 = sadd.s32 %s183, 1
      %p187 = scmp.eq.s32.totalorder %s23, 1
      %p188 = scmp.ne.s32.totalorder %s183, %s185
      %p189 = scmp.eq.s32.totalorder %s23, 0
      %p190 = por %p188, %p189
      %p191 = scmp.ne.s32.totalorder %s183, %s185
      %p192 = scmp.eq.s32.totalorder %s28, 1
      %p193 = por %p191, %p192
      %p194 = scmp.ne.s32.totalorder %s185, %s186
      %p195 = scmp.eq.s32.totalorder %s28, 0
      %p196 = por %p194, %p195
      %p197 = scmp.ne.s32.totalorder %s185, %s186
      %p198 = scmp.eq.s32.totalorder %s29, 1
      %p199 = por %p197, %p198
      %p201 = scmp.ne.s32.totalorder %s186, %s200
      %p202 = scmp.eq.s32.totalorder %s29, 0
      %p203 = por %p201, %p202
      %s204 = ssub.s32 %s23, %s30
      %p205 = scmp.eq.s32.totalorder %s204, 0
      %s207 = sadd.s32 %s206, 1
      %s208 = scalar_select %p205, %s206, %s207
      %p211 = pneg %p205
      %p212 = scmp.eq.s32.totalorder %s23, 1
      %p213 = por %p211, %p212
      %p214 = scmp.ne.s32.totalorder %s206, %s209
      %p215 = scmp.eq.s32.totalorder %s23, 0
      %p216 = por %p214, %p215
      %p217 = scmp.ne.s32.totalorder %s206, %s209
      %p218 = scmp.eq.s32.totalorder %s28, 1
      %p219 = por %p217, %p218
      %p220 = scmp.ne.s32.totalorder %s209, %s210
      %p221 = scmp.eq.s32.totalorder %s28, 0
      %p222 = por %p220, %p221
      %p223 = scmp.ne.s32.totalorder %s209, %s210
      %p224 = scmp.eq.s32.totalorder %s29, 1
      %p225 = por %p223, %p224
      %p227 = scmp.ne.s32.totalorder %s210, %s226
      %p228 = scmp.eq.s32.totalorder %s29, 0
      %p229 = por %p227, %p228
      %p230 = scmp.le.s32.totalorder 1, %s23
      %p231 = scmp.lt.s32.totalorder %s23, 3
      %p232 = pnand %p230, %p231
      %p233 = pneg %p232
      // Predicated region
      $region9: #{tpu_custom_call.1} parent=5 // pred_check
        _
      $region10: #{tpu_custom_call.1} parent=5 // pred_check_branch
        %235 = sbr.rel (%p232) target = $region12
      $region11: #{tpu_custom_call.1} parent=5 // pred_region
        %s236 = ssub.s32 %s23, 1
        // Predicated region
        $region13: #{tpu_custom_call.1} parent=11 // pred_check
          %p237 = pneg %p70
        $region14: #{tpu_custom_call.1} parent=11 // pred_check_branch
          %239 = sbr.rel (%p237) target = $region16
        $region15: #{tpu_custom_call.1} parent=11 // pred_region
          %241 = vsyncadd [#allocation7], 0
          %s242 = sshll.u32 %s1, 4
          %s243 = int_to_ptr.hbm [resolvable:$true] %s242
          %s244 = sshll.u32 [#allocation6], 4
          %s245 = int_to_ptr.vmem [resolvable:$true] %s244
          %250 = dma.hbm_to_vmem [thread:$0]  %s243, 2048, %s245, [#allocation7], 128, 128, 8
        $region16: #{tpu_custom_call.1} parent=11 // pred_fallthru
          _
        // Predicated region
        $region17: #{tpu_custom_call.1} parent=11 // pred_check
          %p251 = pneg %p91
        $region18: #{tpu_custom_call.1} parent=11 // pred_check_branch
          %253 = sbr.rel (%p251) target = $region20
        $region19: #{tpu_custom_call.1} parent=11 // pred_region
          _
        $region20: #{tpu_custom_call.1} parent=11 // pred_fallthru
          _
        // Predicated region
        $region21: #{tpu_custom_call.1} parent=11 // pred_check
          %p254 = pneg %p112
        $region22: #{tpu_custom_call.1} parent=11 // pred_check_branch
          %256 = sbr.rel (%p254) target = $region24
        $region23: #{tpu_custom_call.1} parent=11 // pred_region
          %258 = vsyncadd [#allocation7], 0
          %s259 = sshll.u32 %s3, 4
          %s260 = int_to_ptr.hbm [resolvable:$true] %s259
          %s261 = sshll.u32 [#allocation8], 4
          %s262 = int_to_ptr.vmem [resolvable:$true] %s261
          %267 = dma.hbm_to_vmem [thread:$0]  %s260, 4096, %s262, [#allocation7], 128, 128, 8
        $region24: #{tpu_custom_call.1} parent=11 // pred_fallthru
          _
        // Predicated region
        $region25: #{tpu_custom_call.1} parent=11 // pred_check
          %p268 = pneg %p133
        $region26: #{tpu_custom_call.1} parent=11 // pred_check_branch
          %270 = sbr.rel (%p268) target = $region28
        $region27: #{tpu_custom_call.1} parent=11 // pred_region
          _
        $region28: #{tpu_custom_call.1} parent=11 // pred_fallthru
          _
        // Predicated region
        $region29: #{tpu_custom_call.1} parent=11 // pred_check
          %p271 = pneg %p154
        $region30: #{tpu_custom_call.1} parent=11 // pred_check_branch
          %273 = sbr.rel (%p271) target = $region32
        $region31: #{tpu_custom_call.1} parent=11 // pred_region
          %275 = vsyncadd [#allocation10], 0
          %s276 = sshll.u32 %s5, 4
          %s277 = int_to_ptr.hbm [resolvable:$true] %s276
          %s278 = sshll.u32 [#allocation9], 4
          %s279 = int_to_ptr.vmem [resolvable:$true] %s278
          %284 = dma.hbm_to_vmem [thread:$0]  %s277, 2048, %s279, [#allocation10], 64, 64, 4
        $region32: #{tpu_custom_call.1} parent=11 // pred_fallthru
          _
        // Predicated region
        $region33: #{tpu_custom_call.1} parent=11 // pred_check
          %p285 = pneg %p175
        $region34: #{tpu_custom_call.1} parent=11 // pred_check_branch
          %287 = sbr.rel (%p285) target = $region36
        $region35: #{tpu_custom_call.1} parent=11 // pred_region
          _
        $region36: #{tpu_custom_call.1} parent=11 // pred_fallthru
          _
        // Predicated region
        $region37: #{tpu_custom_call.1} parent=11 // pred_check
          %p288 = pneg %p196
        $region38: #{tpu_custom_call.1} parent=11 // pred_check_branch
          %290 = sbr.rel (%p288) target = $region40
        $region39: #{tpu_custom_call.1} parent=11 // pred_region
          _
        $region40: #{tpu_custom_call.1} parent=11 // pred_fallthru
          _
      $region12: #{tpu_custom_call.1} parent=5 // pred_fallthru
        _
      %p291 = scmp.lt.s32.totalorder %s23, 2
      // Predicated region
      $region41: #{tpu_custom_call.1} parent=5 // pred_check
        %p292 = pneg %p291
      $region42: #{tpu_custom_call.1} parent=5 // pred_check_branch
        %294 = sbr.rel (%p292) target = $region44
      $region43: #{tpu_custom_call.1} parent=5 // pred_region
        // Predicated region
        $region45: #{tpu_custom_call.1} parent=43 // pred_check
          %p295 = pneg %p43
        $region46: #{tpu_custom_call.1} parent=43 // pred_check_branch
          %297 = sbr.rel (%p295) target = $region48
        $region47: #{tpu_custom_call.1} parent=43 // pred_region
          %s298 = sand.u32 %s33, 1
          %s299 = scalar_lea.sflag [#allocation4], %s298
          %s300 = sand.u32 %s33, 1
          %s301 = smul.addr %s300, 64
          %s302 = scalar_lea.vmem [#allocation3], %s301
          %s303 = smul.u32 8, %s23
          %305 = vsyncadd %s299, 0
          %s306 = smul.addr %s303, 8
          %s307 = scalar_lea.hbm %s0, %s306
          %s308 = sshll.u32 %s307, 4
          %s309 = int_to_ptr.hbm [resolvable:$true] %s308
          %s310 = sshll.u32 %s302, 4
          %s311 = int_to_ptr.vmem [resolvable:$true] %s310
          %316 = dma.hbm_to_vmem [thread:$0]  %s309, 1024, %s311, %s299, 128, 128, 8
        $region48: #{tpu_custom_call.1} parent=43 // pred_fallthru
          _
      $region44: #{tpu_custom_call.1} parent=5 // pred_fallthru
        _
      %p317 = scmp.le.s32.totalorder 1, %s23
      %p318 = scmp.lt.s32.totalorder %s23, 3
      %p319 = pnand %p317, %p318
      %p320 = pneg %p319
      // Predicated region
      $region49: #{tpu_custom_call.1} parent=5 // pred_check
        _
      $region50: #{tpu_custom_call.1} parent=5 // pred_check_branch
        %322 = sbr.rel (%p319) target = $region52
      $region51: #{tpu_custom_call.1} parent=5 // pred_region
        %s323 = ssub.s32 %s23, 1
        %s324 = sand.u32 %s36, 1
        %s325 = scalar_lea.sflag [#allocation4], %s324
        %s326 = sand.u32 %s36, 1
        %s327 = smul.addr %s326, 64
        %s328 = scalar_lea.vmem [#allocation3], %s327
        // Predicated region
        $region53: #{tpu_custom_call.1} parent=51 // pred_check
          %p329 = pneg %p49
        $region54: #{tpu_custom_call.1} parent=51 // pred_check_branch
          %331 = sbr.rel (%p329) target = $region56
        $region55: #{tpu_custom_call.1} parent=51 // pred_region
          %333 = dma.done %s325, 1024
        $region56: #{tpu_custom_call.1} parent=51 // pred_fallthru
          _
        // Predicated region
        $region57: #{tpu_custom_call.1} parent=51 // pred_check
          %p334 = pneg %p70
        $region58: #{tpu_custom_call.1} parent=51 // pred_check_branch
          %336 = sbr.rel (%p334) target = $region60
        $region59: #{tpu_custom_call.1} parent=51 // pred_region
          %338 = dma.done [#allocation7], 2048
        $region60: #{tpu_custom_call.1} parent=51 // pred_fallthru
          _
        // Predicated region
        $region61: #{tpu_custom_call.1} parent=51 // pred_check
          %p339 = pneg %p112
        $region62: #{tpu_custom_call.1} parent=51 // pred_check_branch
          %341 = sbr.rel (%p339) target = $region64
        $region63: #{tpu_custom_call.1} parent=51 // pred_region
          %343 = dma.done [#allocation7], 4096
        $region64: #{tpu_custom_call.1} parent=51 // pred_fallthru
          _
        // Predicated region
        $region65: #{tpu_custom_call.1} parent=51 // pred_check
          %p344 = pneg %p154
        $region66: #{tpu_custom_call.1} parent=51 // pred_check_branch
          %346 = sbr.rel (%p344) target = $region68
        $region67: #{tpu_custom_call.1} parent=51 // pred_region
          %348 = dma.done [#allocation10], 2048
        $region68: #{tpu_custom_call.1} parent=51 // pred_fallthru
          _
        %s349 = sand.u32 %s36, 1
        %s350 = scalar_lea.sflag [#allocation4], %s349
        %s351 = sand.u32 %s36, 1
        %s352 = smul.addr %s351, 64
        %s353 = scalar_lea.vmem [#allocation3], %s352
        %p354 = pneg %p49
        %p355 = pneg %p46
        %p356 = pneg %p70
        %p357 = pneg %p67
        %p358 = pneg %p91
        %p359 = pneg %p88
        %p360 = pneg %p112
        %p361 = pneg %p109
        %p362 = pneg %p133
        %p363 = pneg %p130
        %p364 = pneg %p154
        %p365 = pneg %p151
        %p366 = pneg %p175
        %p367 = pneg %p172
        %p368 = pneg %p196
        %p369 = pneg %p193
        %p370 = pneg %p222
        %p371 = pneg %p219
        %s372 = sand.u32 %s209, 1
        %s373 = scalar_lea.sflag [#allocation5], %s372
        %s374 = sand.u32 %s209, 1
        %s375 = smul.addr %s374, 64
        %s376 = scalar_lea.vmem [#allocation11], %s375
        %s377 = smul.u32 8, %s28
        %s378 = smul.u32 8, %s28
        %s379 = sld [smem:[#allocation2]]
        %v380 = vld [vmem:[%s328] sm:$0xff]
        %v381 = vld [vmem:[%s328 + $0x8] sm:$0xff]
        %v382 = vld [vmem:[%s328 + $0x10] sm:$0xff]
        %v383 = vld [vmem:[%s328 + $0x18] sm:$0xff]
        %v384 = vld [vmem:[%s328 + $0x20] sm:$0xff]
        %v385 = vld [vmem:[%s328 + $0x28] sm:$0xff]
        %v386 = vld [vmem:[%s328 + $0x30] sm:$0xff]
        %v387 = vld [vmem:[%s328 + $0x38] sm:$0xff]
        %388 = vadd.xlane.f32.xlu0 %v380
        %v389 = vpop.xlane.xlu0 %388
        %390 = vadd.xlane.f32.xlu0 %v381
        %v391 = vpop.xlane.xlu0 %390
        %392 = vadd.xlane.f32.xlu0 %v382
        %v393 = vpop.xlane.xlu0 %392
        %394 = vadd.xlane.f32.xlu0 %v383
        %v395 = vpop.xlane.xlu0 %394
        %396 = vadd.xlane.f32.xlu0 %v384
        %v397 = vpop.xlane.xlu0 %396
        %398 = vadd.xlane.f32.xlu0 %v385
        %v399 = vpop.xlane.xlu0 %398
        %400 = vadd.xlane.f32.xlu0 %v386
        %v401 = vpop.xlane.xlu0 %400
        %402 = vadd.xlane.f32.xlu0 %v387
        %v403 = vpop.xlane.xlu0 %402
        %v404 = vrcp.pop 128.0
        %v405 = vmul.f32 128.0, %v404
        %v406 = vsub.f32 1.0, %v405
        %v407 = vmul.f32 %v404, %v406
        %v408 = vadd.f32 %v404, %v407
        %vm409 = vweird.f32 %v404
        %v410 = vsel %vm409, %v404, %v408
        %v411 = vmul.f32 %v389, %v410
        %v412 = vmul.f32 %v391, %v410
        %v413 = vmul.f32 %v393, %v410
        %v414 = vmul.f32 %v395, %v410
        %v415 = vmul.f32 %v397, %v410
        %v416 = vmul.f32 %v399, %v410
        %v417 = vmul.f32 %v401, %v410
        %v418 = vmul.f32 %v403, %v410
        %v419 = vmul.f32 %v380, %v380
        %v420 = vmul.f32 %v381, %v381
        %v421 = vmul.f32 %v382, %v382
        %v422 = vmul.f32 %v383, %v383
        %v423 = vmul.f32 %v384, %v384
        %v424 = vmul.f32 %v385, %v385
        %v425 = vmul.f32 %v386, %v386
        %v426 = vmul.f32 %v387, %v387
        %427 = vadd.xlane.f32.xlu0 %v419
        %v428 = vpop.xlane.xlu0 %427
        %429 = vadd.xlane.f32.xlu0 %v420
        %v430 = vpop.xlane.xlu0 %429
        %431 = vadd.xlane.f32.xlu0 %v421
        %v432 = vpop.xlane.xlu0 %431
        %433 = vadd.xlane.f32.xlu0 %v422
        %v434 = vpop.xlane.xlu0 %433
        %435 = vadd.xlane.f32.xlu0 %v423
        %v436 = vpop.xlane.xlu0 %435
        %437 = vadd.xlane.f32.xlu0 %v424
        %v438 = vpop.xlane.xlu0 %437
        %439 = vadd.xlane.f32.xlu0 %v425
        %v440 = vpop.xlane.xlu0 %439
        %441 = vadd.xlane.f32.xlu0 %v426
        %v442 = vpop.xlane.xlu0 %441
        %v443 = vmul.f32 %v428, %v410
        %v444 = vmul.f32 %v430, %v410
        %v445 = vmul.f32 %v432, %v410
        %v446 = vmul.f32 %v434, %v410
        %v447 = vmul.f32 %v436, %v410
        %v448 = vmul.f32 %v438, %v410
        %v449 = vmul.f32 %v440, %v410
        %v450 = vmul.f32 %v442, %v410
        %v451 = vmul.f32 %v411, %v411
        %v452 = vmul.f32 %v412, %v412
        %v453 = vmul.f32 %v413, %v413
        %v454 = vmul.f32 %v414, %v414
        %v455 = vmul.f32 %v415, %v415
        %v456 = vmul.f32 %v416, %v416
        %v457 = vmul.f32 %v417, %v417
        %v458 = vmul.f32 %v418, %v418
        %v459 = vsub.f32 %v443, %v451
        %v460 = vsub.f32 %v444, %v452
        %v461 = vsub.f32 %v445, %v453
        %v462 = vsub.f32 %v446, %v454
        %v463 = vsub.f32 %v447, %v455
        %v464 = vsub.f32 %v448, %v456
        %v465 = vsub.f32 %v449, %v457
        %v466 = vsub.f32 %v450, %v458
        %v467 = vmax.f32 %v459, 0.0
        %v468 = vmax.f32 %v460, 0.0
        %v469 = vmax.f32 %v461, 0.0
        %v470 = vmax.f32 %v462, 0.0
        %v471 = vmax.f32 %v463, 0.0
        %v472 = vmax.f32 %v464, 0.0
        %v473 = vmax.f32 %v465, 0.0
        %v474 = vmax.f32 %v466, 0.0
        %v475 = vsub.f32 %v380, %v411
        %v476 = vsub.f32 %v381, %v412
        %v477 = vsub.f32 %v382, %v413
        %v478 = vsub.f32 %v383, %v414
        %v479 = vsub.f32 %v384, %v415
        %v480 = vsub.f32 %v385, %v416
        %v481 = vsub.f32 %v386, %v417
        %v482 = vsub.f32 %v387, %v418
        %v483 = vadd.f32 %v467, 1e-05
        %v484 = vadd.f32 %v468, 1e-05
        %v485 = vadd.f32 %v469, 1e-05
        %v486 = vadd.f32 %v470, 1e-05
        %v487 = vadd.f32 %v471, 1e-05
        %v488 = vadd.f32 %v472, 1e-05
        %v489 = vadd.f32 %v473, 1e-05
        %v490 = vadd.f32 %v474, 1e-05
        %v491 = vrsqrt.pop %v483
        %v492 = vmul.f32 %v491, %v483
        %v493 = vmul.f32 %v492, %v491
        %v494 = vmul.f32 0.5, %v493
        %v495 = vsub.f32 1.5, %v494
        %v496 = vmul.f32 %v491, %v495
        %vm497 = vweird.f32 %v483
        %vm498 = vweird.f32 %v491
        %vm499 = vmor %vm497, %vm498
        %v500 = vsel %vm499, %v491, %v496
        %v501 = vrsqrt.pop %v484
        %v502 = vmul.f32 %v501, %v484
        %v503 = vmul.f32 %v502, %v501
        %v504 = vmul.f32 0.5, %v503
        %v505 = vsub.f32 1.5, %v504
        %v506 = vmul.f32 %v501, %v505
        %vm507 = vweird.f32 %v484
        %vm508 = vweird.f32 %v501
        %vm509 = vmor %vm507, %vm508
        %v510 = vsel %vm509, %v501, %v506
        %v511 = vrsqrt.pop %v485
        %v512 = vmul.f32 %v511, %v485
        %v513 = vmul.f32 %v512, %v511
        %v514 = vmul.f32 0.5, %v513
        %v515 = vsub.f32 1.5, %v514
        %v516 = vmul.f32 %v511, %v515
        %vm517 = vweird.f32 %v485
        %vm518 = vweird.f32 %v511
        %vm519 = vmor %vm517, %vm518
        %v520 = vsel %vm519, %v511, %v516
        %v521 = vrsqrt.pop %v486
        %v522 = vmul.f32 %v521, %v486
        %v523 = vmul.f32 %v522, %v521
        %v524 = vmul.f32 0.5, %v523
        %v525 = vsub.f32 1.5, %v524
        %v526 = vmul.f32 %v521, %v525
        %vm527 = vweird.f32 %v486
        %vm528 = vweird.f32 %v521
        %vm529 = vmor %vm527, %vm528
        %v530 = vsel %vm529, %v521, %v526
        %v531 = vrsqrt.pop %v487
        %v532 = vmul.f32 %v531, %v487
        %v533 = vmul.f32 %v532, %v531
        %v534 = vmul.f32 0.5, %v533
        %v535 = vsub.f32 1.5, %v534
        %v536 = vmul.f32 %v531, %v535
        %vm537 = vweird.f32 %v487
        %vm538 = vweird.f32 %v531
        %vm539 = vmor %vm537, %vm538
        %v540 = vsel %vm539, %v531, %v536
        %v541 = vrsqrt.pop %v488
        %v542 = vmul.f32 %v541, %v488
        %v543 = vmul.f32 %v542, %v541
        %v544 = vmul.f32 0.5, %v543
        %v545 = vsub.f32 1.5, %v544
        %v546 = vmul.f32 %v541, %v545
        %vm547 = vweird.f32 %v488
        %vm548 = vweird.f32 %v541
        %vm549 = vmor %vm547, %vm548
        %v550 = vsel %vm549, %v541, %v546
        %v551 = vrsqrt.pop %v489
        %v552 = vmul.f32 %v551, %v489
        %v553 = vmul.f32 %v552, %v551
        %v554 = vmul.f32 0.5, %v553
        %v555 = vsub.f32 1.5, %v554
        %v556 = vmul.f32 %v551, %v555
        %vm557 = vweird.f32 %v489
        %vm558 = vweird.f32 %v551
        %vm559 = vmor %vm557, %vm558
        %v560 = vsel %vm559, %v551, %v556
        %v561 = vrsqrt.pop %v490
        %v562 = vmul.f32 %v561, %v490
        %v563 = vmul.f32 %v562, %v561
        %v564 = vmul.f32 0.5, %v563
        %v565 = vsub.f32 1.5, %v564
        %v566 = vmul.f32 %v561, %v565
        %vm567 = vweird.f32 %v490
        %vm568 = vweird.f32 %v561
        %vm569 = vmor %vm567, %vm568
        %v570 = vsel %vm569, %v561, %v566
        %v571 = vmul.f32 %v475, %v500
        %v572 = vmul.f32 %v476, %v510
        %v573 = vmul.f32 %v477, %v520
        %v574 = vmul.f32 %v478, %v530
        %v575 = vmul.f32 %v479, %v540
        %v576 = vmul.f32 %v480, %v550
        %v577 = vmul.f32 %v481, %v560
        %v578 = vmul.f32 %v482, %v570
        %v579 = vpack.c.bf16 %v572, %v571
        %v580 = vpack.c.bf16 %v574, %v573
        %v581 = vpack.c.bf16 %v576, %v575
        %v582 = vpack.c.bf16 %v578, %v577
        %v583 = vld [vmem:[#allocation6] sm:$0xff]
        %v584 = vld [vmem:[#allocation6 + $0x8] sm:$0xff]
        %v585 = vld [vmem:[#allocation6 + $0x10] sm:$0xff]
        %v586 = vld [vmem:[#allocation6 + $0x18] sm:$0xff]
        %v587 = vld [vmem:[#allocation6 + $0x20] sm:$0xff]
        %v588 = vld [vmem:[#allocation6 + $0x28] sm:$0xff]
        %v589 = vld [vmem:[#allocation6 + $0x30] sm:$0xff]
        %v590 = vld [vmem:[#allocation6 + $0x38] sm:$0xff]
        %v591 = vld [vmem:[#allocation6 + $0x40] sm:$0xff]
        %v592 = vld [vmem:[#allocation6 + $0x48] sm:$0xff]
        %v593 = vld [vmem:[#allocation6 + $0x50] sm:$0xff]
        %v594 = vld [vmem:[#allocation6 + $0x58] sm:$0xff]
        %v595 = vld [vmem:[#allocation6 + $0x60] sm:$0xff]
        %v596 = vld [vmem:[#allocation6 + $0x68] sm:$0xff]
        %v597 = vld [vmem:[#allocation6 + $0x70] sm:$0xff]
        %v598 = vld [vmem:[#allocation6 + $0x78] sm:$0xff]
        %v599 = vld [vmem:[%s2] sm:$0x3]
        %v601 = vperm.slane %v599, 0
        %v602 = vperm.slane %v599, 1
        %v621 = vunpack.c.l.b16 %v583
        %v622 = vunpack.c.h.b16 %v583
        %v623 = vunpack.c.l.b16 %v584
        %v624 = vunpack.c.h.b16 %v584
        %v625 = vunpack.c.l.b16 %v585
        %v626 = vunpack.c.h.b16 %v585
        %v627 = vunpack.c.l.b16 %v586
        %v628 = vunpack.c.h.b16 %v586
        %v629 = vunpack.c.l.b16 %v587
        %v630 = vunpack.c.h.b16 %v587
        %v631 = vunpack.c.l.b16 %v588
        %v632 = vunpack.c.h.b16 %v588
        %v633 = vunpack.c.l.b16 %v589
        %v634 = vunpack.c.h.b16 %v589
        %v635 = vunpack.c.l.b16 %v590
        %v636 = vunpack.c.h.b16 %v590
        %v637 = vunpack.c.l.b16 %v591
        %v638 = vunpack.c.h.b16 %v591
        %v639 = vunpack.c.l.b16 %v592
        %v640 = vunpack.c.h.b16 %v592
        %v641 = vunpack.c.l.b16 %v593
        %v642 = vunpack.c.h.b16 %v593
        %v643 = vunpack.c.l.b16 %v594
        %v644 = vunpack.c.h.b16 %v594
        %v645 = vunpack.c.l.b16 %v595
        %v646 = vunpack.c.h.b16 %v595
        %v647 = vunpack.c.l.b16 %v596
        %v648 = vunpack.c.h.b16 %v596
        %v649 = vunpack.c.l.b16 %v597
        %v650 = vunpack.c.h.b16 %v597
        %v651 = vunpack.c.l.b16 %v598
        %v652 = vunpack.c.h.b16 %v598
        %v653 = vpack.c.b16 %v623, %v621
        %v654 = vpack.c.b16 %v624, %v622
        %v655 = vpack.c.b16 %v627, %v625
        %v656 = vpack.c.b16 %v628, %v626
        %v657 = vpack.c.b16 %v631, %v629
        %v658 = vpack.c.b16 %v632, %v630
        %v659 = vpack.c.b16 %v635, %v633
        %v660 = vpack.c.b16 %v636, %v634
        %v661 = vpack.c.b16 %v639, %v637
        %v662 = vpack.c.b16 %v640, %v638
        %v663 = vpack.c.b16 %v643, %v641
        %v664 = vpack.c.b16 %v644, %v642
        %v665 = vpack.c.b16 %v647, %v645
        %v666 = vpack.c.b16 %v648, %v646
        %v667 = vpack.c.b16 %v651, %v649
        %v668 = vpack.c.b16 %v652, %v650
        %685 = vmatpush.bf16.msra.mxu0 %v667
        %686 = vmatpush.bf16.msra.mxu0 %v665
        %687 = vmatpush.bf16.msra.mxu0 %v663
        %688 = vmatpush.bf16.msra.mxu0 %v661
        %689 = vmatpush.bf16.msra.mxu0 %v659
        %690 = vmatpush.bf16.msra.mxu0 %v657
        %691 = vmatpush.bf16.msra.mxu0 %v655
        %692 = vmatpush.bf16.msra.mxu0 %v653
        %693 = vmatmul.bf16.gmra.mxu0 %v579
        %v694 = vpop.f32.mrf.mxu0
        %v695 = vadd.f32 %v601, %v694
        %v696 = vpop.f32.mrf.mxu0
        %v697 = vadd.f32 %v601, %v696
        %698 = vmatmul.bf16.gmra.mxu0 %v580
        %v699 = vpop.f32.mrf.mxu0
        %v700 = vadd.f32 %v601, %v699
        %v701 = vpop.f32.mrf.mxu0
        %v702 = vadd.f32 %v601, %v701
        %703 = vmatmul.bf16.gmra.mxu0 %v581
        %v704 = vpop.f32.mrf.mxu0
        %v705 = vadd.f32 %v601, %v704
        %v706 = vpop.f32.mrf.mxu0
        %v707 = vadd.f32 %v601, %v706
        %708 = vmatmul.bf16.gmra.mxu0 %v582
        %v709 = vpop.f32.mrf.mxu0
        %v710 = vadd.f32 %v601, %v709
        %v711 = vpop.f32.mrf.mxu0
        %v712 = vadd.f32 %v601, %v711
        %713 = vdwg.mxu0
        %714 = vmatpush.bf16.msra.mxu0 %v668
        %715 = vmatpush.bf16.msra.mxu0 %v666
        %716 = vmatpush.bf16.msra.mxu0 %v664
        %717 = vmatpush.bf16.msra.mxu0 %v662
        %718 = vmatpush.bf16.msra.mxu0 %v660
        %719 = vmatpush.bf16.msra.mxu0 %v658
        %720 = vmatpush.bf16.msra.mxu0 %v656
        %721 = vmatpush.bf16.msra.mxu0 %v654
        %722 = vmatmul.bf16.gmra.mxu0 %v579
        %v723 = vpop.f32.mrf.mxu0
        %v724 = vadd.f32 %v602, %v723
        %v725 = vpop.f32.mrf.mxu0
        %v726 = vadd.f32 %v602, %v725
        %727 = vmatmul.bf16.gmra.mxu0 %v580
        %v728 = vpop.f32.mrf.mxu0
        %v729 = vadd.f32 %v602, %v728
        %v730 = vpop.f32.mrf.mxu0
        %v731 = vadd.f32 %v602, %v730
        %732 = vmatmul.bf16.gmra.mxu0 %v581
        %v733 = vpop.f32.mrf.mxu0
        %v734 = vadd.f32 %v602, %v733
        %v735 = vpop.f32.mrf.mxu0
        %v736 = vadd.f32 %v602, %v735
        %737 = vmatmul.bf16.gmra.mxu0 %v582
        %v738 = vpop.f32.mrf.mxu0
        %v739 = vadd.f32 %v602, %v738
        %v740 = vpop.f32.mrf.mxu0
        %v741 = vadd.f32 %v602, %v740
        %742 = vdwg.mxu0
        %v743 = vadd.f32 %v695, %v724
        %744 = vadd.xlane.f32.xlu0 %v743
        %v745 = vpop.xlane.xlu0 %744
        %v746 = vadd.f32 %v697, %v726
        %747 = vadd.xlane.f32.xlu0 %v746
        %v748 = vpop.xlane.xlu0 %747
        %v749 = vadd.f32 %v700, %v729
        %750 = vadd.xlane.f32.xlu0 %v749
        %v751 = vpop.xlane.xlu0 %750
        %v752 = vadd.f32 %v702, %v731
        %753 = vadd.xlane.f32.xlu0 %v752
        %v754 = vpop.xlane.xlu0 %753
        %v755 = vadd.f32 %v705, %v734
        %756 = vadd.xlane.f32.xlu0 %v755
        %v757 = vpop.xlane.xlu0 %756
        %v758 = vadd.f32 %v707, %v736
        %759 = vadd.xlane.f32.xlu0 %v758
        %v760 = vpop.xlane.xlu0 %759
        %v761 = vadd.f32 %v710, %v739
        %762 = vadd.xlane.f32.xlu0 %v761
        %v763 = vpop.xlane.xlu0 %762
        %v764 = vadd.f32 %v712, %v741
        %765 = vadd.xlane.f32.xlu0 %v764
        %v766 = vpop.xlane.xlu0 %765
        %v767 = vrcp.pop 256.0
        %v768 = vmul.f32 256.0, %v767
        %v769 = vsub.f32 1.0, %v768
        %v770 = vmul.f32 %v767, %v769
        %v771 = vadd.f32 %v767, %v770
        %vm772 = vweird.f32 %v767
        %v773 = vsel %vm772, %v767, %v771
        %v774 = vmul.f32 %v745, %v773
        %v775 = vmul.f32 %v748, %v773
        %v776 = vmul.f32 %v751, %v773
        %v777 = vmul.f32 %v754, %v773
        %v778 = vmul.f32 %v757, %v773
        %v779 = vmul.f32 %v760, %v773
        %v780 = vmul.f32 %v763, %v773
        %v781 = vmul.f32 %v766, %v773
        %v782 = vmul.f32 %v695, %v695
        %v783 = vmul.f32 %v724, %v724
        %v784 = vmul.f32 %v697, %v697
        %v785 = vmul.f32 %v726, %v726
        %v786 = vmul.f32 %v700, %v700
        %v787 = vmul.f32 %v729, %v729
        %v788 = vmul.f32 %v702, %v702
        %v789 = vmul.f32 %v731, %v731
        %v790 = vmul.f32 %v705, %v705
        %v791 = vmul.f32 %v734, %v734
        %v792 = vmul.f32 %v707, %v707
        %v793 = vmul.f32 %v736, %v736
        %v794 = vmul.f32 %v710, %v710
        %v795 = vmul.f32 %v739, %v739
        %v796 = vmul.f32 %v712, %v712
        %v797 = vmul.f32 %v741, %v741
        %v798 = vadd.f32 %v782, %v783
        %799 = vadd.xlane.f32.xlu0 %v798
        %v800 = vpop.xlane.xlu0 %799
        %v801 = vadd.f32 %v784, %v785
        %802 = vadd.xlane.f32.xlu0 %v801
        %v803 = vpop.xlane.xlu0 %802
        %v804 = vadd.f32 %v786, %v787
        %805 = vadd.xlane.f32.xlu0 %v804
        %v806 = vpop.xlane.xlu0 %805
        %v807 = vadd.f32 %v788, %v789
        %808 = vadd.xlane.f32.xlu0 %v807
        %v809 = vpop.xlane.xlu0 %808
        %v810 = vadd.f32 %v790, %v791
        %811 = vadd.xlane.f32.xlu0 %v810
        %v812 = vpop.xlane.xlu0 %811
        %v813 = vadd.f32 %v792, %v793
        %814 = vadd.xlane.f32.xlu0 %v813
        %v815 = vpop.xlane.xlu0 %814
        %v816 = vadd.f32 %v794, %v795
        %817 = vadd.xlane.f32.xlu0 %v816
        %v818 = vpop.xlane.xlu0 %817
        %v819 = vadd.f32 %v796, %v797
        %820 = vadd.xlane.f32.xlu0 %v819
        %v821 = vpop.xlane.xlu0 %820
        %v822 = vmul.f32 %v800, %v773
        %v823 = vmul.f32 %v803, %v773
        %v824 = vmul.f32 %v806, %v773
        %v825 = vmul.f32 %v809, %v773
        %v826 = vmul.f32 %v812, %v773
        %v827 = vmul.f32 %v815, %v773
        %v828 = vmul.f32 %v818, %v773
        %v829 = vmul.f32 %v821, %v773
        %v830 = vmul.f32 %v774, %v774
        %v831 = vmul.f32 %v775, %v775
        %v832 = vmul.f32 %v776, %v776
        %v833 = vmul.f32 %v777, %v777
        %v834 = vmul.f32 %v778, %v778
        %v835 = vmul.f32 %v779, %v779
        %v836 = vmul.f32 %v780, %v780
        %v837 = vmul.f32 %v781, %v781
        %v838 = vsub.f32 %v822, %v830
        %v839 = vsub.f32 %v823, %v831
        %v840 = vsub.f32 %v824, %v832
        %v841 = vsub.f32 %v825, %v833
        %v842 = vsub.f32 %v826, %v834
        %v843 = vsub.f32 %v827, %v835
        %v844 = vsub.f32 %v828, %v836
        %v845 = vsub.f32 %v829, %v837
        %v846 = vmax.f32 %v838, 0.0
        %v847 = vmax.f32 %v839, 0.0
        %v848 = vmax.f32 %v840, 0.0
        %v849 = vmax.f32 %v841, 0.0
        %v850 = vmax.f32 %v842, 0.0
        %v851 = vmax.f32 %v843, 0.0
        %v852 = vmax.f32 %v844, 0.0
        %v853 = vmax.f32 %v845, 0.0
        %v854 = vsub.f32 %v695, %v774
        %v855 = vsub.f32 %v724, %v774
        %v856 = vsub.f32 %v697, %v775
        %v857 = vsub.f32 %v726, %v775
        %v858 = vsub.f32 %v700, %v776
        %v859 = vsub.f32 %v729, %v776
        %v860 = vsub.f32 %v702, %v777
        %v861 = vsub.f32 %v731, %v777
        %v862 = vsub.f32 %v705, %v778
        %v863 = vsub.f32 %v734, %v778
        %v864 = vsub.f32 %v707, %v779
        %v865 = vsub.f32 %v736, %v779
        %v866 = vsub.f32 %v710, %v780
        %v867 = vsub.f32 %v739, %v780
        %v868 = vsub.f32 %v712, %v781
        %v869 = vsub.f32 %v741, %v781
        %v870 = vadd.f32 %v846, 1e-05
        %v871 = vadd.f32 %v847, 1e-05
        %v872 = vadd.f32 %v848, 1e-05
        %v873 = vadd.f32 %v849, 1e-05
        %v874 = vadd.f32 %v850, 1e-05
        %v875 = vadd.f32 %v851, 1e-05
        %v876 = vadd.f32 %v852, 1e-05
        %v877 = vadd.f32 %v853, 1e-05
        %v878 = vrsqrt.pop %v870
        %v879 = vmul.f32 %v878, %v870
        %v880 = vmul.f32 %v879, %v878
        %v881 = vmul.f32 0.5, %v880
        %v882 = vsub.f32 1.5, %v881
        %v883 = vmul.f32 %v878, %v882
        %vm884 = vweird.f32 %v870
        %vm885 = vweird.f32 %v878
        %vm886 = vmor %vm884, %vm885
        %v887 = vsel %vm886, %v878, %v883
        %v888 = vrsqrt.pop %v871
        %v889 = vmul.f32 %v888, %v871
        %v890 = vmul.f32 %v889, %v888
        %v891 = vmul.f32 0.5, %v890
        %v892 = vsub.f32 1.5, %v891
        %v893 = vmul.f32 %v888, %v892
        %vm894 = vweird.f32 %v871
        %vm895 = vweird.f32 %v888
        %vm896 = vmor %vm894, %vm895
        %v897 = vsel %vm896, %v888, %v893
        %v898 = vrsqrt.pop %v872
        %v899 = vmul.f32 %v898, %v872
        %v900 = vmul.f32 %v899, %v898
        %v901 = vmul.f32 0.5, %v900
        %v902 = vsub.f32 1.5, %v901
        %v903 = vmul.f32 %v898, %v902
        %vm904 = vweird.f32 %v872
        %vm905 = vweird.f32 %v898
        %vm906 = vmor %vm904, %vm905
        %v907 = vsel %vm906, %v898, %v903
        %v908 = vrsqrt.pop %v873
        %v909 = vmul.f32 %v908, %v873
        %v910 = vmul.f32 %v909, %v908
        %v911 = vmul.f32 0.5, %v910
        %v912 = vsub.f32 1.5, %v911
        %v913 = vmul.f32 %v908, %v912
        %vm914 = vweird.f32 %v873
        %vm915 = vweird.f32 %v908
        %vm916 = vmor %vm914, %vm915
        %v917 = vsel %vm916, %v908, %v913
        %v918 = vrsqrt.pop %v874
        %v919 = vmul.f32 %v918, %v874
        %v920 = vmul.f32 %v919, %v918
        %v921 = vmul.f32 0.5, %v920
        %v922 = vsub.f32 1.5, %v921
        %v923 = vmul.f32 %v918, %v922
        %vm924 = vweird.f32 %v874
        %vm925 = vweird.f32 %v918
        %vm926 = vmor %vm924, %vm925
        %v927 = vsel %vm926, %v918, %v923
        %v928 = vrsqrt.pop %v875
        %v929 = vmul.f32 %v928, %v875
        %v930 = vmul.f32 %v929, %v928
        %v931 = vmul.f32 0.5, %v930
        %v932 = vsub.f32 1.5, %v931
        %v933 = vmul.f32 %v928, %v932
        %vm934 = vweird.f32 %v875
        %vm935 = vweird.f32 %v928
        %vm936 = vmor %vm934, %vm935
        %v937 = vsel %vm936, %v928, %v933
        %v938 = vrsqrt.pop %v876
        %v939 = vmul.f32 %v938, %v876
        %v940 = vmul.f32 %v939, %v938
        %v941 = vmul.f32 0.5, %v940
        %v942 = vsub.f32 1.5, %v941
        %v943 = vmul.f32 %v938, %v942
        %vm944 = vweird.f32 %v876
        %vm945 = vweird.f32 %v938
        %vm946 = vmor %vm944, %vm945
        %v947 = vsel %vm946, %v938, %v943
        %v948 = vrsqrt.pop %v877
        %v949 = vmul.f32 %v948, %v877
        %v950 = vmul.f32 %v949, %v948
        %v951 = vmul.f32 0.5, %v950
        %v952 = vsub.f32 1.5, %v951
        %v953 = vmul.f32 %v948, %v952
        %vm954 = vweird.f32 %v877
        %vm955 = vweird.f32 %v948
        %vm956 = vmor %vm954, %vm955
        %v957 = vsel %vm956, %v948, %v953
        %v958 = vmul.f32 %v854, %v887
        %v959 = vmul.f32 %v855, %v887
        %v960 = vmul.f32 %v856, %v897
        %v961 = vmul.f32 %v857, %v897
        %v962 = vmul.f32 %v858, %v907
        %v963 = vmul.f32 %v859, %v907
        %v964 = vmul.f32 %v860, %v917
        %v965 = vmul.f32 %v861, %v917
        %v966 = vmul.f32 %v862, %v927
        %v967 = vmul.f32 %v863, %v927
        %v968 = vmul.f32 %v864, %v937
        %v969 = vmul.f32 %v865, %v937
        %v970 = vmul.f32 %v866, %v947
        %v971 = vmul.f32 %v867, %v947
        %v972 = vmul.f32 %v868, %v957
        %v973 = vmul.f32 %v869, %v957
        %v974 = vmul.f32 %v958, 0.5
        %v975 = vmul.f32 %v959, 0.5
        %v976 = vmul.f32 %v960, 0.5
        %v977 = vmul.f32 %v961, 0.5
        %v978 = vmul.f32 %v962, 0.5
        %v979 = vmul.f32 %v963, 0.5
        %v980 = vmul.f32 %v964, 0.5
        %v981 = vmul.f32 %v965, 0.5
        %v982 = vmul.f32 %v966, 0.5
        %v983 = vmul.f32 %v967, 0.5
        %v984 = vmul.f32 %v968, 0.5
        %v985 = vmul.f32 %v969, 0.5
        %v986 = vmul.f32 %v970, 0.5
        %v987 = vmul.f32 %v971, 0.5
        %v988 = vmul.f32 %v972, 0.5
        %v989 = vmul.f32 %v973, 0.5
        %v990 = vmul.f32 %v958, 0.70710677
        %v991 = vmul.f32 %v959, 0.70710677
        %v992 = vmul.f32 %v960, 0.70710677
        %v993 = vmul.f32 %v961, 0.70710677
        %v994 = vmul.f32 %v962, 0.70710677
        %v995 = vmul.f32 %v963, 0.70710677
        %v996 = vmul.f32 %v964, 0.70710677
        %v997 = vmul.f32 %v965, 0.70710677
        %v998 = vmul.f32 %v966, 0.70710677
        %v999 = vmul.f32 %v967, 0.70710677
        %v1000 = vmul.f32 %v968, 0.70710677
        %v1001 = vmul.f32 %v969, 0.70710677
        %v1002 = vmul.f32 %v970, 0.70710677
        %v1003 = vmul.f32 %v971, 0.70710677
        %v1004 = vmul.f32 %v972, 0.70710677
        %v1005 = vmul.f32 %v973, 0.70710677
        %v1006 = vmul.f32 %v990, %v990
        %v1007 = vmin.f32 16.0, %v1006
        %v1008 = vmul.f32 %v1007, 2.1237322e-06
        %v1009 = vadd.f32 %v1008, 0.00028619796
        %v1010 = vmul.f32 %v1007, %v1009
        %v1011 = vadd.f32 %v1010, 0.0036580483
        %v1012 = vmul.f32 %v1007, %v1011
        %v1013 = vadd.f32 %v1012, 0.05243302
        %v1014 = vmul.f32 %v1007, %v1013
        %v1015 = vadd.f32 %v1014, 0.18741608
        %v1016 = vmul.f32 %v1007, %v1015
        %v1017 = vadd.f32 %v1016, 1.1283791
        %v1018 = vmul.f32 %v990, %v1017
        %v1019 = vmul.f32 %v1007, 3.8918573e-05
        %v1020 = vadd.f32 %v1019, 0.001143296
        %v1021 = vmul.f32 %v1007, %v1020
        %v1022 = vadd.f32 %v1021, 0.014752088
        %v1023 = vmul.f32 %v1007, %v1022
        %v1024 = vadd.f32 %v1023, 0.112945676
        %v1025 = vmul.f32 %v1007, %v1024
        %v1026 = vadd.f32 %v1025, 0.4994258
        %v1027 = vmul.f32 %v1007, %v1026
        %v1028 = vadd.f32 %v1027, 1.0
        %v1029 = vrcp.pop %v1028
        %v1030 = vmul.f32 %v1028, %v1029
        %v1031 = vsub.f32 1.0, %v1030
        %v1032 = vmul.f32 %v1029, %v1031
        %v1033 = vadd.f32 %v1029, %v1032
        %vm1034 = vweird.f32 %v1028
        %vm1035 = vweird.f32 %v1029
        %vm1036 = vmor %vm1034, %vm1035
        %v1037 = vsel %vm1036, %v1029, %v1033
        %v1038 = vand.u32 2147483647, %v1028
        %vm1039 = vcmp.eq.f32.partialorder %v1038, 8.507059e+37
        %v1040 = vand.u32 %v1028, 2147483648
        %v1041 = vor.u32 1.1754944e-38, %v1040
        %v1042 = vsel %vm1039, %v1041, %v1037
        %v1043 = vmul.f32 %v1018, %v1042
        %v1044 = vmin.f32 %v1043, 1.0
        %v1045 = vmax.f32 %v1044, -1.0
        %v1046 = vmul.f32 %v991, %v991
        %v1047 = vmin.f32 16.0, %v1046
        %v1048 = vmul.f32 %v1047, 2.1237322e-06
        %v1049 = vadd.f32 %v1048, 0.00028619796
        %v1050 = vmul.f32 %v1047, %v1049
        %v1051 = vadd.f32 %v1050, 0.0036580483
        %v1052 = vmul.f32 %v1047, %v1051
        %v1053 = vadd.f32 %v1052, 0.05243302
        %v1054 = vmul.f32 %v1047, %v1053
        %v1055 = vadd.f32 %v1054, 0.18741608
        %v1056 = vmul.f32 %v1047, %v1055
        %v1057 = vadd.f32 %v1056, 1.1283791
        %v1058 = vmul.f32 %v991, %v1057
        %v1059 = vmul.f32 %v1047, 3.8918573e-05
        %v1060 = vadd.f32 %v1059, 0.001143296
        %v1061 = vmul.f32 %v1047, %v1060
        %v1062 = vadd.f32 %v1061, 0.014752088
        %v1063 = vmul.f32 %v1047, %v1062
        %v1064 = vadd.f32 %v1063, 0.112945676
        %v1065 = vmul.f32 %v1047, %v1064
        %v1066 = vadd.f32 %v1065, 0.4994258
        %v1067 = vmul.f32 %v1047, %v1066
        %v1068 = vadd.f32 %v1067, 1.0
        %v1069 = vrcp.pop %v1068
        %v1070 = vmul.f32 %v1068, %v1069
        %v1071 = vsub.f32 1.0, %v1070
        %v1072 = vmul.f32 %v1069, %v1071
        %v1073 = vadd.f32 %v1069, %v1072
        %vm1074 = vweird.f32 %v1068
        %vm1075 = vweird.f32 %v1069
        %vm1076 = vmor %vm1074, %vm1075
        %v1077 = vsel %vm1076, %v1069, %v1073
        %v1078 = vand.u32 2147483647, %v1068
        %vm1079 = vcmp.eq.f32.partialorder %v1078, 8.507059e+37
        %v1080 = vand.u32 %v1068, 2147483648
        %v1081 = vor.u32 1.1754944e-38, %v1080
        %v1082 = vsel %vm1079, %v1081, %v1077
        %v1083 = vmul.f32 %v1058, %v1082
        %v1084 = vmin.f32 %v1083, 1.0
        %v1085 = vmax.f32 %v1084, -1.0
        %v1086 = vmul.f32 %v992, %v992
        %v1087 = vmin.f32 16.0, %v1086
        %v1088 = vmul.f32 %v1087, 2.1237322e-06
        %v1089 = vadd.f32 %v1088, 0.00028619796
        %v1090 = vmul.f32 %v1087, %v1089
        %v1091 = vadd.f32 %v1090, 0.0036580483
        %v1092 = vmul.f32 %v1087, %v1091
        %v1093 = vadd.f32 %v1092, 0.05243302
        %v1094 = vmul.f32 %v1087, %v1093
        %v1095 = vadd.f32 %v1094, 0.18741608
        %v1096 = vmul.f32 %v1087, %v1095
        %v1097 = vadd.f32 %v1096, 1.1283791
        %v1098 = vmul.f32 %v992, %v1097
        %v1099 = vmul.f32 %v1087, 3.8918573e-05
        %v1100 = vadd.f32 %v1099, 0.001143296
        %v1101 = vmul.f32 %v1087, %v1100
        %v1102 = vadd.f32 %v1101, 0.014752088
        %v1103 = vmul.f32 %v1087, %v1102
        %v1104 = vadd.f32 %v1103, 0.112945676
        %v1105 = vmul.f32 %v1087, %v1104
        %v1106 = vadd.f32 %v1105, 0.4994258
        %v1107 = vmul.f32 %v1087, %v1106
        %v1108 = vadd.f32 %v1107, 1.0
        %v1109 = vrcp.pop %v1108
        %v1110 = vmul.f32 %v1108, %v1109
        %v1111 = vsub.f32 1.0, %v1110
        %v1112 = vmul.f32 %v1109, %v1111
        %v1113 = vadd.f32 %v1109, %v1112
        %vm1114 = vweird.f32 %v1108
        %vm1115 = vweird.f32 %v1109
        %vm1116 = vmor %vm1114, %vm1115
        %v1117 = vsel %vm1116, %v1109, %v1113
        %v1118 = vand.u32 2147483647, %v1108
        %vm1119 = vcmp.eq.f32.partialorder %v1118, 8.507059e+37
        %v1120 = vand.u32 %v1108, 2147483648
        %v1121 = vor.u32 1.1754944e-38, %v1120
        %v1122 = vsel %vm1119, %v1121, %v1117
        %v1123 = vmul.f32 %v1098, %v1122
        %v1124 = vmin.f32 %v1123, 1.0
        %v1125 = vmax.f32 %v1124, -1.0
        %v1126 = vmul.f32 %v993, %v993
        %v1127 = vmin.f32 16.0, %v1126
        %v1128 = vmul.f32 %v1127, 2.1237322e-06
        %v1129 = vadd.f32 %v1128, 0.00028619796
        %v1130 = vmul.f32 %v1127, %v1129
        %v1131 = vadd.f32 %v1130, 0.0036580483
        %v1132 = vmul.f32 %v1127, %v1131
        %v1133 = vadd.f32 %v1132, 0.05243302
        %v1134 = vmul.f32 %v1127, %v1133
        %v1135 = vadd.f32 %v1134, 0.18741608
        %v1136 = vmul.f32 %v1127, %v1135
        %v1137 = vadd.f32 %v1136, 1.1283791
        %v1138 = vmul.f32 %v993, %v1137
        %v1139 = vmul.f32 %v1127, 3.8918573e-05
        %v1140 = vadd.f32 %v1139, 0.001143296
        %v1141 = vmul.f32 %v1127, %v1140
        %v1142 = vadd.f32 %v1141, 0.014752088
        %v1143 = vmul.f32 %v1127, %v1142
        %v1144 = vadd.f32 %v1143, 0.112945676
        %v1145 = vmul.f32 %v1127, %v1144
        %v1146 = vadd.f32 %v1145, 0.4994258
        %v1147 = vmul.f32 %v1127, %v1146
        %v1148 = vadd.f32 %v1147, 1.0
        %v1149 = vrcp.pop %v1148
        %v1150 = vmul.f32 %v1148, %v1149
        %v1151 = vsub.f32 1.0, %v1150
        %v1152 = vmul.f32 %v1149, %v1151
        %v1153 = vadd.f32 %v1149, %v1152
        %vm1154 = vweird.f32 %v1148
        %vm1155 = vweird.f32 %v1149
        %vm1156 = vmor %vm1154, %vm1155
        %v1157 = vsel %vm1156, %v1149, %v1153
        %v1158 = vand.u32 2147483647, %v1148
        %vm1159 = vcmp.eq.f32.partialorder %v1158, 8.507059e+37
        %v1160 = vand.u32 %v1148, 2147483648
        %v1161 = vor.u32 1.1754944e-38, %v1160
        %v1162 = vsel %vm1159, %v1161, %v1157
        %v1163 = vmul.f32 %v1138, %v1162
        %v1164 = vmin.f32 %v1163, 1.0
        %v1165 = vmax.f32 %v1164, -1.0
        %v1166 = vmul.f32 %v994, %v994
        %v1167 = vmin.f32 16.0, %v1166
        %v1168 = vmul.f32 %v1167, 2.1237322e-06
        %v1169 = vadd.f32 %v1168, 0.00028619796
        %v1170 = vmul.f32 %v1167, %v1169
        %v1171 = vadd.f32 %v1170, 0.0036580483
        %v1172 = vmul.f32 %v1167, %v1171
        %v1173 = vadd.f32 %v1172, 0.05243302
        %v1174 = vmul.f32 %v1167, %v1173
        %v1175 = vadd.f32 %v1174, 0.18741608
        %v1176 = vmul.f32 %v1167, %v1175
        %v1177 = vadd.f32 %v1176, 1.1283791
        %v1178 = vmul.f32 %v994, %v1177
        %v1179 = vmul.f32 %v1167, 3.8918573e-05
        %v1180 = vadd.f32 %v1179, 0.001143296
        %v1181 = vmul.f32 %v1167, %v1180
        %v1182 = vadd.f32 %v1181, 0.014752088
        %v1183 = vmul.f32 %v1167, %v1182
        %v1184 = vadd.f32 %v1183, 0.112945676
        %v1185 = vmul.f32 %v1167, %v1184
        %v1186 = vadd.f32 %v1185, 0.4994258
        %v1187 = vmul.f32 %v1167, %v1186
        %v1188 = vadd.f32 %v1187, 1.0
        %v1189 = vrcp.pop %v1188
        %v1190 = vmul.f32 %v1188, %v1189
        %v1191 = vsub.f32 1.0, %v1190
        %v1192 = vmul.f32 %v1189, %v1191
        %v1193 = vadd.f32 %v1189, %v1192
        %vm1194 = vweird.f32 %v1188
        %vm1195 = vweird.f32 %v1189
        %vm1196 = vmor %vm1194, %vm1195
        %v1197 = vsel %vm1196, %v1189, %v1193
        %v1198 = vand.u32 2147483647, %v1188
        %vm1199 = vcmp.eq.f32.partialorder %v1198, 8.507059e+37
        %v1200 = vand.u32 %v1188, 2147483648
        %v1201 = vor.u32 1.1754944e-38, %v1200
        %v1202 = vsel %vm1199, %v1201, %v1197
        %v1203 = vmul.f32 %v1178, %v1202
        %v1204 = vmin.f32 %v1203, 1.0
        %v1205 = vmax.f32 %v1204, -1.0
        %v1206 = vmul.f32 %v995, %v995
        %v1207 = vmin.f32 16.0, %v1206
        %v1208 = vmul.f32 %v1207, 2.1237322e-06
        %v1209 = vadd.f32 %v1208, 0.00028619796
        %v1210 = vmul.f32 %v1207, %v1209
        %v1211 = vadd.f32 %v1210, 0.0036580483
        %v1212 = vmul.f32 %v1207, %v1211
        %v1213 = vadd.f32 %v1212, 0.05243302
        %v1214 = vmul.f32 %v1207, %v1213
        %v1215 = vadd.f32 %v1214, 0.18741608
        %v1216 = vmul.f32 %v1207, %v1215
        %v1217 = vadd.f32 %v1216, 1.1283791
        %v1218 = vmul.f32 %v995, %v1217
        %v1219 = vmul.f32 %v1207, 3.8918573e-05
        %v1220 = vadd.f32 %v1219, 0.001143296
        %v1221 = vmul.f32 %v1207, %v1220
        %v1222 = vadd.f32 %v1221, 0.014752088
        %v1223 = vmul.f32 %v1207, %v1222
        %v1224 = vadd.f32 %v1223, 0.112945676
        %v1225 = vmul.f32 %v1207, %v1224
        %v1226 = vadd.f32 %v1225, 0.4994258
        %v1227 = vmul.f32 %v1207, %v1226
        %v1228 = vadd.f32 %v1227, 1.0
        %v1229 = vrcp.pop %v1228
        %v1230 = vmul.f32 %v1228, %v1229
        %v1231 = vsub.f32 1.0, %v1230
        %v1232 = vmul.f32 %v1229, %v1231
        %v1233 = vadd.f32 %v1229, %v1232
        %vm1234 = vweird.f32 %v1228
        %vm1235 = vweird.f32 %v1229
        %vm1236 = vmor %vm1234, %vm1235
        %v1237 = vsel %vm1236, %v1229, %v1233
        %v1238 = vand.u32 2147483647, %v1228
        %vm1239 = vcmp.eq.f32.partialorder %v1238, 8.507059e+37
        %v1240 = vand.u32 %v1228, 2147483648
        %v1241 = vor.u32 1.1754944e-38, %v1240
        %v1242 = vsel %vm1239, %v1241, %v1237
        %v1243 = vmul.f32 %v1218, %v1242
        %v1244 = vmin.f32 %v1243, 1.0
        %v1245 = vmax.f32 %v1244, -1.0
        %v1246 = vmul.f32 %v996, %v996
        %v1247 = vmin.f32 16.0, %v1246
        %v1248 = vmul.f32 %v1247, 2.1237322e-06
        %v1249 = vadd.f32 %v1248, 0.00028619796
        %v1250 = vmul.f32 %v1247, %v1249
        %v1251 = vadd.f32 %v1250, 0.0036580483
        %v1252 = vmul.f32 %v1247, %v1251
        %v1253 = vadd.f32 %v1252, 0.05243302
        %v1254 = vmul.f32 %v1247, %v1253
        %v1255 = vadd.f32 %v1254, 0.18741608
        %v1256 = vmul.f32 %v1247, %v1255
        %v1257 = vadd.f32 %v1256, 1.1283791
        %v1258 = vmul.f32 %v996, %v1257
        %v1259 = vmul.f32 %v1247, 3.8918573e-05
        %v1260 = vadd.f32 %v1259, 0.001143296
        %v1261 = vmul.f32 %v1247, %v1260
        %v1262 = vadd.f32 %v1261, 0.014752088
        %v1263 = vmul.f32 %v1247, %v1262
        %v1264 = vadd.f32 %v1263, 0.112945676
        %v1265 = vmul.f32 %v1247, %v1264
        %v1266 = vadd.f32 %v1265, 0.4994258
        %v1267 = vmul.f32 %v1247, %v1266
        %v1268 = vadd.f32 %v1267, 1.0
        %v1269 = vrcp.pop %v1268
        %v1270 = vmul.f32 %v1268, %v1269
        %v1271 = vsub.f32 1.0, %v1270
        %v1272 = vmul.f32 %v1269, %v1271
        %v1273 = vadd.f32 %v1269, %v1272
        %vm1274 = vweird.f32 %v1268
        %vm1275 = vweird.f32 %v1269
        %vm1276 = vmor %vm1274, %vm1275
        %v1277 = vsel %vm1276, %v1269, %v1273
        %v1278 = vand.u32 2147483647, %v1268
        %vm1279 = vcmp.eq.f32.partialorder %v1278, 8.507059e+37
        %v1280 = vand.u32 %v1268, 2147483648
        %v1281 = vor.u32 1.1754944e-38, %v1280
        %v1282 = vsel %vm1279, %v1281, %v1277
        %v1283 = vmul.f32 %v1258, %v1282
        %v1284 = vmin.f32 %v1283, 1.0
        %v1285 = vmax.f32 %v1284, -1.0
        %v1286 = vmul.f32 %v997, %v997
        %v1287 = vmin.f32 16.0, %v1286
        %v1288 = vmul.f32 %v1287, 2.1237322e-06
        %v1289 = vadd.f32 %v1288, 0.00028619796
        %v1290 = vmul.f32 %v1287, %v1289
        %v1291 = vadd.f32 %v1290, 0.0036580483
        %v1292 = vmul.f32 %v1287, %v1291
        %v1293 = vadd.f32 %v1292, 0.05243302
        %v1294 = vmul.f32 %v1287, %v1293
        %v1295 = vadd.f32 %v1294, 0.18741608
        %v1296 = vmul.f32 %v1287, %v1295
        %v1297 = vadd.f32 %v1296, 1.1283791
        %v1298 = vmul.f32 %v997, %v1297
        %v1299 = vmul.f32 %v1287, 3.8918573e-05
        %v1300 = vadd.f32 %v1299, 0.001143296
        %v1301 = vmul.f32 %v1287, %v1300
        %v1302 = vadd.f32 %v1301, 0.014752088
        %v1303 = vmul.f32 %v1287, %v1302
        %v1304 = vadd.f32 %v1303, 0.112945676
        %v1305 = vmul.f32 %v1287, %v1304
        %v1306 = vadd.f32 %v1305, 0.4994258
        %v1307 = vmul.f32 %v1287, %v1306
        %v1308 = vadd.f32 %v1307, 1.0
        %v1309 = vrcp.pop %v1308
        %v1310 = vmul.f32 %v1308, %v1309
        %v1311 = vsub.f32 1.0, %v1310
        %v1312 = vmul.f32 %v1309, %v1311
        %v1313 = vadd.f32 %v1309, %v1312
        %vm1314 = vweird.f32 %v1308
        %vm1315 = vweird.f32 %v1309
        %vm1316 = vmor %vm1314, %vm1315
        %v1317 = vsel %vm1316, %v1309, %v1313
        %v1318 = vand.u32 2147483647, %v1308
        %vm1319 = vcmp.eq.f32.partialorder %v1318, 8.507059e+37
        %v1320 = vand.u32 %v1308, 2147483648
        %v1321 = vor.u32 1.1754944e-38, %v1320
        %v1322 = vsel %vm1319, %v1321, %v1317
        %v1323 = vmul.f32 %v1298, %v1322
        %v1324 = vmin.f32 %v1323, 1.0
        %v1325 = vmax.f32 %v1324, -1.0
        %v1326 = vmul.f32 %v998, %v998
        %v1327 = vmin.f32 16.0, %v1326
        %v1328 = vmul.f32 %v1327, 2.1237322e-06
        %v1329 = vadd.f32 %v1328, 0.00028619796
        %v1330 = vmul.f32 %v1327, %v1329
        %v1331 = vadd.f32 %v1330, 0.0036580483
        %v1332 = vmul.f32 %v1327, %v1331
        %v1333 = vadd.f32 %v1332, 0.05243302
        %v1334 = vmul.f32 %v1327, %v1333
        %v1335 = vadd.f32 %v1334, 0.18741608
        %v1336 = vmul.f32 %v1327, %v1335
        %v1337 = vadd.f32 %v1336, 1.1283791
        %v1338 = vmul.f32 %v998, %v1337
        %v1339 = vmul.f32 %v1327, 3.8918573e-05
        %v1340 = vadd.f32 %v1339, 0.001143296
        %v1341 = vmul.f32 %v1327, %v1340
        %v1342 = vadd.f32 %v1341, 0.014752088
        %v1343 = vmul.f32 %v1327, %v1342
        %v1344 = vadd.f32 %v1343, 0.112945676
        %v1345 = vmul.f32 %v1327, %v1344
        %v1346 = vadd.f32 %v1345, 0.4994258
        %v1347 = vmul.f32 %v1327, %v1346
        %v1348 = vadd.f32 %v1347, 1.0
        %v1349 = vrcp.pop %v1348
        %v1350 = vmul.f32 %v1348, %v1349
        %v1351 = vsub.f32 1.0, %v1350
        %v1352 = vmul.f32 %v1349, %v1351
        %v1353 = vadd.f32 %v1349, %v1352
        %vm1354 = vweird.f32 %v1348
        %vm1355 = vweird.f32 %v1349
        %vm1356 = vmor %vm1354, %vm1355
        %v1357 = vsel %vm1356, %v1349, %v1353
        %v1358 = vand.u32 2147483647, %v1348
        %vm1359 = vcmp.eq.f32.partialorder %v1358, 8.507059e+37
        %v1360 = vand.u32 %v1348, 2147483648
        %v1361 = vor.u32 1.1754944e-38, %v1360
        %v1362 = vsel %vm1359, %v1361, %v1357
        %v1363 = vmul.f32 %v1338, %v1362
        %v1364 = vmin.f32 %v1363, 1.0
        %v1365 = vmax.f32 %v1364, -1.0
        %v1366 = vmul.f32 %v999, %v999
        %v1367 = vmin.f32 16.0, %v1366
        %v1368 = vmul.f32 %v1367, 2.1237322e-06
        %v1369 = vadd.f32 %v1368, 0.00028619796
        %v1370 = vmul.f32 %v1367, %v1369
        %v1371 = vadd.f32 %v1370, 0.0036580483
        %v1372 = vmul.f32 %v1367, %v1371
        %v1373 = vadd.f32 %v1372, 0.05243302
        %v1374 = vmul.f32 %v1367, %v1373
        %v1375 = vadd.f32 %v1374, 0.18741608
        %v1376 = vmul.f32 %v1367, %v1375
        %v1377 = vadd.f32 %v1376, 1.1283791
        %v1378 = vmul.f32 %v999, %v1377
        %v1379 = vmul.f32 %v1367, 3.8918573e-05
        %v1380 = vadd.f32 %v1379, 0.001143296
        %v1381 = vmul.f32 %v1367, %v1380
        %v1382 = vadd.f32 %v1381, 0.014752088
        %v1383 = vmul.f32 %v1367, %v1382
        %v1384 = vadd.f32 %v1383, 0.112945676
        %v1385 = vmul.f32 %v1367, %v1384
        %v1386 = vadd.f32 %v1385, 0.4994258
        %v1387 = vmul.f32 %v1367, %v1386
        %v1388 = vadd.f32 %v1387, 1.0
        %v1389 = vrcp.pop %v1388
        %v1390 = vmul.f32 %v1388, %v1389
        %v1391 = vsub.f32 1.0, %v1390
        %v1392 = vmul.f32 %v1389, %v1391
        %v1393 = vadd.f32 %v1389, %v1392
        %vm1394 = vweird.f32 %v1388
        %vm1395 = vweird.f32 %v1389
        %vm1396 = vmor %vm1394, %vm1395
        %v1397 = vsel %vm1396, %v1389, %v1393
        %v1398 = vand.u32 2147483647, %v1388
        %vm1399 = vcmp.eq.f32.partialorder %v1398, 8.507059e+37
        %v1400 = vand.u32 %v1388, 2147483648
        %v1401 = vor.u32 1.1754944e-38, %v1400
        %v1402 = vsel %vm1399, %v1401, %v1397
        %v1403 = vmul.f32 %v1378, %v1402
        %v1404 = vmin.f32 %v1403, 1.0
        %v1405 = vmax.f32 %v1404, -1.0
        %v1406 = vmul.f32 %v1000, %v1000
        %v1407 = vmin.f32 16.0, %v1406
        %v1408 = vmul.f32 %v1407, 2.1237322e-06
        %v1409 = vadd.f32 %v1408, 0.00028619796
        %v1410 = vmul.f32 %v1407, %v1409
        %v1411 = vadd.f32 %v1410, 0.0036580483
        %v1412 = vmul.f32 %v1407, %v1411
        %v1413 = vadd.f32 %v1412, 0.05243302
        %v1414 = vmul.f32 %v1407, %v1413
        %v1415 = vadd.f32 %v1414, 0.18741608
        %v1416 = vmul.f32 %v1407, %v1415
        %v1417 = vadd.f32 %v1416, 1.1283791
        %v1418 = vmul.f32 %v1000, %v1417
        %v1419 = vmul.f32 %v1407, 3.8918573e-05
        %v1420 = vadd.f32 %v1419, 0.001143296
        %v1421 = vmul.f32 %v1407, %v1420
        %v1422 = vadd.f32 %v1421, 0.014752088
        %v1423 = vmul.f32 %v1407, %v1422
        %v1424 = vadd.f32 %v1423, 0.112945676
        %v1425 = vmul.f32 %v1407, %v1424
        %v1426 = vadd.f32 %v1425, 0.4994258
        %v1427 = vmul.f32 %v1407, %v1426
        %v1428 = vadd.f32 %v1427, 1.0
        %v1429 = vrcp.pop %v1428
        %v1430 = vmul.f32 %v1428, %v1429
        %v1431 = vsub.f32 1.0, %v1430
        %v1432 = vmul.f32 %v1429, %v1431
        %v1433 = vadd.f32 %v1429, %v1432
        %vm1434 = vweird.f32 %v1428
        %vm1435 = vweird.f32 %v1429
        %vm1436 = vmor %vm1434, %vm1435
        %v1437 = vsel %vm1436, %v1429, %v1433
        %v1438 = vand.u32 2147483647, %v1428
        %vm1439 = vcmp.eq.f32.partialorder %v1438, 8.507059e+37
        %v1440 = vand.u32 %v1428, 2147483648
        %v1441 = vor.u32 1.1754944e-38, %v1440
        %v1442 = vsel %vm1439, %v1441, %v1437
        %v1443 = vmul.f32 %v1418, %v1442
        %v1444 = vmin.f32 %v1443, 1.0
        %v1445 = vmax.f32 %v1444, -1.0
        %v1446 = vmul.f32 %v1001, %v1001
        %v1447 = vmin.f32 16.0, %v1446
        %v1448 = vmul.f32 %v1447, 2.1237322e-06
        %v1449 = vadd.f32 %v1448, 0.00028619796
        %v1450 = vmul.f32 %v1447, %v1449
        %v1451 = vadd.f32 %v1450, 0.0036580483
        %v1452 = vmul.f32 %v1447, %v1451
        %v1453 = vadd.f32 %v1452, 0.05243302
        %v1454 = vmul.f32 %v1447, %v1453
        %v1455 = vadd.f32 %v1454, 0.18741608
        %v1456 = vmul.f32 %v1447, %v1455
        %v1457 = vadd.f32 %v1456, 1.1283791
        %v1458 = vmul.f32 %v1001, %v1457
        %v1459 = vmul.f32 %v1447, 3.8918573e-05
        %v1460 = vadd.f32 %v1459, 0.001143296
        %v1461 = vmul.f32 %v1447, %v1460
        %v1462 = vadd.f32 %v1461, 0.014752088
        %v1463 = vmul.f32 %v1447, %v1462
        %v1464 = vadd.f32 %v1463, 0.112945676
        %v1465 = vmul.f32 %v1447, %v1464
        %v1466 = vadd.f32 %v1465, 0.4994258
        %v1467 = vmul.f32 %v1447, %v1466
        %v1468 = vadd.f32 %v1467, 1.0
        %v1469 = vrcp.pop %v1468
        %v1470 = vmul.f32 %v1468, %v1469
        %v1471 = vsub.f32 1.0, %v1470
        %v1472 = vmul.f32 %v1469, %v1471
        %v1473 = vadd.f32 %v1469, %v1472
        %vm1474 = vweird.f32 %v1468
        %vm1475 = vweird.f32 %v1469
        %vm1476 = vmor %vm1474, %vm1475
        %v1477 = vsel %vm1476, %v1469, %v1473
        %v1478 = vand.u32 2147483647, %v1468
        %vm1479 = vcmp.eq.f32.partialorder %v1478, 8.507059e+37
        %v1480 = vand.u32 %v1468, 2147483648
        %v1481 = vor.u32 1.1754944e-38, %v1480
        %v1482 = vsel %vm1479, %v1481, %v1477
        %v1483 = vmul.f32 %v1458, %v1482
        %v1484 = vmin.f32 %v1483, 1.0
        %v1485 = vmax.f32 %v1484, -1.0
        %v1486 = vmul.f32 %v1002, %v1002
        %v1487 = vmin.f32 16.0, %v1486
        %v1488 = vmul.f32 %v1487, 2.1237322e-06
        %v1489 = vadd.f32 %v1488, 0.00028619796
        %v1490 = vmul.f32 %v1487, %v1489
        %v1491 = vadd.f32 %v1490, 0.0036580483
        %v1492 = vmul.f32 %v1487, %v1491
        %v1493 = vadd.f32 %v1492, 0.05243302
        %v1494 = vmul.f32 %v1487, %v1493
        %v1495 = vadd.f32 %v1494, 0.18741608
        %v1496 = vmul.f32 %v1487, %v1495
        %v1497 = vadd.f32 %v1496, 1.1283791
        %v1498 = vmul.f32 %v1002, %v1497
        %v1499 = vmul.f32 %v1487, 3.8918573e-05
        %v1500 = vadd.f32 %v1499, 0.001143296
        %v1501 = vmul.f32 %v1487, %v1500
        %v1502 = vadd.f32 %v1501, 0.014752088
        %v1503 = vmul.f32 %v1487, %v1502
        %v1504 = vadd.f32 %v1503, 0.112945676
        %v1505 = vmul.f32 %v1487, %v1504
        %v1506 = vadd.f32 %v1505, 0.4994258
        %v1507 = vmul.f32 %v1487, %v1506
        %v1508 = vadd.f32 %v1507, 1.0
        %v1509 = vrcp.pop %v1508
        %v1510 = vmul.f32 %v1508, %v1509
        %v1511 = vsub.f32 1.0, %v1510
        %v1512 = vmul.f32 %v1509, %v1511
        %v1513 = vadd.f32 %v1509, %v1512
        %vm1514 = vweird.f32 %v1508
        %vm1515 = vweird.f32 %v1509
        %vm1516 = vmor %vm1514, %vm1515
        %v1517 = vsel %vm1516, %v1509, %v1513
        %v1518 = vand.u32 2147483647, %v1508
        %vm1519 = vcmp.eq.f32.partialorder %v1518, 8.507059e+37
        %v1520 = vand.u32 %v1508, 2147483648
        %v1521 = vor.u32 1.1754944e-38, %v1520
        %v1522 = vsel %vm1519, %v1521, %v1517
        %v1523 = vmul.f32 %v1498, %v1522
        %v1524 = vmin.f32 %v1523, 1.0
        %v1525 = vmax.f32 %v1524, -1.0
        %v1526 = vmul.f32 %v1003, %v1003
        %v1527 = vmin.f32 16.0, %v1526
        %v1528 = vmul.f32 %v1527, 2.1237322e-06
        %v1529 = vadd.f32 %v1528, 0.00028619796
        %v1530 = vmul.f32 %v1527, %v1529
        %v1531 = vadd.f32 %v1530, 0.0036580483
        %v1532 = vmul.f32 %v1527, %v1531
        %v1533 = vadd.f32 %v1532, 0.05243302
        %v1534 = vmul.f32 %v1527, %v1533
        %v1535 = vadd.f32 %v1534, 0.18741608
        %v1536 = vmul.f32 %v1527, %v1535
        %v1537 = vadd.f32 %v1536, 1.1283791
        %v1538 = vmul.f32 %v1003, %v1537
        %v1539 = vmul.f32 %v1527, 3.8918573e-05
        %v1540 = vadd.f32 %v1539, 0.001143296
        %v1541 = vmul.f32 %v1527, %v1540
        %v1542 = vadd.f32 %v1541, 0.014752088
        %v1543 = vmul.f32 %v1527, %v1542
        %v1544 = vadd.f32 %v1543, 0.112945676
        %v1545 = vmul.f32 %v1527, %v1544
        %v1546 = vadd.f32 %v1545, 0.4994258
        %v1547 = vmul.f32 %v1527, %v1546
        %v1548 = vadd.f32 %v1547, 1.0
        %v1549 = vrcp.pop %v1548
        %v1550 = vmul.f32 %v1548, %v1549
        %v1551 = vsub.f32 1.0, %v1550
        %v1552 = vmul.f32 %v1549, %v1551
        %v1553 = vadd.f32 %v1549, %v1552
        %vm1554 = vweird.f32 %v1548
        %vm1555 = vweird.f32 %v1549
        %vm1556 = vmor %vm1554, %vm1555
        %v1557 = vsel %vm1556, %v1549, %v1553
        %v1558 = vand.u32 2147483647, %v1548
        %vm1559 = vcmp.eq.f32.partialorder %v1558, 8.507059e+37
        %v1560 = vand.u32 %v1548, 2147483648
        %v1561 = vor.u32 1.1754944e-38, %v1560
        %v1562 = vsel %vm1559, %v1561, %v1557
        %v1563 = vmul.f32 %v1538, %v1562
        %v1564 = vmin.f32 %v1563, 1.0
        %v1565 = vmax.f32 %v1564, -1.0
        %v1566 = vmul.f32 %v1004, %v1004
        %v1567 = vmin.f32 16.0, %v1566
        %v1568 = vmul.f32 %v1567, 2.1237322e-06
        %v1569 = vadd.f32 %v1568, 0.00028619796
        %v1570 = vmul.f32 %v1567, %v1569
        %v1571 = vadd.f32 %v1570, 0.0036580483
        %v1572 = vmul.f32 %v1567, %v1571
        %v1573 = vadd.f32 %v1572, 0.05243302
        %v1574 = vmul.f32 %v1567, %v1573
        %v1575 = vadd.f32 %v1574, 0.18741608
        %v1576 = vmul.f32 %v1567, %v1575
        %v1577 = vadd.f32 %v1576, 1.1283791
        %v1578 = vmul.f32 %v1004, %v1577
        %v1579 = vmul.f32 %v1567, 3.8918573e-05
        %v1580 = vadd.f32 %v1579, 0.001143296
        %v1581 = vmul.f32 %v1567, %v1580
        %v1582 = vadd.f32 %v1581, 0.014752088
        %v1583 = vmul.f32 %v1567, %v1582
        %v1584 = vadd.f32 %v1583, 0.112945676
        %v1585 = vmul.f32 %v1567, %v1584
        %v1586 = vadd.f32 %v1585, 0.4994258
        %v1587 = vmul.f32 %v1567, %v1586
        %v1588 = vadd.f32 %v1587, 1.0
        %v1589 = vrcp.pop %v1588
        %v1590 = vmul.f32 %v1588, %v1589
        %v1591 = vsub.f32 1.0, %v1590
        %v1592 = vmul.f32 %v1589, %v1591
        %v1593 = vadd.f32 %v1589, %v1592
        %vm1594 = vweird.f32 %v1588
        %vm1595 = vweird.f32 %v1589
        %vm1596 = vmor %vm1594, %vm1595
        %v1597 = vsel %vm1596, %v1589, %v1593
        %v1598 = vand.u32 2147483647, %v1588
        %vm1599 = vcmp.eq.f32.partialorder %v1598, 8.507059e+37
        %v1600 = vand.u32 %v1588, 2147483648
        %v1601 = vor.u32 1.1754944e-38, %v1600
        %v1602 = vsel %vm1599, %v1601, %v1597
        %v1603 = vmul.f32 %v1578, %v1602
        %v1604 = vmin.f32 %v1603, 1.0
        %v1605 = vmax.f32 %v1604, -1.0
        %v1606 = vmul.f32 %v1005, %v1005
        %v1607 = vmin.f32 16.0, %v1606
        %v1608 = vmul.f32 %v1607, 2.1237322e-06
        %v1609 = vadd.f32 %v1608, 0.00028619796
        %v1610 = vmul.f32 %v1607, %v1609
        %v1611 = vadd.f32 %v1610, 0.0036580483
        %v1612 = vmul.f32 %v1607, %v1611
        %v1613 = vadd.f32 %v1612, 0.05243302
        %v1614 = vmul.f32 %v1607, %v1613
        %v1615 = vadd.f32 %v1614, 0.18741608
        %v1616 = vmul.f32 %v1607, %v1615
        %v1617 = vadd.f32 %v1616, 1.1283791
        %v1618 = vmul.f32 %v1005, %v1617
        %v1619 = vmul.f32 %v1607, 3.8918573e-05
        %v1620 = vadd.f32 %v1619, 0.001143296
        %v1621 = vmul.f32 %v1607, %v1620
        %v1622 = vadd.f32 %v1621, 0.014752088
        %v1623 = vmul.f32 %v1607, %v1622
        %v1624 = vadd.f32 %v1623, 0.112945676
        %v1625 = vmul.f32 %v1607, %v1624
        %v1626 = vadd.f32 %v1625, 0.4994258
        %v1627 = vmul.f32 %v1607, %v1626
        %v1628 = vadd.f32 %v1627, 1.0
        %v1629 = vrcp.pop %v1628
        %v1630 = vmul.f32 %v1628, %v1629
        %v1631 = vsub.f32 1.0, %v1630
        %v1632 = vmul.f32 %v1629, %v1631
        %v1633 = vadd.f32 %v1629, %v1632
        %vm1634 = vweird.f32 %v1628
        %vm1635 = vweird.f32 %v1629
        %vm1636 = vmor %vm1634, %vm1635
        %v1637 = vsel %vm1636, %v1629, %v1633
        %v1638 = vand.u32 2147483647, %v1628
        %vm1639 = vcmp.eq.f32.partialorder %v1638, 8.507059e+37
        %v1640 = vand.u32 %v1628, 2147483648
        %v1641 = vor.u32 1.1754944e-38, %v1640
        %v1642 = vsel %vm1639, %v1641, %v1637
        %v1643 = vmul.f32 %v1618, %v1642
        %v1644 = vmin.f32 %v1643, 1.0
        %v1645 = vmax.f32 %v1644, -1.0
        %v1646 = vadd.f32 %v1045, 1.0
        %v1647 = vadd.f32 %v1085, 1.0
        %v1648 = vadd.f32 %v1125, 1.0
        %v1649 = vadd.f32 %v1165, 1.0
        %v1650 = vadd.f32 %v1205, 1.0
        %v1651 = vadd.f32 %v1245, 1.0
        %v1652 = vadd.f32 %v1285, 1.0
        %v1653 = vadd.f32 %v1325, 1.0
        %v1654 = vadd.f32 %v1365, 1.0
        %v1655 = vadd.f32 %v1405, 1.0
        %v1656 = vadd.f32 %v1445, 1.0
        %v1657 = vadd.f32 %v1485, 1.0
        %v1658 = vadd.f32 %v1525, 1.0
        %v1659 = vadd.f32 %v1565, 1.0
        %v1660 = vadd.f32 %v1605, 1.0
        %v1661 = vadd.f32 %v1645, 1.0
        %v1662 = vmul.f32 %v974, %v1646
        %v1663 = vmul.f32 %v975, %v1647
        %v1664 = vmul.f32 %v976, %v1648
        %v1665 = vmul.f32 %v977, %v1649
        %v1666 = vmul.f32 %v978, %v1650
        %v1667 = vmul.f32 %v979, %v1651
        %v1668 = vmul.f32 %v980, %v1652
        %v1669 = vmul.f32 %v981, %v1653
        %v1670 = vmul.f32 %v982, %v1654
        %v1671 = vmul.f32 %v983, %v1655
        %v1672 = vmul.f32 %v984, %v1656
        %v1673 = vmul.f32 %v985, %v1657
        %v1674 = vmul.f32 %v986, %v1658
        %v1675 = vmul.f32 %v987, %v1659
        %v1676 = vmul.f32 %v988, %v1660
        %v1677 = vmul.f32 %v989, %v1661
        %v1678 = vpack.c.bf16 %v1664, %v1662
        %v1679 = vpack.c.bf16 %v1665, %v1663
        %v1680 = vpack.c.bf16 %v1668, %v1666
        %v1681 = vpack.c.bf16 %v1669, %v1667
        %v1682 = vpack.c.bf16 %v1672, %v1670
        %v1683 = vpack.c.bf16 %v1673, %v1671
        %v1684 = vpack.c.bf16 %v1676, %v1674
        %v1685 = vpack.c.bf16 %v1677, %v1675
        %v1686 = vld [vmem:[#allocation8] sm:$0xff]
        %v1687 = vld [vmem:[#allocation8 + $0x8] sm:$0xff]
        %v1688 = vld [vmem:[#allocation8 + $0x10] sm:$0xff]
        %v1689 = vld [vmem:[#allocation8 + $0x18] sm:$0xff]
        %v1690 = vld [vmem:[#allocation8 + $0x20] sm:$0xff]
        %v1691 = vld [vmem:[#allocation8 + $0x28] sm:$0xff]
        %v1692 = vld [vmem:[#allocation8 + $0x30] sm:$0xff]
        %v1693 = vld [vmem:[#allocation8 + $0x38] sm:$0xff]
        %v1694 = vld [vmem:[#allocation8 + $0x40] sm:$0xff]
        %v1695 = vld [vmem:[#allocation8 + $0x48] sm:$0xff]
        %v1696 = vld [vmem:[#allocation8 + $0x50] sm:$0xff]
        %v1697 = vld [vmem:[#allocation8 + $0x58] sm:$0xff]
        %v1698 = vld [vmem:[#allocation8 + $0x60] sm:$0xff]
        %v1699 = vld [vmem:[#allocation8 + $0x68] sm:$0xff]
        %v1700 = vld [vmem:[#allocation8 + $0x70] sm:$0xff]
        %v1701 = vld [vmem:[#allocation8 + $0x78] sm:$0xff]
        %v1702 = vld [vmem:[#allocation8 + $0x80] sm:$0xff]
        %v1703 = vld [vmem:[#allocation8 + $0x88] sm:$0xff]
        %v1704 = vld [vmem:[#allocation8 + $0x90] sm:$0xff]
        %v1705 = vld [vmem:[#allocation8 + $0x98] sm:$0xff]
        %v1706 = vld [vmem:[#allocation8 + $0xa0] sm:$0xff]
        %v1707 = vld [vmem:[#allocation8 + $0xa8] sm:$0xff]
        %v1708 = vld [vmem:[#allocation8 + $0xb0] sm:$0xff]
        %v1709 = vld [vmem:[#allocation8 + $0xb8] sm:$0xff]
        %v1710 = vld [vmem:[#allocation8 + $0xc0] sm:$0xff]
        %v1711 = vld [vmem:[#allocation8 + $0xc8] sm:$0xff]
        %v1712 = vld [vmem:[#allocation8 + $0xd0] sm:$0xff]
        %v1713 = vld [vmem:[#allocation8 + $0xd8] sm:$0xff]
        %v1714 = vld [vmem:[#allocation8 + $0xe0] sm:$0xff]
        %v1715 = vld [vmem:[#allocation8 + $0xe8] sm:$0xff]
        %v1716 = vld [vmem:[#allocation8 + $0xf0] sm:$0xff]
        %v1717 = vld [vmem:[#allocation8 + $0xf8] sm:$0xff]
        %v1718 = vld [vmem:[%s4] sm:$0x3]
        %v1720 = vperm.slane %v1718, 0
        %v1721 = vperm.slane %v1718, 1
        %v1756 = vunpack.c.l.b16 %v1686
        %v1757 = vunpack.c.h.b16 %v1686
        %v1758 = vunpack.c.l.b16 %v1687
        %v1759 = vunpack.c.h.b16 %v1687
        %v1760 = vunpack.c.l.b16 %v1688
        %v1761 = vunpack.c.h.b16 %v1688
        %v1762 = vunpack.c.l.b16 %v1689
        %v1763 = vunpack.c.h.b16 %v1689
        %v1764 = vunpack.c.l.b16 %v1690
        %v1765 = vunpack.c.h.b16 %v1690
        %v1766 = vunpack.c.l.b16 %v1691
        %v1767 = vunpack.c.h.b16 %v1691
        %v1768 = vunpack.c.l.b16 %v1692
        %v1769 = vunpack.c.h.b16 %v1692
        %v1770 = vunpack.c.l.b16 %v1693
        %v1771 = vunpack.c.h.b16 %v1693
        %v1772 = vunpack.c.l.b16 %v1694
        %v1773 = vunpack.c.h.b16 %v1694
        %v1774 = vunpack.c.l.b16 %v1695
        %v1775 = vunpack.c.h.b16 %v1695
        %v1776 = vunpack.c.l.b16 %v1696
        %v1777 = vunpack.c.h.b16 %v1696
        %v1778 = vunpack.c.l.b16 %v1697
        %v1779 = vunpack.c.h.b16 %v1697
        %v1780 = vunpack.c.l.b16 %v1698
        %v1781 = vunpack.c.h.b16 %v1698
        %v1782 = vunpack.c.l.b16 %v1699
        %v1783 = vunpack.c.h.b16 %v1699
        %v1784 = vunpack.c.l.b16 %v1700
        %v1785 = vunpack.c.h.b16 %v1700
        %v1786 = vunpack.c.l.b16 %v1701
        %v1787 = vunpack.c.h.b16 %v1701
        %v1788 = vunpack.c.l.b16 %v1702
        %v1789 = vunpack.c.h.b16 %v1702
        %v1790 = vunpack.c.l.b16 %v1703
        %v1791 = vunpack.c.h.b16 %v1703
        %v1792 = vunpack.c.l.b16 %v1704
        %v1793 = vunpack.c.h.b16 %v1704
        %v1794 = vunpack.c.l.b16 %v1705
        %v1795 = vunpack.c.h.b16 %v1705
        %v1796 = vunpack.c.l.b16 %v1706
        %v1797 = vunpack.c.h.b16 %v1706
        %v1798 = vunpack.c.l.b16 %v1707
        %v1799 = vunpack.c.h.b16 %v1707
        %v1800 = vunpack.c.l.b16 %v1708
        %v1801 = vunpack.c.h.b16 %v1708
        %v1802 = vunpack.c.l.b16 %v1709
        %v1803 = vunpack.c.h.b16 %v1709
        %v1804 = vunpack.c.l.b16 %v1710
        %v1805 = vunpack.c.h.b16 %v1710
        %v1806 = vunpack.c.l.b16 %v1711
        %v1807 = vunpack.c.h.b16 %v1711
        %v1808 = vunpack.c.l.b16 %v1712
        %v1809 = vunpack.c.h.b16 %v1712
        %v1810 = vunpack.c.l.b16 %v1713
        %v1811 = vunpack.c.h.b16 %v1713
        %v1812 = vunpack.c.l.b16 %v1714
        %v1813 = vunpack.c.h.b16 %v1714
        %v1814 = vunpack.c.l.b16 %v1715
        %v1815 = vunpack.c.h.b16 %v1715
        %v1816 = vunpack.c.l.b16 %v1716
        %v1817 = vunpack.c.h.b16 %v1716
        %v1818 = vunpack.c.l.b16 %v1717
        %v1819 = vunpack.c.h.b16 %v1717
        %v1820 = vpack.c.b16 %v1758, %v1756
        %v1821 = vpack.c.b16 %v1759, %v1757
        %v1822 = vpack.c.b16 %v1762, %v1760
        %v1823 = vpack.c.b16 %v1763, %v1761
        %v1824 = vpack.c.b16 %v1766, %v1764
        %v1825 = vpack.c.b16 %v1767, %v1765
        %v1826 = vpack.c.b16 %v1770, %v1768
        %v1827 = vpack.c.b16 %v1771, %v1769
        %v1828 = vpack.c.b16 %v1774, %v1772
        %v1829 = vpack.c.b16 %v1775, %v1773
        %v1830 = vpack.c.b16 %v1778, %v1776
        %v1831 = vpack.c.b16 %v1779, %v1777
        %v1832 = vpack.c.b16 %v1782, %v1780
        %v1833 = vpack.c.b16 %v1783, %v1781
        %v1834 = vpack.c.b16 %v1786, %v1784
        %v1835 = vpack.c.b16 %v1787, %v1785
        %v1836 = vpack.c.b16 %v1790, %v1788
        %v1837 = vpack.c.b16 %v1791, %v1789
        %v1838 = vpack.c.b16 %v1794, %v1792
        %v1839 = vpack.c.b16 %v1795, %v1793
        %v1840 = vpack.c.b16 %v1798, %v1796
        %v1841 = vpack.c.b16 %v1799, %v1797
        %v1842 = vpack.c.b16 %v1802, %v1800
        %v1843 = vpack.c.b16 %v1803, %v1801
        %v1844 = vpack.c.b16 %v1806, %v1804
        %v1845 = vpack.c.b16 %v1807, %v1805
        %v1846 = vpack.c.b16 %v1810, %v1808
        %v1847 = vpack.c.b16 %v1811, %v1809
        %v1848 = vpack.c.b16 %v1814, %v1812
        %v1849 = vpack.c.b16 %v1815, %v1813
        %v1850 = vpack.c.b16 %v1818, %v1816
        %v1851 = vpack.c.b16 %v1819, %v1817
        %1884 = vmatpush.bf16.msra.mxu0 %v1834
        %1885 = vmatpush.bf16.msra.mxu0 %v1832
        %1886 = vmatpush.bf16.msra.mxu0 %v1830
        %1887 = vmatpush.bf16.msra.mxu0 %v1828
        %1888 = vmatpush.bf16.msra.mxu0 %v1826
        %1889 = vmatpush.bf16.msra.mxu0 %v1824
        %1890 = vmatpush.bf16.msra.mxu0 %v1822
        %1891 = vmatpush.bf16.msra.mxu0 %v1820
        %1892 = vmatmul.bf16.gmra.mxu0 %v1678
        %v1893 = vpop.f32.mrf.mxu0
        %v1894 = vadd.f32 %v1720, %v1893
        %v1895 = vpop.f32.mrf.mxu0
        %v1896 = vadd.f32 %v1720, %v1895
        %1897 = vmatmul.bf16.gmra.mxu0 %v1680
        %v1898 = vpop.f32.mrf.mxu0
        %v1899 = vadd.f32 %v1720, %v1898
        %v1900 = vpop.f32.mrf.mxu0
        %v1901 = vadd.f32 %v1720, %v1900
        %1902 = vmatmul.bf16.gmra.mxu0 %v1682
        %v1903 = vpop.f32.mrf.mxu0
        %v1904 = vadd.f32 %v1720, %v1903
        %v1905 = vpop.f32.mrf.mxu0
        %v1906 = vadd.f32 %v1720, %v1905
        %1907 = vmatmul.bf16.gmra.mxu0 %v1684
        %v1908 = vpop.f32.mrf.mxu0
        %v1909 = vadd.f32 %v1720, %v1908
        %v1910 = vpop.f32.mrf.mxu0
        %v1911 = vadd.f32 %v1720, %v1910
        %1912 = vdwg.mxu0
        %1913 = vmatpush.bf16.msra.mxu0 %v1850
        %1914 = vmatpush.bf16.msra.mxu0 %v1848
        %1915 = vmatpush.bf16.msra.mxu0 %v1846
        %1916 = vmatpush.bf16.msra.mxu0 %v1844
        %1917 = vmatpush.bf16.msra.mxu0 %v1842
        %1918 = vmatpush.bf16.msra.mxu0 %v1840
        %1919 = vmatpush.bf16.msra.mxu0 %v1838
        %1920 = vmatpush.bf16.msra.mxu0 %v1836
        %1921 = vmatmul.bf16.gmra.mxu0 %v1679
        %v1922 = vpop.f32.mrf.mxu0
        %v1923 = vadd.f32 %v1894, %v1922
        %v1924 = vpop.f32.mrf.mxu0
        %v1925 = vadd.f32 %v1896, %v1924
        %1926 = vmatmul.bf16.gmra.mxu0 %v1681
        %v1927 = vpop.f32.mrf.mxu0
        %v1928 = vadd.f32 %v1899, %v1927
        %v1929 = vpop.f32.mrf.mxu0
        %v1930 = vadd.f32 %v1901, %v1929
        %1931 = vmatmul.bf16.gmra.mxu0 %v1683
        %v1932 = vpop.f32.mrf.mxu0
        %v1933 = vadd.f32 %v1904, %v1932
        %v1934 = vpop.f32.mrf.mxu0
        %v1935 = vadd.f32 %v1906, %v1934
        %1936 = vmatmul.bf16.gmra.mxu0 %v1685
        %v1937 = vpop.f32.mrf.mxu0
        %v1938 = vadd.f32 %v1909, %v1937
        %v1939 = vpop.f32.mrf.mxu0
        %v1940 = vadd.f32 %v1911, %v1939
        %1941 = vdwg.mxu0
        %1942 = vmatpush.bf16.msra.mxu0 %v1835
        %1943 = vmatpush.bf16.msra.mxu0 %v1833
        %1944 = vmatpush.bf16.msra.mxu0 %v1831
        %1945 = vmatpush.bf16.msra.mxu0 %v1829
        %1946 = vmatpush.bf16.msra.mxu0 %v1827
        %1947 = vmatpush.bf16.msra.mxu0 %v1825
        %1948 = vmatpush.bf16.msra.mxu0 %v1823
        %1949 = vmatpush.bf16.msra.mxu0 %v1821
        %1950 = vmatmul.bf16.gmra.mxu0 %v1678
        %v1951 = vpop.f32.mrf.mxu0
        %v1952 = vadd.f32 %v1721, %v1951
        %v1953 = vpop.f32.mrf.mxu0
        %v1954 = vadd.f32 %v1721, %v1953
        %1955 = vmatmul.bf16.gmra.mxu0 %v1680
        %v1956 = vpop.f32.mrf.mxu0
        %v1957 = vadd.f32 %v1721, %v1956
        %v1958 = vpop.f32.mrf.mxu0
        %v1959 = vadd.f32 %v1721, %v1958
        %1960 = vmatmul.bf16.gmra.mxu0 %v1682
        %v1961 = vpop.f32.mrf.mxu0
        %v1962 = vadd.f32 %v1721, %v1961
        %v1963 = vpop.f32.mrf.mxu0
        %v1964 = vadd.f32 %v1721, %v1963
        %1965 = vmatmul.bf16.gmra.mxu0 %v1684
        %v1966 = vpop.f32.mrf.mxu0
        %v1967 = vadd.f32 %v1721, %v1966
        %v1968 = vpop.f32.mrf.mxu0
        %v1969 = vadd.f32 %v1721, %v1968
        %1970 = vdwg.mxu0
        %1971 = vmatpush.bf16.msra.mxu0 %v1851
        %1972 = vmatpush.bf16.msra.mxu0 %v1849
        %1973 = vmatpush.bf16.msra.mxu0 %v1847
        %1974 = vmatpush.bf16.msra.mxu0 %v1845
        %1975 = vmatpush.bf16.msra.mxu0 %v1843
        %1976 = vmatpush.bf16.msra.mxu0 %v1841
        %1977 = vmatpush.bf16.msra.mxu0 %v1839
        %1978 = vmatpush.bf16.msra.mxu0 %v1837
        %1979 = vmatmul.bf16.gmra.mxu0 %v1679
        %v1980 = vpop.f32.mrf.mxu0
        %v1981 = vadd.f32 %v1952, %v1980
        %v1982 = vpop.f32.mrf.mxu0
        %v1983 = vadd.f32 %v1954, %v1982
        %1984 = vmatmul.bf16.gmra.mxu0 %v1681
        %v1985 = vpop.f32.mrf.mxu0
        %v1986 = vadd.f32 %v1957, %v1985
        %v1987 = vpop.f32.mrf.mxu0
        %v1988 = vadd.f32 %v1959, %v1987
        %1989 = vmatmul.bf16.gmra.mxu0 %v1683
        %v1990 = vpop.f32.mrf.mxu0
        %v1991 = vadd.f32 %v1962, %v1990
        %v1992 = vpop.f32.mrf.mxu0
        %v1993 = vadd.f32 %v1964, %v1992
        %1994 = vmatmul.bf16.gmra.mxu0 %v1685
        %v1995 = vpop.f32.mrf.mxu0
        %v1996 = vadd.f32 %v1967, %v1995
        %v1997 = vpop.f32.mrf.mxu0
        %v1998 = vadd.f32 %v1969, %v1997
        %1999 = vdwg.mxu0
        %v2000 = vadd.f32 %v1923, %v1981
        %2001 = vadd.xlane.f32.xlu0 %v2000
        %v2002 = vpop.xlane.xlu0 %2001
        %v2003 = vadd.f32 %v1925, %v1983
        %2004 = vadd.xlane.f32.xlu0 %v2003
        %v2005 = vpop.xlane.xlu0 %2004
        %v2006 = vadd.f32 %v1928, %v1986
        %2007 = vadd.xlane.f32.xlu0 %v2006
        %v2008 = vpop.xlane.xlu0 %2007
        %v2009 = vadd.f32 %v1930, %v1988
        %2010 = vadd.xlane.f32.xlu0 %v2009
        %v2011 = vpop.xlane.xlu0 %2010
        %v2012 = vadd.f32 %v1933, %v1991
        %2013 = vadd.xlane.f32.xlu0 %v2012
        %v2014 = vpop.xlane.xlu0 %2013
        %v2015 = vadd.f32 %v1935, %v1993
        %2016 = vadd.xlane.f32.xlu0 %v2015
        %v2017 = vpop.xlane.xlu0 %2016
        %v2018 = vadd.f32 %v1938, %v1996
        %2019 = vadd.xlane.f32.xlu0 %v2018
        %v2020 = vpop.xlane.xlu0 %2019
        %v2021 = vadd.f32 %v1940, %v1998
        %2022 = vadd.xlane.f32.xlu0 %v2021
        %v2023 = vpop.xlane.xlu0 %2022
        %v2024 = vmul.f32 %v2002, %v773
        %v2025 = vmul.f32 %v2005, %v773
        %v2026 = vmul.f32 %v2008, %v773
        %v2027 = vmul.f32 %v2011, %v773
        %v2028 = vmul.f32 %v2014, %v773
        %v2029 = vmul.f32 %v2017, %v773
        %v2030 = vmul.f32 %v2020, %v773
        %v2031 = vmul.f32 %v2023, %v773
        %v2032 = vmul.f32 %v1923, %v1923
        %v2033 = vmul.f32 %v1981, %v1981
        %v2034 = vmul.f32 %v1925, %v1925
        %v2035 = vmul.f32 %v1983, %v1983
        %v2036 = vmul.f32 %v1928, %v1928
        %v2037 = vmul.f32 %v1986, %v1986
        %v2038 = vmul.f32 %v1930, %v1930
        %v2039 = vmul.f32 %v1988, %v1988
        %v2040 = vmul.f32 %v1933, %v1933
        %v2041 = vmul.f32 %v1991, %v1991
        %v2042 = vmul.f32 %v1935, %v1935
        %v2043 = vmul.f32 %v1993, %v1993
        %v2044 = vmul.f32 %v1938, %v1938
        %v2045 = vmul.f32 %v1996, %v1996
        %v2046 = vmul.f32 %v1940, %v1940
        %v2047 = vmul.f32 %v1998, %v1998
        %v2048 = vadd.f32 %v2032, %v2033
        %2049 = vadd.xlane.f32.xlu0 %v2048
        %v2050 = vpop.xlane.xlu0 %2049
        %v2051 = vadd.f32 %v2034, %v2035
        %2052 = vadd.xlane.f32.xlu0 %v2051
        %v2053 = vpop.xlane.xlu0 %2052
        %v2054 = vadd.f32 %v2036, %v2037
        %2055 = vadd.xlane.f32.xlu0 %v2054
        %v2056 = vpop.xlane.xlu0 %2055
        %v2057 = vadd.f32 %v2038, %v2039
        %2058 = vadd.xlane.f32.xlu0 %v2057
        %v2059 = vpop.xlane.xlu0 %2058
        %v2060 = vadd.f32 %v2040, %v2041
        %2061 = vadd.xlane.f32.xlu0 %v2060
        %v2062 = vpop.xlane.xlu0 %2061
        %v2063 = vadd.f32 %v2042, %v2043
        %2064 = vadd.xlane.f32.xlu0 %v2063
        %v2065 = vpop.xlane.xlu0 %2064
        %v2066 = vadd.f32 %v2044, %v2045
        %2067 = vadd.xlane.f32.xlu0 %v2066
        %v2068 = vpop.xlane.xlu0 %2067
        %v2069 = vadd.f32 %v2046, %v2047
        %2070 = vadd.xlane.f32.xlu0 %v2069
        %v2071 = vpop.xlane.xlu0 %2070
        %v2072 = vmul.f32 %v2050, %v773
        %v2073 = vmul.f32 %v2053, %v773
        %v2074 = vmul.f32 %v2056, %v773
        %v2075 = vmul.f32 %v2059, %v773
        %v2076 = vmul.f32 %v2062, %v773
        %v2077 = vmul.f32 %v2065, %v773
        %v2078 = vmul.f32 %v2068, %v773
        %v2079 = vmul.f32 %v2071, %v773
        %v2080 = vmul.f32 %v2024, %v2024
        %v2081 = vmul.f32 %v2025, %v2025
        %v2082 = vmul.f32 %v2026, %v2026
        %v2083 = vmul.f32 %v2027, %v2027
        %v2084 = vmul.f32 %v2028, %v2028
        %v2085 = vmul.f32 %v2029, %v2029
        %v2086 = vmul.f32 %v2030, %v2030
        %v2087 = vmul.f32 %v2031, %v2031
        %v2088 = vsub.f32 %v2072, %v2080
        %v2089 = vsub.f32 %v2073, %v2081
        %v2090 = vsub.f32 %v2074, %v2082
        %v2091 = vsub.f32 %v2075, %v2083
        %v2092 = vsub.f32 %v2076, %v2084
        %v2093 = vsub.f32 %v2077, %v2085
        %v2094 = vsub.f32 %v2078, %v2086
        %v2095 = vsub.f32 %v2079, %v2087
        %v2096 = vmax.f32 %v2088, 0.0
        %v2097 = vmax.f32 %v2089, 0.0
        %v2098 = vmax.f32 %v2090, 0.0
        %v2099 = vmax.f32 %v2091, 0.0
        %v2100 = vmax.f32 %v2092, 0.0
        %v2101 = vmax.f32 %v2093, 0.0
        %v2102 = vmax.f32 %v2094, 0.0
        %v2103 = vmax.f32 %v2095, 0.0
        %v2104 = vsub.f32 %v1923, %v2024
        %v2105 = vsub.f32 %v1981, %v2024
        %v2106 = vsub.f32 %v1925, %v2025
        %v2107 = vsub.f32 %v1983, %v2025
        %v2108 = vsub.f32 %v1928, %v2026
        %v2109 = vsub.f32 %v1986, %v2026
        %v2110 = vsub.f32 %v1930, %v2027
        %v2111 = vsub.f32 %v1988, %v2027
        %v2112 = vsub.f32 %v1933, %v2028
        %v2113 = vsub.f32 %v1991, %v2028
        %v2114 = vsub.f32 %v1935, %v2029
        %v2115 = vsub.f32 %v1993, %v2029
        %v2116 = vsub.f32 %v1938, %v2030
        %v2117 = vsub.f32 %v1996, %v2030
        %v2118 = vsub.f32 %v1940, %v2031
        %v2119 = vsub.f32 %v1998, %v2031
        %v2120 = vadd.f32 %v2096, 1e-05
        %v2121 = vadd.f32 %v2097, 1e-05
        %v2122 = vadd.f32 %v2098, 1e-05
        %v2123 = vadd.f32 %v2099, 1e-05
        %v2124 = vadd.f32 %v2100, 1e-05
        %v2125 = vadd.f32 %v2101, 1e-05
        %v2126 = vadd.f32 %v2102, 1e-05
        %v2127 = vadd.f32 %v2103, 1e-05
        %v2128 = vrsqrt.pop %v2120
        %v2129 = vmul.f32 %v2128, %v2120
        %v2130 = vmul.f32 %v2129, %v2128
        %v2131 = vmul.f32 0.5, %v2130
        %v2132 = vsub.f32 1.5, %v2131
        %v2133 = vmul.f32 %v2128, %v2132
        %vm2134 = vweird.f32 %v2120
        %vm2135 = vweird.f32 %v2128
        %vm2136 = vmor %vm2134, %vm2135
        %v2137 = vsel %vm2136, %v2128, %v2133
        %v2138 = vrsqrt.pop %v2121
        %v2139 = vmul.f32 %v2138, %v2121
        %v2140 = vmul.f32 %v2139, %v2138
        %v2141 = vmul.f32 0.5, %v2140
        %v2142 = vsub.f32 1.5, %v2141
        %v2143 = vmul.f32 %v2138, %v2142
        %vm2144 = vweird.f32 %v2121
        %vm2145 = vweird.f32 %v2138
        %vm2146 = vmor %vm2144, %vm2145
        %v2147 = vsel %vm2146, %v2138, %v2143
        %v2148 = vrsqrt.pop %v2122
        %v2149 = vmul.f32 %v2148, %v2122
        %v2150 = vmul.f32 %v2149, %v2148
        %v2151 = vmul.f32 0.5, %v2150
        %v2152 = vsub.f32 1.5, %v2151
        %v2153 = vmul.f32 %v2148, %v2152
        %vm2154 = vweird.f32 %v2122
        %vm2155 = vweird.f32 %v2148
        %vm2156 = vmor %vm2154, %vm2155
        %v2157 = vsel %vm2156, %v2148, %v2153
        %v2158 = vrsqrt.pop %v2123
        %v2159 = vmul.f32 %v2158, %v2123
        %v2160 = vmul.f32 %v2159, %v2158
        %v2161 = vmul.f32 0.5, %v2160
        %v2162 = vsub.f32 1.5, %v2161
        %v2163 = vmul.f32 %v2158, %v2162
        %vm2164 = vweird.f32 %v2123
        %vm2165 = vweird.f32 %v2158
        %vm2166 = vmor %vm2164, %vm2165
        %v2167 = vsel %vm2166, %v2158, %v2163
        %v2168 = vrsqrt.pop %v2124
        %v2169 = vmul.f32 %v2168, %v2124
        %v2170 = vmul.f32 %v2169, %v2168
        %v2171 = vmul.f32 0.5, %v2170
        %v2172 = vsub.f32 1.5, %v2171
        %v2173 = vmul.f32 %v2168, %v2172
        %vm2174 = vweird.f32 %v2124
        %vm2175 = vweird.f32 %v2168
        %vm2176 = vmor %vm2174, %vm2175
        %v2177 = vsel %vm2176, %v2168, %v2173
        %v2178 = vrsqrt.pop %v2125
        %v2179 = vmul.f32 %v2178, %v2125
        %v2180 = vmul.f32 %v2179, %v2178
        %v2181 = vmul.f32 0.5, %v2180
        %v2182 = vsub.f32 1.5, %v2181
        %v2183 = vmul.f32 %v2178, %v2182
        %vm2184 = vweird.f32 %v2125
        %vm2185 = vweird.f32 %v2178
        %vm2186 = vmor %vm2184, %vm2185
        %v2187 = vsel %vm2186, %v2178, %v2183
        %v2188 = vrsqrt.pop %v2126
        %v2189 = vmul.f32 %v2188, %v2126
        %v2190 = vmul.f32 %v2189, %v2188
        %v2191 = vmul.f32 0.5, %v2190
        %v2192 = vsub.f32 1.5, %v2191
        %v2193 = vmul.f32 %v2188, %v2192
        %vm2194 = vweird.f32 %v2126
        %vm2195 = vweird.f32 %v2188
        %vm2196 = vmor %vm2194, %vm2195
        %v2197 = vsel %vm2196, %v2188, %v2193
        %v2198 = vrsqrt.pop %v2127
        %v2199 = vmul.f32 %v2198, %v2127
        %v2200 = vmul.f32 %v2199, %v2198
        %v2201 = vmul.f32 0.5, %v2200
        %v2202 = vsub.f32 1.5, %v2201
        %v2203 = vmul.f32 %v2198, %v2202
        %vm2204 = vweird.f32 %v2127
        %vm2205 = vweird.f32 %v2198
        %vm2206 = vmor %vm2204, %vm2205
        %v2207 = vsel %vm2206, %v2198, %v2203
        %v2208 = vmul.f32 %v2104, %v2137
        %v2209 = vmul.f32 %v2105, %v2137
        %v2210 = vmul.f32 %v2106, %v2147
        %v2211 = vmul.f32 %v2107, %v2147
        %v2212 = vmul.f32 %v2108, %v2157
        %v2213 = vmul.f32 %v2109, %v2157
        %v2214 = vmul.f32 %v2110, %v2167
        %v2215 = vmul.f32 %v2111, %v2167
        %v2216 = vmul.f32 %v2112, %v2177
        %v2217 = vmul.f32 %v2113, %v2177
        %v2218 = vmul.f32 %v2114, %v2187
        %v2219 = vmul.f32 %v2115, %v2187
        %v2220 = vmul.f32 %v2116, %v2197
        %v2221 = vmul.f32 %v2117, %v2197
        %v2222 = vmul.f32 %v2118, %v2207
        %v2223 = vmul.f32 %v2119, %v2207
        %v2224 = vmul.f32 %v2208, 0.5
        %v2225 = vmul.f32 %v2209, 0.5
        %v2226 = vmul.f32 %v2210, 0.5
        %v2227 = vmul.f32 %v2211, 0.5
        %v2228 = vmul.f32 %v2212, 0.5
        %v2229 = vmul.f32 %v2213, 0.5
        %v2230 = vmul.f32 %v2214, 0.5
        %v2231 = vmul.f32 %v2215, 0.5
        %v2232 = vmul.f32 %v2216, 0.5
        %v2233 = vmul.f32 %v2217, 0.5
        %v2234 = vmul.f32 %v2218, 0.5
        %v2235 = vmul.f32 %v2219, 0.5
        %v2236 = vmul.f32 %v2220, 0.5
        %v2237 = vmul.f32 %v2221, 0.5
        %v2238 = vmul.f32 %v2222, 0.5
        %v2239 = vmul.f32 %v2223, 0.5
        %v2240 = vmul.f32 %v2208, 0.70710677
        %v2241 = vmul.f32 %v2209, 0.70710677
        %v2242 = vmul.f32 %v2210, 0.70710677
        %v2243 = vmul.f32 %v2211, 0.70710677
        %v2244 = vmul.f32 %v2212, 0.70710677
        %v2245 = vmul.f32 %v2213, 0.70710677
        %v2246 = vmul.f32 %v2214, 0.70710677
        %v2247 = vmul.f32 %v2215, 0.70710677
        %v2248 = vmul.f32 %v2216, 0.70710677
        %v2249 = vmul.f32 %v2217, 0.70710677
        %v2250 = vmul.f32 %v2218, 0.70710677
        %v2251 = vmul.f32 %v2219, 0.70710677
        %v2252 = vmul.f32 %v2220, 0.70710677
        %v2253 = vmul.f32 %v2221, 0.70710677
        %v2254 = vmul.f32 %v2222, 0.70710677
        %v2255 = vmul.f32 %v2223, 0.70710677
        %v2256 = vmul.f32 %v2240, %v2240
        %v2257 = vmin.f32 16.0, %v2256
        %v2258 = vmul.f32 %v2257, 2.1237322e-06
        %v2259 = vadd.f32 %v2258, 0.00028619796
        %v2260 = vmul.f32 %v2257, %v2259
        %v2261 = vadd.f32 %v2260, 0.0036580483
        %v2262 = vmul.f32 %v2257, %v2261
        %v2263 = vadd.f32 %v2262, 0.05243302
        %v2264 = vmul.f32 %v2257, %v2263
        %v2265 = vadd.f32 %v2264, 0.18741608
        %v2266 = vmul.f32 %v2257, %v2265
        %v2267 = vadd.f32 %v2266, 1.1283791
        %v2268 = vmul.f32 %v2240, %v2267
        %v2269 = vmul.f32 %v2257, 3.8918573e-05
        %v2270 = vadd.f32 %v2269, 0.001143296
        %v2271 = vmul.f32 %v2257, %v2270
        %v2272 = vadd.f32 %v2271, 0.014752088
        %v2273 = vmul.f32 %v2257, %v2272
        %v2274 = vadd.f32 %v2273, 0.112945676
        %v2275 = vmul.f32 %v2257, %v2274
        %v2276 = vadd.f32 %v2275, 0.4994258
        %v2277 = vmul.f32 %v2257, %v2276
        %v2278 = vadd.f32 %v2277, 1.0
        %v2279 = vrcp.pop %v2278
        %v2280 = vmul.f32 %v2278, %v2279
        %v2281 = vsub.f32 1.0, %v2280
        %v2282 = vmul.f32 %v2279, %v2281
        %v2283 = vadd.f32 %v2279, %v2282
        %vm2284 = vweird.f32 %v2278
        %vm2285 = vweird.f32 %v2279
        %vm2286 = vmor %vm2284, %vm2285
        %v2287 = vsel %vm2286, %v2279, %v2283
        %v2288 = vand.u32 2147483647, %v2278
        %vm2289 = vcmp.eq.f32.partialorder %v2288, 8.507059e+37
        %v2290 = vand.u32 %v2278, 2147483648
        %v2291 = vor.u32 1.1754944e-38, %v2290
        %v2292 = vsel %vm2289, %v2291, %v2287
        %v2293 = vmul.f32 %v2268, %v2292
        %v2294 = vmin.f32 %v2293, 1.0
        %v2295 = vmax.f32 %v2294, -1.0
        %v2296 = vmul.f32 %v2241, %v2241
        %v2297 = vmin.f32 16.0, %v2296
        %v2298 = vmul.f32 %v2297, 2.1237322e-06
        %v2299 = vadd.f32 %v2298, 0.00028619796
        %v2300 = vmul.f32 %v2297, %v2299
        %v2301 = vadd.f32 %v2300, 0.0036580483
        %v2302 = vmul.f32 %v2297, %v2301
        %v2303 = vadd.f32 %v2302, 0.05243302
        %v2304 = vmul.f32 %v2297, %v2303
        %v2305 = vadd.f32 %v2304, 0.18741608
        %v2306 = vmul.f32 %v2297, %v2305
        %v2307 = vadd.f32 %v2306, 1.1283791
        %v2308 = vmul.f32 %v2241, %v2307
        %v2309 = vmul.f32 %v2297, 3.8918573e-05
        %v2310 = vadd.f32 %v2309, 0.001143296
        %v2311 = vmul.f32 %v2297, %v2310
        %v2312 = vadd.f32 %v2311, 0.014752088
        %v2313 = vmul.f32 %v2297, %v2312
        %v2314 = vadd.f32 %v2313, 0.112945676
        %v2315 = vmul.f32 %v2297, %v2314
        %v2316 = vadd.f32 %v2315, 0.4994258
        %v2317 = vmul.f32 %v2297, %v2316
        %v2318 = vadd.f32 %v2317, 1.0
        %v2319 = vrcp.pop %v2318
        %v2320 = vmul.f32 %v2318, %v2319
        %v2321 = vsub.f32 1.0, %v2320
        %v2322 = vmul.f32 %v2319, %v2321
        %v2323 = vadd.f32 %v2319, %v2322
        %vm2324 = vweird.f32 %v2318
        %vm2325 = vweird.f32 %v2319
        %vm2326 = vmor %vm2324, %vm2325
        %v2327 = vsel %vm2326, %v2319, %v2323
        %v2328 = vand.u32 2147483647, %v2318
        %vm2329 = vcmp.eq.f32.partialorder %v2328, 8.507059e+37
        %v2330 = vand.u32 %v2318, 2147483648
        %v2331 = vor.u32 1.1754944e-38, %v2330
        %v2332 = vsel %vm2329, %v2331, %v2327
        %v2333 = vmul.f32 %v2308, %v2332
        %v2334 = vmin.f32 %v2333, 1.0
        %v2335 = vmax.f32 %v2334, -1.0
        %v2336 = vmul.f32 %v2242, %v2242
        %v2337 = vmin.f32 16.0, %v2336
        %v2338 = vmul.f32 %v2337, 2.1237322e-06
        %v2339 = vadd.f32 %v2338, 0.00028619796
        %v2340 = vmul.f32 %v2337, %v2339
        %v2341 = vadd.f32 %v2340, 0.0036580483
        %v2342 = vmul.f32 %v2337, %v2341
        %v2343 = vadd.f32 %v2342, 0.05243302
        %v2344 = vmul.f32 %v2337, %v2343
        %v2345 = vadd.f32 %v2344, 0.18741608
        %v2346 = vmul.f32 %v2337, %v2345
        %v2347 = vadd.f32 %v2346, 1.1283791
        %v2348 = vmul.f32 %v2242, %v2347
        %v2349 = vmul.f32 %v2337, 3.8918573e-05
        %v2350 = vadd.f32 %v2349, 0.001143296
        %v2351 = vmul.f32 %v2337, %v2350
        %v2352 = vadd.f32 %v2351, 0.014752088
        %v2353 = vmul.f32 %v2337, %v2352
        %v2354 = vadd.f32 %v2353, 0.112945676
        %v2355 = vmul.f32 %v2337, %v2354
        %v2356 = vadd.f32 %v2355, 0.4994258
        %v2357 = vmul.f32 %v2337, %v2356
        %v2358 = vadd.f32 %v2357, 1.0
        %v2359 = vrcp.pop %v2358
        %v2360 = vmul.f32 %v2358, %v2359
        %v2361 = vsub.f32 1.0, %v2360
        %v2362 = vmul.f32 %v2359, %v2361
        %v2363 = vadd.f32 %v2359, %v2362
        %vm2364 = vweird.f32 %v2358
        %vm2365 = vweird.f32 %v2359
        %vm2366 = vmor %vm2364, %vm2365
        %v2367 = vsel %vm2366, %v2359, %v2363
        %v2368 = vand.u32 2147483647, %v2358
        %vm2369 = vcmp.eq.f32.partialorder %v2368, 8.507059e+37
        %v2370 = vand.u32 %v2358, 2147483648
        %v2371 = vor.u32 1.1754944e-38, %v2370
        %v2372 = vsel %vm2369, %v2371, %v2367
        %v2373 = vmul.f32 %v2348, %v2372
        %v2374 = vmin.f32 %v2373, 1.0
        %v2375 = vmax.f32 %v2374, -1.0
        %v2376 = vmul.f32 %v2243, %v2243
        %v2377 = vmin.f32 16.0, %v2376
        %v2378 = vmul.f32 %v2377, 2.1237322e-06
        %v2379 = vadd.f32 %v2378, 0.00028619796
        %v2380 = vmul.f32 %v2377, %v2379
        %v2381 = vadd.f32 %v2380, 0.0036580483
        %v2382 = vmul.f32 %v2377, %v2381
        %v2383 = vadd.f32 %v2382, 0.05243302
        %v2384 = vmul.f32 %v2377, %v2383
        %v2385 = vadd.f32 %v2384, 0.18741608
        %v2386 = vmul.f32 %v2377, %v2385
        %v2387 = vadd.f32 %v2386, 1.1283791
        %v2388 = vmul.f32 %v2243, %v2387
        %v2389 = vmul.f32 %v2377, 3.8918573e-05
        %v2390 = vadd.f32 %v2389, 0.001143296
        %v2391 = vmul.f32 %v2377, %v2390
        %v2392 = vadd.f32 %v2391, 0.014752088
        %v2393 = vmul.f32 %v2377, %v2392
        %v2394 = vadd.f32 %v2393, 0.112945676
        %v2395 = vmul.f32 %v2377, %v2394
        %v2396 = vadd.f32 %v2395, 0.4994258
        %v2397 = vmul.f32 %v2377, %v2396
        %v2398 = vadd.f32 %v2397, 1.0
        %v2399 = vrcp.pop %v2398
        %v2400 = vmul.f32 %v2398, %v2399
        %v2401 = vsub.f32 1.0, %v2400
        %v2402 = vmul.f32 %v2399, %v2401
        %v2403 = vadd.f32 %v2399, %v2402
        %vm2404 = vweird.f32 %v2398
        %vm2405 = vweird.f32 %v2399
        %vm2406 = vmor %vm2404, %vm2405
        %v2407 = vsel %vm2406, %v2399, %v2403
        %v2408 = vand.u32 2147483647, %v2398
        %vm2409 = vcmp.eq.f32.partialorder %v2408, 8.507059e+37
        %v2410 = vand.u32 %v2398, 2147483648
        %v2411 = vor.u32 1.1754944e-38, %v2410
        %v2412 = vsel %vm2409, %v2411, %v2407
        %v2413 = vmul.f32 %v2388, %v2412
        %v2414 = vmin.f32 %v2413, 1.0
        %v2415 = vmax.f32 %v2414, -1.0
        %v2416 = vmul.f32 %v2244, %v2244
        %v2417 = vmin.f32 16.0, %v2416
        %v2418 = vmul.f32 %v2417, 2.1237322e-06
        %v2419 = vadd.f32 %v2418, 0.00028619796
        %v2420 = vmul.f32 %v2417, %v2419
        %v2421 = vadd.f32 %v2420, 0.0036580483
        %v2422 = vmul.f32 %v2417, %v2421
        %v2423 = vadd.f32 %v2422, 0.05243302
        %v2424 = vmul.f32 %v2417, %v2423
        %v2425 = vadd.f32 %v2424, 0.18741608
        %v2426 = vmul.f32 %v2417, %v2425
        %v2427 = vadd.f32 %v2426, 1.1283791
        %v2428 = vmul.f32 %v2244, %v2427
        %v2429 = vmul.f32 %v2417, 3.8918573e-05
        %v2430 = vadd.f32 %v2429, 0.001143296
        %v2431 = vmul.f32 %v2417, %v2430
        %v2432 = vadd.f32 %v2431, 0.014752088
        %v2433 = vmul.f32 %v2417, %v2432
        %v2434 = vadd.f32 %v2433, 0.112945676
        %v2435 = vmul.f32 %v2417, %v2434
        %v2436 = vadd.f32 %v2435, 0.4994258
        %v2437 = vmul.f32 %v2417, %v2436
        %v2438 = vadd.f32 %v2437, 1.0
        %v2439 = vrcp.pop %v2438
        %v2440 = vmul.f32 %v2438, %v2439
        %v2441 = vsub.f32 1.0, %v2440
        %v2442 = vmul.f32 %v2439, %v2441
        %v2443 = vadd.f32 %v2439, %v2442
        %vm2444 = vweird.f32 %v2438
        %vm2445 = vweird.f32 %v2439
        %vm2446 = vmor %vm2444, %vm2445
        %v2447 = vsel %vm2446, %v2439, %v2443
        %v2448 = vand.u32 2147483647, %v2438
        %vm2449 = vcmp.eq.f32.partialorder %v2448, 8.507059e+37
        %v2450 = vand.u32 %v2438, 2147483648
        %v2451 = vor.u32 1.1754944e-38, %v2450
        %v2452 = vsel %vm2449, %v2451, %v2447
        %v2453 = vmul.f32 %v2428, %v2452
        %v2454 = vmin.f32 %v2453, 1.0
        %v2455 = vmax.f32 %v2454, -1.0
        %v2456 = vmul.f32 %v2245, %v2245
        %v2457 = vmin.f32 16.0, %v2456
        %v2458 = vmul.f32 %v2457, 2.1237322e-06
        %v2459 = vadd.f32 %v2458, 0.00028619796
        %v2460 = vmul.f32 %v2457, %v2459
        %v2461 = vadd.f32 %v2460, 0.0036580483
        %v2462 = vmul.f32 %v2457, %v2461
        %v2463 = vadd.f32 %v2462, 0.05243302
        %v2464 = vmul.f32 %v2457, %v2463
        %v2465 = vadd.f32 %v2464, 0.18741608
        %v2466 = vmul.f32 %v2457, %v2465
        %v2467 = vadd.f32 %v2466, 1.1283791
        %v2468 = vmul.f32 %v2245, %v2467
        %v2469 = vmul.f32 %v2457, 3.8918573e-05
        %v2470 = vadd.f32 %v2469, 0.001143296
        %v2471 = vmul.f32 %v2457, %v2470
        %v2472 = vadd.f32 %v2471, 0.014752088
        %v2473 = vmul.f32 %v2457, %v2472
        %v2474 = vadd.f32 %v2473, 0.112945676
        %v2475 = vmul.f32 %v2457, %v2474
        %v2476 = vadd.f32 %v2475, 0.4994258
        %v2477 = vmul.f32 %v2457, %v2476
        %v2478 = vadd.f32 %v2477, 1.0
        %v2479 = vrcp.pop %v2478
        %v2480 = vmul.f32 %v2478, %v2479
        %v2481 = vsub.f32 1.0, %v2480
        %v2482 = vmul.f32 %v2479, %v2481
        %v2483 = vadd.f32 %v2479, %v2482
        %vm2484 = vweird.f32 %v2478
        %vm2485 = vweird.f32 %v2479
        %vm2486 = vmor %vm2484, %vm2485
        %v2487 = vsel %vm2486, %v2479, %v2483
        %v2488 = vand.u32 2147483647, %v2478
        %vm2489 = vcmp.eq.f32.partialorder %v2488, 8.507059e+37
        %v2490 = vand.u32 %v2478, 2147483648
        %v2491 = vor.u32 1.1754944e-38, %v2490
        %v2492 = vsel %vm2489, %v2491, %v2487
        %v2493 = vmul.f32 %v2468, %v2492
        %v2494 = vmin.f32 %v2493, 1.0
        %v2495 = vmax.f32 %v2494, -1.0
        %v2496 = vmul.f32 %v2246, %v2246
        %v2497 = vmin.f32 16.0, %v2496
        %v2498 = vmul.f32 %v2497, 2.1237322e-06
        %v2499 = vadd.f32 %v2498, 0.00028619796
        %v2500 = vmul.f32 %v2497, %v2499
        %v2501 = vadd.f32 %v2500, 0.0036580483
        %v2502 = vmul.f32 %v2497, %v2501
        %v2503 = vadd.f32 %v2502, 0.05243302
        %v2504 = vmul.f32 %v2497, %v2503
        %v2505 = vadd.f32 %v2504, 0.18741608
        %v2506 = vmul.f32 %v2497, %v2505
        %v2507 = vadd.f32 %v2506, 1.1283791
        %v2508 = vmul.f32 %v2246, %v2507
        %v2509 = vmul.f32 %v2497, 3.8918573e-05
        %v2510 = vadd.f32 %v2509, 0.001143296
        %v2511 = vmul.f32 %v2497, %v2510
        %v2512 = vadd.f32 %v2511, 0.014752088
        %v2513 = vmul.f32 %v2497, %v2512
        %v2514 = vadd.f32 %v2513, 0.112945676
        %v2515 = vmul.f32 %v2497, %v2514
        %v2516 = vadd.f32 %v2515, 0.4994258
        %v2517 = vmul.f32 %v2497, %v2516
        %v2518 = vadd.f32 %v2517, 1.0
        %v2519 = vrcp.pop %v2518
        %v2520 = vmul.f32 %v2518, %v2519
        %v2521 = vsub.f32 1.0, %v2520
        %v2522 = vmul.f32 %v2519, %v2521
        %v2523 = vadd.f32 %v2519, %v2522
        %vm2524 = vweird.f32 %v2518
        %vm2525 = vweird.f32 %v2519
        %vm2526 = vmor %vm2524, %vm2525
        %v2527 = vsel %vm2526, %v2519, %v2523
        %v2528 = vand.u32 2147483647, %v2518
        %vm2529 = vcmp.eq.f32.partialorder %v2528, 8.507059e+37
        %v2530 = vand.u32 %v2518, 2147483648
        %v2531 = vor.u32 1.1754944e-38, %v2530
        %v2532 = vsel %vm2529, %v2531, %v2527
        %v2533 = vmul.f32 %v2508, %v2532
        %v2534 = vmin.f32 %v2533, 1.0
        %v2535 = vmax.f32 %v2534, -1.0
        %v2536 = vmul.f32 %v2247, %v2247
        %v2537 = vmin.f32 16.0, %v2536
        %v2538 = vmul.f32 %v2537, 2.1237322e-06
        %v2539 = vadd.f32 %v2538, 0.00028619796
        %v2540 = vmul.f32 %v2537, %v2539
        %v2541 = vadd.f32 %v2540, 0.0036580483
        %v2542 = vmul.f32 %v2537, %v2541
        %v2543 = vadd.f32 %v2542, 0.05243302
        %v2544 = vmul.f32 %v2537, %v2543
        %v2545 = vadd.f32 %v2544, 0.18741608
        %v2546 = vmul.f32 %v2537, %v2545
        %v2547 = vadd.f32 %v2546, 1.1283791
        %v2548 = vmul.f32 %v2247, %v2547
        %v2549 = vmul.f32 %v2537, 3.8918573e-05
        %v2550 = vadd.f32 %v2549, 0.001143296
        %v2551 = vmul.f32 %v2537, %v2550
        %v2552 = vadd.f32 %v2551, 0.014752088
        %v2553 = vmul.f32 %v2537, %v2552
        %v2554 = vadd.f32 %v2553, 0.112945676
        %v2555 = vmul.f32 %v2537, %v2554
        %v2556 = vadd.f32 %v2555, 0.4994258
        %v2557 = vmul.f32 %v2537, %v2556
        %v2558 = vadd.f32 %v2557, 1.0
        %v2559 = vrcp.pop %v2558
        %v2560 = vmul.f32 %v2558, %v2559
        %v2561 = vsub.f32 1.0, %v2560
        %v2562 = vmul.f32 %v2559, %v2561
        %v2563 = vadd.f32 %v2559, %v2562
        %vm2564 = vweird.f32 %v2558
        %vm2565 = vweird.f32 %v2559
        %vm2566 = vmor %vm2564, %vm2565
        %v2567 = vsel %vm2566, %v2559, %v2563
        %v2568 = vand.u32 2147483647, %v2558
        %vm2569 = vcmp.eq.f32.partialorder %v2568, 8.507059e+37
        %v2570 = vand.u32 %v2558, 2147483648
        %v2571 = vor.u32 1.1754944e-38, %v2570
        %v2572 = vsel %vm2569, %v2571, %v2567
        %v2573 = vmul.f32 %v2548, %v2572
        %v2574 = vmin.f32 %v2573, 1.0
        %v2575 = vmax.f32 %v2574, -1.0
        %v2576 = vmul.f32 %v2248, %v2248
        %v2577 = vmin.f32 16.0, %v2576
        %v2578 = vmul.f32 %v2577, 2.1237322e-06
        %v2579 = vadd.f32 %v2578, 0.00028619796
        %v2580 = vmul.f32 %v2577, %v2579
        %v2581 = vadd.f32 %v2580, 0.0036580483
        %v2582 = vmul.f32 %v2577, %v2581
        %v2583 = vadd.f32 %v2582, 0.05243302
        %v2584 = vmul.f32 %v2577, %v2583
        %v2585 = vadd.f32 %v2584, 0.18741608
        %v2586 = vmul.f32 %v2577, %v2585
        %v2587 = vadd.f32 %v2586, 1.1283791
        %v2588 = vmul.f32 %v2248, %v2587
        %v2589 = vmul.f32 %v2577, 3.8918573e-05
        %v2590 = vadd.f32 %v2589, 0.001143296
        %v2591 = vmul.f32 %v2577, %v2590
        %v2592 = vadd.f32 %v2591, 0.014752088
        %v2593 = vmul.f32 %v2577, %v2592
        %v2594 = vadd.f32 %v2593, 0.112945676
        %v2595 = vmul.f32 %v2577, %v2594
        %v2596 = vadd.f32 %v2595, 0.4994258
        %v2597 = vmul.f32 %v2577, %v2596
        %v2598 = vadd.f32 %v2597, 1.0
        %v2599 = vrcp.pop %v2598
        %v2600 = vmul.f32 %v2598, %v2599
        %v2601 = vsub.f32 1.0, %v2600
        %v2602 = vmul.f32 %v2599, %v2601
        %v2603 = vadd.f32 %v2599, %v2602
        %vm2604 = vweird.f32 %v2598
        %vm2605 = vweird.f32 %v2599
        %vm2606 = vmor %vm2604, %vm2605
        %v2607 = vsel %vm2606, %v2599, %v2603
        %v2608 = vand.u32 2147483647, %v2598
        %vm2609 = vcmp.eq.f32.partialorder %v2608, 8.507059e+37
        %v2610 = vand.u32 %v2598, 2147483648
        %v2611 = vor.u32 1.1754944e-38, %v2610
        %v2612 = vsel %vm2609, %v2611, %v2607
        %v2613 = vmul.f32 %v2588, %v2612
        %v2614 = vmin.f32 %v2613, 1.0
        %v2615 = vmax.f32 %v2614, -1.0
        %v2616 = vmul.f32 %v2249, %v2249
        %v2617 = vmin.f32 16.0, %v2616
        %v2618 = vmul.f32 %v2617, 2.1237322e-06
        %v2619 = vadd.f32 %v2618, 0.00028619796
        %v2620 = vmul.f32 %v2617, %v2619
        %v2621 = vadd.f32 %v2620, 0.0036580483
        %v2622 = vmul.f32 %v2617, %v2621
        %v2623 = vadd.f32 %v2622, 0.05243302
        %v2624 = vmul.f32 %v2617, %v2623
        %v2625 = vadd.f32 %v2624, 0.18741608
        %v2626 = vmul.f32 %v2617, %v2625
        %v2627 = vadd.f32 %v2626, 1.1283791
        %v2628 = vmul.f32 %v2249, %v2627
        %v2629 = vmul.f32 %v2617, 3.8918573e-05
        %v2630 = vadd.f32 %v2629, 0.001143296
        %v2631 = vmul.f32 %v2617, %v2630
        %v2632 = vadd.f32 %v2631, 0.014752088
        %v2633 = vmul.f32 %v2617, %v2632
        %v2634 = vadd.f32 %v2633, 0.112945676
        %v2635 = vmul.f32 %v2617, %v2634
        %v2636 = vadd.f32 %v2635, 0.4994258
        %v2637 = vmul.f32 %v2617, %v2636
        %v2638 = vadd.f32 %v2637, 1.0
        %v2639 = vrcp.pop %v2638
        %v2640 = vmul.f32 %v2638, %v2639
        %v2641 = vsub.f32 1.0, %v2640
        %v2642 = vmul.f32 %v2639, %v2641
        %v2643 = vadd.f32 %v2639, %v2642
        %vm2644 = vweird.f32 %v2638
        %vm2645 = vweird.f32 %v2639
        %vm2646 = vmor %vm2644, %vm2645
        %v2647 = vsel %vm2646, %v2639, %v2643
        %v2648 = vand.u32 2147483647, %v2638
        %vm2649 = vcmp.eq.f32.partialorder %v2648, 8.507059e+37
        %v2650 = vand.u32 %v2638, 2147483648
        %v2651 = vor.u32 1.1754944e-38, %v2650
        %v2652 = vsel %vm2649, %v2651, %v2647
        %v2653 = vmul.f32 %v2628, %v2652
        %v2654 = vmin.f32 %v2653, 1.0
        %v2655 = vmax.f32 %v2654, -1.0
        %v2656 = vmul.f32 %v2250, %v2250
        %v2657 = vmin.f32 16.0, %v2656
        %v2658 = vmul.f32 %v2657, 2.1237322e-06
        %v2659 = vadd.f32 %v2658, 0.00028619796
        %v2660 = vmul.f32 %v2657, %v2659
        %v2661 = vadd.f32 %v2660, 0.0036580483
        %v2662 = vmul.f32 %v2657, %v2661
        %v2663 = vadd.f32 %v2662, 0.05243302
        %v2664 = vmul.f32 %v2657, %v2663
        %v2665 = vadd.f32 %v2664, 0.18741608
        %v2666 = vmul.f32 %v2657, %v2665
        %v2667 = vadd.f32 %v2666, 1.1283791
        %v2668 = vmul.f32 %v2250, %v2667
        %v2669 = vmul.f32 %v2657, 3.8918573e-05
        %v2670 = vadd.f32 %v2669, 0.001143296
        %v2671 = vmul.f32 %v2657, %v2670
        %v2672 = vadd.f32 %v2671, 0.014752088
        %v2673 = vmul.f32 %v2657, %v2672
        %v2674 = vadd.f32 %v2673, 0.112945676
        %v2675 = vmul.f32 %v2657, %v2674
        %v2676 = vadd.f32 %v2675, 0.4994258
        %v2677 = vmul.f32 %v2657, %v2676
        %v2678 = vadd.f32 %v2677, 1.0
        %v2679 = vrcp.pop %v2678
        %v2680 = vmul.f32 %v2678, %v2679
        %v2681 = vsub.f32 1.0, %v2680
        %v2682 = vmul.f32 %v2679, %v2681
        %v2683 = vadd.f32 %v2679, %v2682
        %vm2684 = vweird.f32 %v2678
        %vm2685 = vweird.f32 %v2679
        %vm2686 = vmor %vm2684, %vm2685
        %v2687 = vsel %vm2686, %v2679, %v2683
        %v2688 = vand.u32 2147483647, %v2678
        %vm2689 = vcmp.eq.f32.partialorder %v2688, 8.507059e+37
        %v2690 = vand.u32 %v2678, 2147483648
        %v2691 = vor.u32 1.1754944e-38, %v2690
        %v2692 = vsel %vm2689, %v2691, %v2687
        %v2693 = vmul.f32 %v2668, %v2692
        %v2694 = vmin.f32 %v2693, 1.0
        %v2695 = vmax.f32 %v2694, -1.0
        %v2696 = vmul.f32 %v2251, %v2251
        %v2697 = vmin.f32 16.0, %v2696
        %v2698 = vmul.f32 %v2697, 2.1237322e-06
        %v2699 = vadd.f32 %v2698, 0.00028619796
        %v2700 = vmul.f32 %v2697, %v2699
        %v2701 = vadd.f32 %v2700, 0.0036580483
        %v2702 = vmul.f32 %v2697, %v2701
        %v2703 = vadd.f32 %v2702, 0.05243302
        %v2704 = vmul.f32 %v2697, %v2703
        %v2705 = vadd.f32 %v2704, 0.18741608
        %v2706 = vmul.f32 %v2697, %v2705
        %v2707 = vadd.f32 %v2706, 1.1283791
        %v2708 = vmul.f32 %v2251, %v2707
        %v2709 = vmul.f32 %v2697, 3.8918573e-05
        %v2710 = vadd.f32 %v2709, 0.001143296
        %v2711 = vmul.f32 %v2697, %v2710
        %v2712 = vadd.f32 %v2711, 0.014752088
        %v2713 = vmul.f32 %v2697, %v2712
        %v2714 = vadd.f32 %v2713, 0.112945676
        %v2715 = vmul.f32 %v2697, %v2714
        %v2716 = vadd.f32 %v2715, 0.4994258
        %v2717 = vmul.f32 %v2697, %v2716
        %v2718 = vadd.f32 %v2717, 1.0
        %v2719 = vrcp.pop %v2718
        %v2720 = vmul.f32 %v2718, %v2719
        %v2721 = vsub.f32 1.0, %v2720
        %v2722 = vmul.f32 %v2719, %v2721
        %v2723 = vadd.f32 %v2719, %v2722
        %vm2724 = vweird.f32 %v2718
        %vm2725 = vweird.f32 %v2719
        %vm2726 = vmor %vm2724, %vm2725
        %v2727 = vsel %vm2726, %v2719, %v2723
        %v2728 = vand.u32 2147483647, %v2718
        %vm2729 = vcmp.eq.f32.partialorder %v2728, 8.507059e+37
        %v2730 = vand.u32 %v2718, 2147483648
        %v2731 = vor.u32 1.1754944e-38, %v2730
        %v2732 = vsel %vm2729, %v2731, %v2727
        %v2733 = vmul.f32 %v2708, %v2732
        %v2734 = vmin.f32 %v2733, 1.0
        %v2735 = vmax.f32 %v2734, -1.0
        %v2736 = vmul.f32 %v2252, %v2252
        %v2737 = vmin.f32 16.0, %v2736
        %v2738 = vmul.f32 %v2737, 2.1237322e-06
        %v2739 = vadd.f32 %v2738, 0.00028619796
        %v2740 = vmul.f32 %v2737, %v2739
        %v2741 = vadd.f32 %v2740, 0.0036580483
        %v2742 = vmul.f32 %v2737, %v2741
        %v2743 = vadd.f32 %v2742, 0.05243302
        %v2744 = vmul.f32 %v2737, %v2743
        %v2745 = vadd.f32 %v2744, 0.18741608
        %v2746 = vmul.f32 %v2737, %v2745
        %v2747 = vadd.f32 %v2746, 1.1283791
        %v2748 = vmul.f32 %v2252, %v2747
        %v2749 = vmul.f32 %v2737, 3.8918573e-05
        %v2750 = vadd.f32 %v2749, 0.001143296
        %v2751 = vmul.f32 %v2737, %v2750
        %v2752 = vadd.f32 %v2751, 0.014752088
        %v2753 = vmul.f32 %v2737, %v2752
        %v2754 = vadd.f32 %v2753, 0.112945676
        %v2755 = vmul.f32 %v2737, %v2754
        %v2756 = vadd.f32 %v2755, 0.4994258
        %v2757 = vmul.f32 %v2737, %v2756
        %v2758 = vadd.f32 %v2757, 1.0
        %v2759 = vrcp.pop %v2758
        %v2760 = vmul.f32 %v2758, %v2759
        %v2761 = vsub.f32 1.0, %v2760
        %v2762 = vmul.f32 %v2759, %v2761
        %v2763 = vadd.f32 %v2759, %v2762
        %vm2764 = vweird.f32 %v2758
        %vm2765 = vweird.f32 %v2759
        %vm2766 = vmor %vm2764, %vm2765
        %v2767 = vsel %vm2766, %v2759, %v2763
        %v2768 = vand.u32 2147483647, %v2758
        %vm2769 = vcmp.eq.f32.partialorder %v2768, 8.507059e+37
        %v2770 = vand.u32 %v2758, 2147483648
        %v2771 = vor.u32 1.1754944e-38, %v2770
        %v2772 = vsel %vm2769, %v2771, %v2767
        %v2773 = vmul.f32 %v2748, %v2772
        %v2774 = vmin.f32 %v2773, 1.0
        %v2775 = vmax.f32 %v2774, -1.0
        %v2776 = vmul.f32 %v2253, %v2253
        %v2777 = vmin.f32 16.0, %v2776
        %v2778 = vmul.f32 %v2777, 2.1237322e-06
        %v2779 = vadd.f32 %v2778, 0.00028619796
        %v2780 = vmul.f32 %v2777, %v2779
        %v2781 = vadd.f32 %v2780, 0.0036580483
        %v2782 = vmul.f32 %v2777, %v2781
        %v2783 = vadd.f32 %v2782, 0.05243302
        %v2784 = vmul.f32 %v2777, %v2783
        %v2785 = vadd.f32 %v2784, 0.18741608
        %v2786 = vmul.f32 %v2777, %v2785
        %v2787 = vadd.f32 %v2786, 1.1283791
        %v2788 = vmul.f32 %v2253, %v2787
        %v2789 = vmul.f32 %v2777, 3.8918573e-05
        %v2790 = vadd.f32 %v2789, 0.001143296
        %v2791 = vmul.f32 %v2777, %v2790
        %v2792 = vadd.f32 %v2791, 0.014752088
        %v2793 = vmul.f32 %v2777, %v2792
        %v2794 = vadd.f32 %v2793, 0.112945676
        %v2795 = vmul.f32 %v2777, %v2794
        %v2796 = vadd.f32 %v2795, 0.4994258
        %v2797 = vmul.f32 %v2777, %v2796
        %v2798 = vadd.f32 %v2797, 1.0
        %v2799 = vrcp.pop %v2798
        %v2800 = vmul.f32 %v2798, %v2799
        %v2801 = vsub.f32 1.0, %v2800
        %v2802 = vmul.f32 %v2799, %v2801
        %v2803 = vadd.f32 %v2799, %v2802
        %vm2804 = vweird.f32 %v2798
        %vm2805 = vweird.f32 %v2799
        %vm2806 = vmor %vm2804, %vm2805
        %v2807 = vsel %vm2806, %v2799, %v2803
        %v2808 = vand.u32 2147483647, %v2798
        %vm2809 = vcmp.eq.f32.partialorder %v2808, 8.507059e+37
        %v2810 = vand.u32 %v2798, 2147483648
        %v2811 = vor.u32 1.1754944e-38, %v2810
        %v2812 = vsel %vm2809, %v2811, %v2807
        %v2813 = vmul.f32 %v2788, %v2812
        %v2814 = vmin.f32 %v2813, 1.0
        %v2815 = vmax.f32 %v2814, -1.0
        %v2816 = vmul.f32 %v2254, %v2254
        %v2817 = vmin.f32 16.0, %v2816
        %v2818 = vmul.f32 %v2817, 2.1237322e-06
        %v2819 = vadd.f32 %v2818, 0.00028619796
        %v2820 = vmul.f32 %v2817, %v2819
        %v2821 = vadd.f32 %v2820, 0.0036580483
        %v2822 = vmul.f32 %v2817, %v2821
        %v2823 = vadd.f32 %v2822, 0.05243302
        %v2824 = vmul.f32 %v2817, %v2823
        %v2825 = vadd.f32 %v2824, 0.18741608
        %v2826 = vmul.f32 %v2817, %v2825
        %v2827 = vadd.f32 %v2826, 1.1283791
        %v2828 = vmul.f32 %v2254, %v2827
        %v2829 = vmul.f32 %v2817, 3.8918573e-05
        %v2830 = vadd.f32 %v2829, 0.001143296
        %v2831 = vmul.f32 %v2817, %v2830
        %v2832 = vadd.f32 %v2831, 0.014752088
        %v2833 = vmul.f32 %v2817, %v2832
        %v2834 = vadd.f32 %v2833, 0.112945676
        %v2835 = vmul.f32 %v2817, %v2834
        %v2836 = vadd.f32 %v2835, 0.4994258
        %v2837 = vmul.f32 %v2817, %v2836
        %v2838 = vadd.f32 %v2837, 1.0
        %v2839 = vrcp.pop %v2838
        %v2840 = vmul.f32 %v2838, %v2839
        %v2841 = vsub.f32 1.0, %v2840
        %v2842 = vmul.f32 %v2839, %v2841
        %v2843 = vadd.f32 %v2839, %v2842
        %vm2844 = vweird.f32 %v2838
        %vm2845 = vweird.f32 %v2839
        %vm2846 = vmor %vm2844, %vm2845
        %v2847 = vsel %vm2846, %v2839, %v2843
        %v2848 = vand.u32 2147483647, %v2838
        %vm2849 = vcmp.eq.f32.partialorder %v2848, 8.507059e+37
        %v2850 = vand.u32 %v2838, 2147483648
        %v2851 = vor.u32 1.1754944e-38, %v2850
        %v2852 = vsel %vm2849, %v2851, %v2847
        %v2853 = vmul.f32 %v2828, %v2852
        %v2854 = vmin.f32 %v2853, 1.0
        %v2855 = vmax.f32 %v2854, -1.0
        %v2856 = vmul.f32 %v2255, %v2255
        %v2857 = vmin.f32 16.0, %v2856
        %v2858 = vmul.f32 %v2857, 2.1237322e-06
        %v2859 = vadd.f32 %v2858, 0.00028619796
        %v2860 = vmul.f32 %v2857, %v2859
        %v2861 = vadd.f32 %v2860, 0.0036580483
        %v2862 = vmul.f32 %v2857, %v2861
        %v2863 = vadd.f32 %v2862, 0.05243302
        %v2864 = vmul.f32 %v2857, %v2863
        %v2865 = vadd.f32 %v2864, 0.18741608
        %v2866 = vmul.f32 %v2857, %v2865
        %v2867 = vadd.f32 %v2866, 1.1283791
        %v2868 = vmul.f32 %v2255, %v2867
        %v2869 = vmul.f32 %v2857, 3.8918573e-05
        %v2870 = vadd.f32 %v2869, 0.001143296
        %v2871 = vmul.f32 %v2857, %v2870
        %v2872 = vadd.f32 %v2871, 0.014752088
        %v2873 = vmul.f32 %v2857, %v2872
        %v2874 = vadd.f32 %v2873, 0.112945676
        %v2875 = vmul.f32 %v2857, %v2874
        %v2876 = vadd.f32 %v2875, 0.4994258
        %v2877 = vmul.f32 %v2857, %v2876
        %v2878 = vadd.f32 %v2877, 1.0
        %v2879 = vrcp.pop %v2878
        %v2880 = vmul.f32 %v2878, %v2879
        %v2881 = vsub.f32 1.0, %v2880
        %v2882 = vmul.f32 %v2879, %v2881
        %v2883 = vadd.f32 %v2879, %v2882
        %vm2884 = vweird.f32 %v2878
        %vm2885 = vweird.f32 %v2879
        %vm2886 = vmor %vm2884, %vm2885
        %v2887 = vsel %vm2886, %v2879, %v2883
        %v2888 = vand.u32 2147483647, %v2878
        %vm2889 = vcmp.eq.f32.partialorder %v2888, 8.507059e+37
        %v2890 = vand.u32 %v2878, 2147483648
        %v2891 = vor.u32 1.1754944e-38, %v2890
        %v2892 = vsel %vm2889, %v2891, %v2887
        %v2893 = vmul.f32 %v2868, %v2892
        %v2894 = vmin.f32 %v2893, 1.0
        %v2895 = vmax.f32 %v2894, -1.0
        %v2896 = vadd.f32 %v2295, 1.0
        %v2897 = vadd.f32 %v2335, 1.0
        %v2898 = vadd.f32 %v2375, 1.0
        %v2899 = vadd.f32 %v2415, 1.0
        %v2900 = vadd.f32 %v2455, 1.0
        %v2901 = vadd.f32 %v2495, 1.0
        %v2902 = vadd.f32 %v2535, 1.0
        %v2903 = vadd.f32 %v2575, 1.0
        %v2904 = vadd.f32 %v2615, 1.0
        %v2905 = vadd.f32 %v2655, 1.0
        %v2906 = vadd.f32 %v2695, 1.0
        %v2907 = vadd.f32 %v2735, 1.0
        %v2908 = vadd.f32 %v2775, 1.0
        %v2909 = vadd.f32 %v2815, 1.0
        %v2910 = vadd.f32 %v2855, 1.0
        %v2911 = vadd.f32 %v2895, 1.0
        %v2912 = vmul.f32 %v2224, %v2896
        %v2913 = vmul.f32 %v2225, %v2897
        %v2914 = vmul.f32 %v2226, %v2898
        %v2915 = vmul.f32 %v2227, %v2899
        %v2916 = vmul.f32 %v2228, %v2900
        %v2917 = vmul.f32 %v2229, %v2901
        %v2918 = vmul.f32 %v2230, %v2902
        %v2919 = vmul.f32 %v2231, %v2903
        %v2920 = vmul.f32 %v2232, %v2904
        %v2921 = vmul.f32 %v2233, %v2905
        %v2922 = vmul.f32 %v2234, %v2906
        %v2923 = vmul.f32 %v2235, %v2907
        %v2924 = vmul.f32 %v2236, %v2908
        %v2925 = vmul.f32 %v2237, %v2909
        %v2926 = vmul.f32 %v2238, %v2910
        %v2927 = vmul.f32 %v2239, %v2911
        %v2928 = vpack.c.bf16 %v2914, %v2912
        %v2929 = vpack.c.bf16 %v2915, %v2913
        %v2930 = vpack.c.bf16 %v2918, %v2916
        %v2931 = vpack.c.bf16 %v2919, %v2917
        %v2932 = vpack.c.bf16 %v2922, %v2920
        %v2933 = vpack.c.bf16 %v2923, %v2921
        %v2934 = vpack.c.bf16 %v2926, %v2924
        %v2935 = vpack.c.bf16 %v2927, %v2925
        %v2936 = vld [vmem:[#allocation9] sm:$0xf]
        %v2937 = vld [vmem:[#allocation9 + $0x4] sm:$0xf]
        %v2938 = vld [vmem:[#allocation9 + $0x8] sm:$0xf]
        %v2939 = vld [vmem:[#allocation9 + $0xc] sm:$0xf]
        %v2940 = vld [vmem:[#allocation9 + $0x10] sm:$0xf]
        %v2941 = vld [vmem:[#allocation9 + $0x14] sm:$0xf]
        %v2942 = vld [vmem:[#allocation9 + $0x18] sm:$0xf]
        %v2943 = vld [vmem:[#allocation9 + $0x1c] sm:$0xf]
        %v2944 = vld [vmem:[#allocation9 + $0x20] sm:$0xf]
        %v2945 = vld [vmem:[#allocation9 + $0x24] sm:$0xf]
        %v2946 = vld [vmem:[#allocation9 + $0x28] sm:$0xf]
        %v2947 = vld [vmem:[#allocation9 + $0x2c] sm:$0xf]
        %v2948 = vld [vmem:[#allocation9 + $0x30] sm:$0xf]
        %v2949 = vld [vmem:[#allocation9 + $0x34] sm:$0xf]
        %v2950 = vld [vmem:[#allocation9 + $0x38] sm:$0xf]
        %v2951 = vld [vmem:[#allocation9 + $0x3c] sm:$0xf]
        %v2952 = vld [vmem:[#allocation9 + $0x40] sm:$0xf]
        %v2953 = vld [vmem:[#allocation9 + $0x44] sm:$0xf]
        %v2954 = vld [vmem:[#allocation9 + $0x48] sm:$0xf]
        %v2955 = vld [vmem:[#allocation9 + $0x4c] sm:$0xf]
        %v2956 = vld [vmem:[#allocation9 + $0x50] sm:$0xf]
        %v2957 = vld [vmem:[#allocation9 + $0x54] sm:$0xf]
        %v2958 = vld [vmem:[#allocation9 + $0x58] sm:$0xf]
        %v2959 = vld [vmem:[#allocation9 + $0x5c] sm:$0xf]
        %v2960 = vld [vmem:[#allocation9 + $0x60] sm:$0xf]
        %v2961 = vld [vmem:[#allocation9 + $0x64] sm:$0xf]
        %v2962 = vld [vmem:[#allocation9 + $0x68] sm:$0xf]
        %v2963 = vld [vmem:[#allocation9 + $0x6c] sm:$0xf]
        %v2964 = vld [vmem:[#allocation9 + $0x70] sm:$0xf]
        %v2965 = vld [vmem:[#allocation9 + $0x74] sm:$0xf]
        %v2966 = vld [vmem:[#allocation9 + $0x78] sm:$0xf]
        %v2967 = vld [vmem:[#allocation9 + $0x7c] sm:$0xf]
        %v2968 = vld [vmem:[%s6] sm:$0x1]
        %v2970 = vperm.slane %v2968, 0
        %v3004 = vunpack.c.l.b16 %v2936
        %v3005 = vunpack.c.l.b16 %v2937
        %v3006 = vunpack.c.l.b16 %v2938
        %v3007 = vunpack.c.l.b16 %v2939
        %v3008 = vunpack.c.l.b16 %v2940
        %v3009 = vunpack.c.l.b16 %v2941
        %v3010 = vunpack.c.l.b16 %v2942
        %v3011 = vunpack.c.l.b16 %v2943
        %v3012 = vunpack.c.l.b16 %v2944
        %v3013 = vunpack.c.l.b16 %v2945
        %v3014 = vunpack.c.l.b16 %v2946
        %v3015 = vunpack.c.l.b16 %v2947
        %v3016 = vunpack.c.l.b16 %v2948
        %v3017 = vunpack.c.l.b16 %v2949
        %v3018 = vunpack.c.l.b16 %v2950
        %v3019 = vunpack.c.l.b16 %v2951
        %v3020 = vunpack.c.l.b16 %v2952
        %v3021 = vunpack.c.l.b16 %v2953
        %v3022 = vunpack.c.l.b16 %v2954
        %v3023 = vunpack.c.l.b16 %v2955
        %v3024 = vunpack.c.l.b16 %v2956
        %v3025 = vunpack.c.l.b16 %v2957
        %v3026 = vunpack.c.l.b16 %v2958
        %v3027 = vunpack.c.l.b16 %v2959
        %v3028 = vunpack.c.l.b16 %v2960
        %v3029 = vunpack.c.l.b16 %v2961
        %v3030 = vunpack.c.l.b16 %v2962
        %v3031 = vunpack.c.l.b16 %v2963
        %v3032 = vunpack.c.l.b16 %v2964
        %v3033 = vunpack.c.l.b16 %v2965
        %v3034 = vunpack.c.l.b16 %v2966
        %v3035 = vunpack.c.l.b16 %v2967
        %v3036 = vpack.c.b16 %v3005, %v3004
        %v3037 = vpack.c.b16 %v3007, %v3006
        %v3038 = vpack.c.b16 %v3009, %v3008
        %v3039 = vpack.c.b16 %v3011, %v3010
        %v3040 = vpack.c.b16 %v3013, %v3012
        %v3041 = vpack.c.b16 %v3015, %v3014
        %v3042 = vpack.c.b16 %v3017, %v3016
        %v3043 = vpack.c.b16 %v3019, %v3018
        %v3044 = vpack.c.b16 %v3021, %v3020
        %v3045 = vpack.c.b16 %v3023, %v3022
        %v3046 = vpack.c.b16 %v3025, %v3024
        %v3047 = vpack.c.b16 %v3027, %v3026
        %v3048 = vpack.c.b16 %v3029, %v3028
        %v3049 = vpack.c.b16 %v3031, %v3030
        %v3050 = vpack.c.b16 %v3033, %v3032
        %v3051 = vpack.c.b16 %v3035, %v3034
        %3068 = vmatpush.bf16.msra.mxu0 %v3043
        %3069 = vmatpush.bf16.msra.mxu0 %v3042
        %3070 = vmatpush.bf16.msra.mxu0 %v3041
        %3071 = vmatpush.bf16.msra.mxu0 %v3040
        %3072 = vmatpush.bf16.msra.mxu0 %v3039
        %3073 = vmatpush.bf16.msra.mxu0 %v3038
        %3074 = vmatpush.bf16.msra.mxu0 %v3037
        %3075 = vmatpush.bf16.msra.mxu0 %v3036
        %3076 = vmatmul.bf16.gmra.mxu0 %v2928
        %v3077 = vpop.f32.mrf.mxu0
        %v3078 = vadd.f32 %v2970, %v3077
        %v3079 = vpop.f32.mrf.mxu0
        %v3080 = vadd.f32 %v2970, %v3079
        %3081 = vmatmul.bf16.gmra.mxu0 %v2930
        %v3082 = vpop.f32.mrf.mxu0
        %v3083 = vadd.f32 %v2970, %v3082
        %v3084 = vpop.f32.mrf.mxu0
        %v3085 = vadd.f32 %v2970, %v3084
        %3086 = vmatmul.bf16.gmra.mxu0 %v2932
        %v3087 = vpop.f32.mrf.mxu0
        %v3088 = vadd.f32 %v2970, %v3087
        %v3089 = vpop.f32.mrf.mxu0
        %v3090 = vadd.f32 %v2970, %v3089
        %3091 = vmatmul.bf16.gmra.mxu0 %v2934
        %v3092 = vpop.f32.mrf.mxu0
        %v3093 = vadd.f32 %v2970, %v3092
        %v3094 = vpop.f32.mrf.mxu0
        %v3095 = vadd.f32 %v2970, %v3094
        %3096 = vdwg.mxu0
        %3097 = vmatpush.bf16.msra.mxu0 %v3051
        %3098 = vmatpush.bf16.msra.mxu0 %v3050
        %3099 = vmatpush.bf16.msra.mxu0 %v3049
        %3100 = vmatpush.bf16.msra.mxu0 %v3048
        %3101 = vmatpush.bf16.msra.mxu0 %v3047
        %3102 = vmatpush.bf16.msra.mxu0 %v3046
        %3103 = vmatpush.bf16.msra.mxu0 %v3045
        %3104 = vmatpush.bf16.msra.mxu0 %v3044
        %3105 = vmatmul.bf16.gmra.mxu0 %v2929
        %v3106 = vpop.f32.mrf.mxu0
        %v3107 = vadd.f32 %v3078, %v3106
        %v3108 = vpop.f32.mrf.mxu0
        %v3109 = vadd.f32 %v3080, %v3108
        %3110 = vmatmul.bf16.gmra.mxu0 %v2931
        %v3111 = vpop.f32.mrf.mxu0
        %v3112 = vadd.f32 %v3083, %v3111
        %v3113 = vpop.f32.mrf.mxu0
        %v3114 = vadd.f32 %v3085, %v3113
        %3115 = vmatmul.bf16.gmra.mxu0 %v2933
        %v3116 = vpop.f32.mrf.mxu0
        %v3117 = vadd.f32 %v3088, %v3116
        %v3118 = vpop.f32.mrf.mxu0
        %v3119 = vadd.f32 %v3090, %v3118
        %3120 = vmatmul.bf16.gmra.mxu0 %v2935
        %v3121 = vpop.f32.mrf.mxu0
        %v3122 = vadd.f32 %v3093, %v3121
        %v3123 = vpop.f32.mrf.mxu0
        %v3124 = vadd.f32 %v3095, %v3123
        %3125 = vdwg.mxu0
        %v3126 = vstv %s379
        %v3127 = vmul.f32 %v3126, %v3107
        %v3128 = vmul.f32 %v3126, %v3109
        %v3129 = vmul.f32 %v3126, %v3112
        %v3130 = vmul.f32 %v3126, %v3114
        %v3131 = vmul.f32 %v3126, %v3117
        %v3132 = vmul.f32 %v3126, %v3119
        %v3133 = vmul.f32 %v3126, %v3122
        %v3134 = vmul.f32 %v3126, %v3124
        %v3135 = vadd.f32 %v571, %v3127
        %v3136 = vadd.f32 %v572, %v3128
        %v3137 = vadd.f32 %v573, %v3129
        %v3138 = vadd.f32 %v574, %v3130
        %v3139 = vadd.f32 %v575, %v3131
        %v3140 = vadd.f32 %v576, %v3132
        %v3141 = vadd.f32 %v577, %v3133
        %v3142 = vadd.f32 %v578, %v3134
        %3143 = vst [vmem:[%s376] sm:$0xff] %v3135
        %3144 = vst [vmem:[%s376 + $0x8] sm:$0xff] %v3136
        %3145 = vst [vmem:[%s376 + $0x10] sm:$0xff] %v3137
        %3146 = vst [vmem:[%s376 + $0x18] sm:$0xff] %v3138
        %3147 = vst [vmem:[%s376 + $0x20] sm:$0xff] %v3139
        %3148 = vst [vmem:[%s376 + $0x28] sm:$0xff] %v3140
        %3149 = vst [vmem:[%s376 + $0x30] sm:$0xff] %v3141
        %3150 = vst [vmem:[%s376 + $0x38] sm:$0xff] %v3142
        %s3151 = sand.u32 %s209, 1
        %s3152 = scalar_lea.sflag [#allocation5], %s3151
        %s3153 = sand.u32 %s209, 1
        %s3154 = smul.addr %s3153, 64
        %s3155 = scalar_lea.vmem [#allocation11], %s3154
        // Predicated region
        $region69: #{tpu_custom_call.1} parent=51 // pred_check
          %p3156 = pneg %p219
        $region70: #{tpu_custom_call.1} parent=51 // pred_check_branch
          %3158 = sbr.rel (%p3156) target = $region72
        $region71: #{tpu_custom_call.1} parent=51 // pred_region
          %s3159 = smul.u32 8, %s28
          %3161 = vsyncadd %s3152, 0
          %s3162 = smul.addr %s3159, 8
          %s3163 = scalar_lea.hbm %s8, %s3162
          %s3164 = sshll.u32 %s3155, 4
          %s3165 = int_to_ptr.vmem [resolvable:$true] %s3164
          %s3166 = sshll.u32 %s3163, 4
          %s3167 = int_to_ptr.hbm [resolvable:$true] %s3166
          %3172 = dma.vmem_to_hbm [thread:$0]  %s3165, 1024, %s3167, %s3152, 128, 128, 8
        $region72: #{tpu_custom_call.1} parent=51 // pred_fallthru
          _
      $region52: #{tpu_custom_call.1} parent=5 // pred_fallthru
        _
      %p3173 = scmp.le.s32.totalorder 2, %s23
      // Predicated region
      $region73: #{tpu_custom_call.1} parent=5 // pred_check
        %p3174 = pneg %p3173
      $region74: #{tpu_custom_call.1} parent=5 // pred_check_branch
        %3176 = sbr.rel (%p3174) target = $region76
      $region75: #{tpu_custom_call.1} parent=5 // pred_region
        %s3177 = ssub.s32 %s23, 2
        // Predicated region
        $region77: #{tpu_custom_call.1} parent=75 // pred_check
          %p3178 = pneg %p225
        $region78: #{tpu_custom_call.1} parent=75 // pred_check_branch
          %3180 = sbr.rel (%p3178) target = $region80
        $region79: #{tpu_custom_call.1} parent=75 // pred_region
          %s3181 = sand.u32 %s210, 1
          %s3182 = scalar_lea.sflag [#allocation5], %s3181
          %s3183 = sand.u32 %s210, 1
          %s3184 = smul.addr %s3183, 64
          %s3185 = scalar_lea.vmem [#allocation11], %s3184
          %3187 = dma.done %s3182, 1024
        $region80: #{tpu_custom_call.1} parent=75 // pred_fallthru
          _
      $region76: #{tpu_custom_call.1} parent=5 // pred_fallthru
        _
    $region6: #{tpu_custom_call.1} parent=1 // loop_footer
      %s27 = sadd.s32 1, %s23
    $region7: #{tpu_custom_call.1} parent=1 // loop_footer_branch
      %22 = sbr.rel target = $region3
    $region8: #{tpu_custom_call.1} parent=1 // loop_exit
      _
    %3188 = vsyncpa [#allocation4], 1
    %s3189 = scalar_lea.sflag [#allocation4], 1
    %3190 = vsyncpa %s3189, 1
    %3191 = vsyncpa [#allocation7], 1
    %3192 = vsyncpa [#allocation10], 1
    %3193 = vsyncpa [#allocation5], 1
    %s3194 = scalar_lea.sflag [#allocation5], 1
    %3195 = vsyncpa %s3194, 1

</llo_original>
